<compile_context>
chip_gen: v6e
topology: v6e:2x2x1
jax: 0.10.0
libtpu: 0.0.40
codegen_flags: <defaults>
</compile_context>

<pallas_src>
import jax
import jax.numpy as jnp
from jax.experimental import pallas as pl
from jax.experimental.pallas import tpu as pltpu

NODE_FEAT = 1422
NODE_FEAT_PAD = 1536     # 1422 -> next multiple of 128 (lane-aligned MXU K, zero-padded)
EDGE_FEAT = 8
EDGE_FEAT_PAD = 128      # pad K=8 so the edge projection is one aligned bf16 MXU matmul
HIDDEN = 128
N_BLOCK = 5
LANE = 128


def _round_up(v, m):
    return ((v + m - 1) // m) * m


def scoring_kernel(x_ref, ea_ref, src_ref, dst_ref,
                   wn_ref, bn_ref, we_ref, be_ref,
                   w1_ref, b1_ref, w2_ref, b2_ref,
                   wo_ref, bo_ref,
                   out_ref):
    f32 = jnp.float32
    bf16 = jnp.bfloat16

    n_pad = x_ref.shape[1]       # padded nodes per graph
    e_pad = ea_ref.shape[1]      # padded edges per graph

    x = x_ref[0]                 # [NPAD, 1536] bf16 (zero-padded features & nodes)
    ea = ea_ref[0]               # [EPAD, 128]  bf16 (zero-padded features & edges)
    src = src_ref[0]             # [EPAD, 1]    int32 (padding edges -> NPAD)
    dst = dst_ref[0]             # [1, EPAD]    int32 (padding edges -> NPAD)

    # ---- input projections: bf16 operands, f32 accumulation ----------------
    h = jnp.dot(x, wn_ref[...], preferred_element_type=f32) + bn_ref[...]        # [NPAD, H]
    e_emb = jnp.dot(ea, we_ref[...], preferred_element_type=f32) + be_ref[...]   # [EPAD, H]

    # ---- in-kernel 0/1 gather / scatter matrices (built from edge indices) --
    # gat[e, m] = 1 iff src[e] == m  ->  gat @ h   == h[src]             [EPAD, NPAD]
    # sct[m, e] = 1 iff dst[e] == m  ->  sct @ msg == scatter_add(dst)   [NPAD, EPAD]
    # Exact in bf16 (values are 0/1); padding edges match nothing -> zero row/col.
    gat = jnp.where(
        jax.lax.broadcasted_iota(jnp.int32, (e_pad, n_pad), 1) == src,
        1.0, 0.0).astype(bf16)
    sct = jnp.where(
        jax.lax.broadcasted_iota(jnp.int32, (n_pad, e_pad), 0) == dst,
        1.0, 0.0).astype(bf16)
    # TODO(synk): for realistic pocket sizes (N~1k, E~8k) replace the dense O(E*N)
    # one-hots with a scalar-prefetched / tiled DMA gather-scatter to bound VMEM.

    # ---- 5 GINEConv blocks: h <- MLP((1+eps)*h + sum_j relu(h_j + e_ji)), eps=0
    for blk in range(N_BLOCK):
        src_h = jnp.dot(gat, h.astype(bf16), preferred_element_type=f32)    # gather   [EPAD, H]
        msg = jnp.maximum(src_h + e_emb, 0.0)                               # messages [EPAD, H]
        agg = jnp.dot(sct, msg.astype(bf16), preferred_element_type=f32)    # scatter  [NPAD, H]
        z = h + agg                                                         # (1+eps)*h + agg
        z = jnp.dot(z.astype(bf16), w1_ref[blk],
                    preferred_element_type=f32) + b1_ref[blk]
        z = jnp.maximum(z, 0.0)
        z = jnp.dot(z.astype(bf16), w2_ref[blk],
                    preferred_element_type=f32) + b2_ref[blk]
        h = jnp.maximum(z, 0.0)   # TODO(synk): inter-block activation assumed ReLU

    # ---- output layer + exact sigmoid, lane-dense [1, NPAD] row -------------
    logits = jax.lax.dot_general(
        wo_ref[...].astype(bf16), h.astype(bf16), (((1,), (1,)), ((), ())),
        preferred_element_type=f32) + bo_ref[0, 0]                          # [1, NPAD]
    p = pl.reciprocal(1.0 + jnp.exp(-logits), approx=False)                 # exact 1/(1+e^-x)
    out_ref[0] = p


def init_params(key):
    ks = jax.random.split(key, 5)
    s = 0.05
    wn = jnp.zeros((NODE_FEAT_PAD, HIDDEN), jnp.float32)
    wn = wn.at[:NODE_FEAT].set(
        jax.random.normal(ks[0], (NODE_FEAT, HIDDEN), jnp.float32) * s)
    we = jnp.zeros((EDGE_FEAT_PAD, HIDDEN), jnp.float32)
    we = we.at[:EDGE_FEAT].set(
        jax.random.normal(ks[1], (EDGE_FEAT, HIDDEN), jnp.float32) * s)
    return {
        "wn": wn.astype(jnp.bfloat16),                        # [1536, 128] (rows >=1422 zero)
        "bn": jnp.zeros((1, HIDDEN), jnp.float32),
        "we": we.astype(jnp.bfloat16),                        # [128, 128]  (rows >=8 zero)
        "be": jnp.zeros((1, HIDDEN), jnp.float32),
        "w1": (jax.random.normal(ks[2], (N_BLOCK, HIDDEN, HIDDEN), jnp.float32) * s
               ).astype(jnp.bfloat16),
        "b1": jnp.zeros((N_BLOCK, 1, HIDDEN), jnp.float32),
        "w2": (jax.random.normal(ks[3], (N_BLOCK, HIDDEN, HIDDEN), jnp.float32) * s
               ).astype(jnp.bfloat16),
        "b2": jnp.zeros((N_BLOCK, 1, HIDDEN), jnp.float32),
        "wo": jax.random.normal(ks[4], (1, HIDDEN), jnp.float32) * s,
        "bo": jnp.zeros((1, 1), jnp.float32),
    }


def scoring_forward(graphs, params):
    """graphs: list of (atom_feature [Ni,1422] f32, edge_index [2,Ei] int, bond_feature [Ei,8] f32).
    Returns concatenated per-node sigmoid scores (PyG batching order)."""
    batch = len(graphs)
    n_pad = _round_up(max(max(g[0].shape[0] for g in graphs), LANE), LANE)
    e_pad = _round_up(max(max(g[2].shape[0] for g in graphs), LANE), LANE)

    xs, eas, srcs, dsts, n_list = [], [], [], [], []
    for atom_feature, edge_index, bond_feature in graphs:
        n, e = atom_feature.shape[0], bond_feature.shape[0]
        n_list.append(n)
        x = jnp.zeros((n_pad, NODE_FEAT_PAD), jnp.bfloat16)
        x = x.at[:n, :NODE_FEAT].set(atom_feature.astype(jnp.bfloat16))
        ea = jnp.zeros((e_pad, EDGE_FEAT_PAD), jnp.bfloat16)
        ea = ea.at[:e, :EDGE_FEAT].set(bond_feature.astype(jnp.bfloat16))
        # padding edges point at node index n_pad: matches no real node -> zero row/col
        src = jnp.full((e_pad, 1), n_pad, jnp.int32).at[:e, 0].set(
            edge_index[0].astype(jnp.int32))
        dst = jnp.full((1, e_pad), n_pad, jnp.int32).at[0, :e].set(
            edge_index[1].astype(jnp.int32))
        xs.append(x); eas.append(ea); srcs.append(src); dsts.append(dst)

    x_b = jnp.stack(xs)       # [B, NPAD, 1536] bf16
    ea_b = jnp.stack(eas)     # [B, EPAD, 128]  bf16
    src_b = jnp.stack(srcs)   # [B, EPAD, 1]    int32
    dst_b = jnp.stack(dsts)   # [B, 1, EPAD]    int32

    in_specs = [
        # per-graph tensors: one block per grid step
        pl.BlockSpec((1, n_pad, NODE_FEAT_PAD), lambda b: (b, 0, 0)),
        pl.BlockSpec((1, e_pad, EDGE_FEAT_PAD), lambda b: (b, 0, 0)),
        pl.BlockSpec((1, e_pad, 1), lambda b: (b, 0, 0)),
        pl.BlockSpec((1, 1, e_pad), lambda b: (b, 0, 0)),
        # weights: constant index_map -> DMA'd once, resident across the whole grid
        pl.BlockSpec((NODE_FEAT_PAD, HIDDEN), lambda b: (0, 0)),
        pl.BlockSpec((1, HIDDEN), lambda b: (0, 0)),
        pl.BlockSpec((EDGE_FEAT_PAD, HIDDEN), lambda b: (0, 0)),
        pl.BlockSpec((1, HIDDEN), lambda b: (0, 0)),
        pl.BlockSpec((N_BLOCK, HIDDEN, HIDDEN), lambda b: (0, 0, 0)),
        pl.BlockSpec((N_BLOCK, 1, HIDDEN), lambda b: (0, 0, 0)),
        pl.BlockSpec((N_BLOCK, HIDDEN, HIDDEN), lambda b: (0, 0, 0)),
        pl.BlockSpec((N_BLOCK, 1, HIDDEN), lambda b: (0, 0, 0)),
        pl.BlockSpec((1, HIDDEN), lambda b: (0, 0)),
        pl.BlockSpec((1, 1), lambda b: (0, 0), memory_space=pltpu.MemorySpace.SMEM),
    ]

    out = pl.pallas_call(
        scoring_kernel,
        grid=(batch,),
        out_shape=jax.ShapeDtypeStruct((batch, 1, n_pad), jnp.float32),
        in_specs=in_specs,
        out_specs=pl.BlockSpec((1, 1, n_pad), lambda b: (b, 0, 0)),
        compiler_params=pltpu.CompilerParams(
            dimension_semantics=("parallel",),   # shard graphs across the 2 TCs on v7x
            vmem_limit_bytes=32 << 20),          # live footprint ~2 MB; fits v7x 64 MiB easily
    )(x_b, ea_b, src_b, dst_b,
      params["wn"], params["bn"], params["we"], params["be"],
      params["w1"], params["b1"], params["w2"], params["b2"],
      params["wo"], params["bo"])

    # PyG-style concatenation of per-node scores over the batch (drop padded nodes)
    return jnp.concatenate([out[b, 0, :n_list[b]] for b in range(batch)], axis=0)


if __name__ == "__main__":
    key = jax.random.PRNGKey(0)
    k_param, k_graphs = jax.random.split(key, 2)

    # Two small synthetic pocket graphs (replaces Batch.from_data_list([torch.load(n) ...]))
    sizes = [(32, 64), (24, 48)]
    graphs = []
    gkey = k_graphs
    for n, e in sizes:
        kf, ksrc, kdst, kb, gkey = jax.random.split(gkey, 5)
        atom_feature = jax.random.normal(kf, (n, NODE_FEAT), jnp.float32)
        edge_index = jnp.stack([
            jax.random.randint(ksrc, (e,), 0, n, dtype=jnp.int32),
            jax.random.randint(kdst, (e,), 0, n, dtype=jnp.int32),
        ], axis=0)
        bond_feature = jax.random.normal(kb, (e, EDGE_FEAT), jnp.float32)
        graphs.append((atom_feature, edge_index, bond_feature))

    params = init_params(k_param)

    out = scoring_forward(graphs, params)
    out = jax.block_until_ready(out)

    assert out.shape == (sum(n for n, _ in sizes),)
    assert bool(jnp.all((out >= 0.0) & (out <= 1.0)))
    print("KERNEL_OK")
</pallas_src>

<mosaic_0001>
module attributes {stable_mosaic.version = 11 : i64} {
  func.func @scoring_kernel(%arg0: i32, %arg1: memref<1x128x1536xbf16, #tpu.memory_space<vmem>>, %arg2: memref<1x128x128xbf16, #tpu.memory_space<vmem>>, %arg3: memref<1x128x1xi32, #tpu.memory_space<vmem>>, %arg4: memref<1x1x128xi32, #tpu.memory_space<vmem>>, %arg5: memref<1536x128xbf16, #tpu.memory_space<vmem>>, %arg6: memref<1x128xf32, #tpu.memory_space<vmem>>, %arg7: memref<128x128xbf16, #tpu.memory_space<vmem>>, %arg8: memref<1x128xf32, #tpu.memory_space<vmem>>, %arg9: memref<5x128x128xbf16, #tpu.memory_space<vmem>>, %arg10: memref<5x1x128xf32, #tpu.memory_space<vmem>>, %arg11: memref<5x128x128xbf16, #tpu.memory_space<vmem>>, %arg12: memref<5x1x128xf32, #tpu.memory_space<vmem>>, %arg13: memref<1x128xf32, #tpu.memory_space<vmem>>, %arg14: memref<1x1xf32, #tpu.memory_space<smem>>, %arg15: memref<1x1x128xf32, #tpu.memory_space<vmem>>) attributes {dimension_semantics = [#tpu.dimension_semantics<parallel>], iteration_bounds = array<i64: 2>, scalar_prefetch = 0 : i64, scratch_operands = 0 : i64, tpu.core_type = #tpu.core_type<tc>, window_params = [{transform_indices = @transform_0, window_bounds = array<i64: 1, 128, 1536>}, {transform_indices = @transform_1, window_bounds = array<i64: 1, 128, 128>}, {transform_indices = @transform_2, window_bounds = array<i64: 1, 128, 1>}, {transform_indices = @transform_3, window_bounds = array<i64: 1, 1, 128>}, {pipeline_mode = #tpu.pipeline_mode<synchronous>, transform_indices = @transform_4, window_bounds = array<i64: 1536, 128>}, {pipeline_mode = #tpu.pipeline_mode<synchronous>, transform_indices = @transform_5, window_bounds = array<i64: 1, 128>}, {pipeline_mode = #tpu.pipeline_mode<synchronous>, transform_indices = @transform_6, window_bounds = array<i64: 128, 128>}, {pipeline_mode = #tpu.pipeline_mode<synchronous>, transform_indices = @transform_7, window_bounds = array<i64: 1, 128>}, {pipeline_mode = #tpu.pipeline_mode<synchronous>, transform_indices = @transform_8, window_bounds = array<i64: 5, 128, 128>}, {pipeline_mode = #tpu.pipeline_mode<synchronous>, transform_indices = @transform_9, window_bounds = array<i64: 5, 1, 128>}, {pipeline_mode = #tpu.pipeline_mode<synchronous>, transform_indices = @transform_10, window_bounds = array<i64: 5, 128, 128>}, {pipeline_mode = #tpu.pipeline_mode<synchronous>, transform_indices = @transform_11, window_bounds = array<i64: 5, 1, 128>}, {pipeline_mode = #tpu.pipeline_mode<synchronous>, transform_indices = @transform_12, window_bounds = array<i64: 1, 128>}, {transform_indices = @transform_13, window_bounds = array<i64: 1, 1>}, {transform_indices = @transform_14, window_bounds = array<i64: 1, 1, 128>}]} {
    %c0 = arith.constant 0 : index
    %c0_0 = arith.constant 0 : index
    %c0_1 = arith.constant 0 : index
    %0 = vector.load %arg1[%c0, %c0_0, %c0_1] : memref<1x128x1536xbf16, #tpu.memory_space<vmem>>, vector<1x128x1536xbf16>
    %1 = vector.shape_cast %0 : vector<1x128x1536xbf16> to vector<128x1536xbf16>
    %c0_2 = arith.constant 0 : index
    %c0_3 = arith.constant 0 : index
    %c0_4 = arith.constant 0 : index
    %2 = vector.load %arg2[%c0_2, %c0_3, %c0_4] : memref<1x128x128xbf16, #tpu.memory_space<vmem>>, vector<1x128x128xbf16>
    %3 = vector.shape_cast %2 : vector<1x128x128xbf16> to vector<128x128xbf16>
    %c0_5 = arith.constant 0 : index
    %c0_6 = arith.constant 0 : index
    %c0_7 = arith.constant 0 : index
    %4 = vector.load %arg3[%c0_5, %c0_6, %c0_7] : memref<1x128x1xi32, #tpu.memory_space<vmem>>, vector<1x128x1xi32>
    %5 = vector.shape_cast %4 : vector<1x128x1xi32> to vector<128x1xi32>
    %c0_8 = arith.constant 0 : index
    %c0_9 = arith.constant 0 : index
    %c0_10 = arith.constant 0 : index
    %6 = vector.load %arg4[%c0_8, %c0_9, %c0_10] : memref<1x1x128xi32, #tpu.memory_space<vmem>>, vector<1x1x128xi32>
    %7 = vector.shape_cast %6 : vector<1x1x128xi32> to vector<1x128xi32>
    %c0_11 = arith.constant 0 : index
    %c0_12 = arith.constant 0 : index
    %8 = vector.load %arg5[%c0_11, %c0_12] : memref<1536x128xbf16, #tpu.memory_space<vmem>>, vector<1536x128xbf16>
    %cst = arith.constant dense<0.000000e+00> : vector<128x128xf32>
    %9 = tpu.matmul %1, %8, %cst {dimension_numbers = #tpu.dot_dimension_numbers<[1], [0], [0], [1], [0, 0, 1, 1], [], []>} : vector<128x1536xbf16>, vector<1536x128xbf16>, vector<128x128xf32> -> vector<128x128xf32>
    %c0_13 = arith.constant 0 : index
    %c0_14 = arith.constant 0 : index
    %10 = vector.load %arg6[%c0_13, %c0_14] : memref<1x128xf32, #tpu.memory_space<vmem>>, vector<1x128xf32>
    %11 = vector.broadcast %10 : vector<1x128xf32> to vector<128x128xf32>
    %12 = arith.addf %9, %11 : vector<128x128xf32>
    %c0_15 = arith.constant 0 : index
    %c0_16 = arith.constant 0 : index
    %13 = vector.load %arg7[%c0_15, %c0_16] : memref<128x128xbf16, #tpu.memory_space<vmem>>, vector<128x128xbf16>
    %cst_17 = arith.constant dense<0.000000e+00> : vector<128x128xf32>
    %14 = tpu.matmul %3, %13, %cst_17 {dimension_numbers = #tpu.dot_dimension_numbers<[1], [0], [0], [1], [0, 0, 1, 1], [], []>} : vector<128x128xbf16>, vector<128x128xbf16>, vector<128x128xf32> -> vector<128x128xf32>
    %c0_18 = arith.constant 0 : index
    %c0_19 = arith.constant 0 : index
    %15 = vector.load %arg8[%c0_18, %c0_19] : memref<1x128xf32, #tpu.memory_space<vmem>>, vector<1x128xf32>
    %16 = vector.broadcast %15 : vector<1x128xf32> to vector<128x128xf32>
    %17 = arith.addf %14, %16 : vector<128x128xf32>
    %18 = tpu.iota {dimensions = array<i32: 1>} : vector<128x128xi32>
    %19 = vector.broadcast %5 : vector<128x1xi32> to vector<128x128xi32>
    %20 = arith.cmpi eq, %18, %19 : vector<128x128xi32>
    %cst_20 = arith.constant 1.000000e+00 : f32
    %cst_21 = arith.constant 0.000000e+00 : f32
    %21 = vector.broadcast %cst_20 : f32 to vector<128x128xf32>
    %22 = vector.broadcast %cst_21 : f32 to vector<128x128xf32>
    %23 = arith.select %20, %21, %22 : vector<128x128xi1>, vector<128x128xf32>
    %24 = arith.truncf %23 : vector<128x128xf32> to vector<128x128xbf16>
    %25 = tpu.iota {dimensions = array<i32: 0>} : vector<128x128xi32>
    %26 = vector.broadcast %7 : vector<1x128xi32> to vector<128x128xi32>
    %27 = arith.cmpi eq, %25, %26 : vector<128x128xi32>
    %cst_22 = arith.constant 1.000000e+00 : f32
    %cst_23 = arith.constant 0.000000e+00 : f32
    %28 = vector.broadcast %cst_22 : f32 to vector<128x128xf32>
    %29 = vector.broadcast %cst_23 : f32 to vector<128x128xf32>
    %30 = arith.select %27, %28, %29 : vector<128x128xi1>, vector<128x128xf32>
    %31 = arith.truncf %30 : vector<128x128xf32> to vector<128x128xbf16>
    %32 = arith.truncf %12 : vector<128x128xf32> to vector<128x128xbf16>
    %cst_24 = arith.constant dense<0.000000e+00> : vector<128x128xf32>
    %33 = tpu.matmul %24, %32, %cst_24 {dimension_numbers = #tpu.dot_dimension_numbers<[1], [0], [0], [1], [0, 0, 1, 1], [], []>} : vector<128x128xbf16>, vector<128x128xbf16>, vector<128x128xf32> -> vector<128x128xf32>
    %34 = arith.addf %33, %17 : vector<128x128xf32>
    %cst_25 = arith.constant 0.000000e+00 : f32
    %35 = vector.broadcast %cst_25 : f32 to vector<128x128xf32>
    %36 = arith.maximumf %34, %35 : vector<128x128xf32>
    %37 = arith.truncf %36 : vector<128x128xf32> to vector<128x128xbf16>
    %cst_26 = arith.constant dense<0.000000e+00> : vector<128x128xf32>
    %38 = tpu.matmul %31, %37, %cst_26 {dimension_numbers = #tpu.dot_dimension_numbers<[1], [0], [0], [1], [0, 0, 1, 1], [], []>} : vector<128x128xbf16>, vector<128x128xbf16>, vector<128x128xf32> -> vector<128x128xf32>
    %39 = arith.addf %12, %38 : vector<128x128xf32>
    %40 = arith.truncf %39 : vector<128x128xf32> to vector<128x128xbf16>
    %c0_27 = arith.constant 0 : index
    %c0_28 = arith.constant 0 : index
    %c0_29 = arith.constant 0 : index
    %41 = vector.load %arg9[%c0_27, %c0_28, %c0_29] : memref<5x128x128xbf16, #tpu.memory_space<vmem>>, vector<1x128x128xbf16>
    %42 = vector.shape_cast %41 : vector<1x128x128xbf16> to vector<128x128xbf16>
    %cst_30 = arith.constant dense<0.000000e+00> : vector<128x128xf32>
    %43 = tpu.matmul %40, %42, %cst_30 {dimension_numbers = #tpu.dot_dimension_numbers<[1], [0], [0], [1], [0, 0, 1, 1], [], []>} : vector<128x128xbf16>, vector<128x128xbf16>, vector<128x128xf32> -> vector<128x128xf32>
    %c0_31 = arith.constant 0 : index
    %c0_32 = arith.constant 0 : index
    %c0_33 = arith.constant 0 : index
    %44 = vector.load %arg10[%c0_31, %c0_32, %c0_33] : memref<5x1x128xf32, #tpu.memory_space<vmem>>, vector<1x1x128xf32>
    %45 = vector.shape_cast %44 : vector<1x1x128xf32> to vector<1x128xf32>
    %46 = vector.broadcast %45 : vector<1x128xf32> to vector<128x128xf32>
    %47 = arith.addf %43, %46 : vector<128x128xf32>
    %cst_34 = arith.constant 0.000000e+00 : f32
    %48 = vector.broadcast %cst_34 : f32 to vector<128x128xf32>
    %49 = arith.maximumf %47, %48 : vector<128x128xf32>
    %50 = arith.truncf %49 : vector<128x128xf32> to vector<128x128xbf16>
    %c0_35 = arith.constant 0 : index
    %c0_36 = arith.constant 0 : index
    %c0_37 = arith.constant 0 : index
    %51 = vector.load %arg11[%c0_35, %c0_36, %c0_37] : memref<5x128x128xbf16, #tpu.memory_space<vmem>>, vector<1x128x128xbf16>
    %52 = vector.shape_cast %51 : vector<1x128x128xbf16> to vector<128x128xbf16>
    %cst_38 = arith.constant dense<0.000000e+00> : vector<128x128xf32>
    %53 = tpu.matmul %50, %52, %cst_38 {dimension_numbers = #tpu.dot_dimension_numbers<[1], [0], [0], [1], [0, 0, 1, 1], [], []>} : vector<128x128xbf16>, vector<128x128xbf16>, vector<128x128xf32> -> vector<128x128xf32>
    %c0_39 = arith.constant 0 : index
    %c0_40 = arith.constant 0 : index
    %c0_41 = arith.constant 0 : index
    %54 = vector.load %arg12[%c0_39, %c0_40, %c0_41] : memref<5x1x128xf32, #tpu.memory_space<vmem>>, vector<1x1x128xf32>
    %55 = vector.shape_cast %54 : vector<1x1x128xf32> to vector<1x128xf32>
    %56 = vector.broadcast %55 : vector<1x128xf32> to vector<128x128xf32>
    %57 = arith.addf %53, %56 : vector<128x128xf32>
    %cst_42 = arith.constant 0.000000e+00 : f32
    %58 = vector.broadcast %cst_42 : f32 to vector<128x128xf32>
    %59 = arith.maximumf %57, %58 : vector<128x128xf32>
    %60 = arith.truncf %59 : vector<128x128xf32> to vector<128x128xbf16>
    %cst_43 = arith.constant dense<0.000000e+00> : vector<128x128xf32>
    %61 = tpu.matmul %24, %60, %cst_43 {dimension_numbers = #tpu.dot_dimension_numbers<[1], [0], [0], [1], [0, 0, 1, 1], [], []>} : vector<128x128xbf16>, vector<128x128xbf16>, vector<128x128xf32> -> vector<128x128xf32>
    %62 = arith.addf %61, %17 : vector<128x128xf32>
    %cst_44 = arith.constant 0.000000e+00 : f32
    %63 = vector.broadcast %cst_44 : f32 to vector<128x128xf32>
    %64 = arith.maximumf %62, %63 : vector<128x128xf32>
    %65 = arith.truncf %64 : vector<128x128xf32> to vector<128x128xbf16>
    %cst_45 = arith.constant dense<0.000000e+00> : vector<128x128xf32>
    %66 = tpu.matmul %31, %65, %cst_45 {dimension_numbers = #tpu.dot_dimension_numbers<[1], [0], [0], [1], [0, 0, 1, 1], [], []>} : vector<128x128xbf16>, vector<128x128xbf16>, vector<128x128xf32> -> vector<128x128xf32>
    %67 = arith.addf %59, %66 : vector<128x128xf32>
    %68 = arith.truncf %67 : vector<128x128xf32> to vector<128x128xbf16>
    %c1 = arith.constant 1 : index
    %c0_46 = arith.constant 0 : index
    %c0_47 = arith.constant 0 : index
    %69 = vector.load %arg9[%c1, %c0_46, %c0_47] : memref<5x128x128xbf16, #tpu.memory_space<vmem>>, vector<1x128x128xbf16>
    %70 = vector.shape_cast %69 : vector<1x128x128xbf16> to vector<128x128xbf16>
    %cst_48 = arith.constant dense<0.000000e+00> : vector<128x128xf32>
    %71 = tpu.matmul %68, %70, %cst_48 {dimension_numbers = #tpu.dot_dimension_numbers<[1], [0], [0], [1], [0, 0, 1, 1], [], []>} : vector<128x128xbf16>, vector<128x128xbf16>, vector<128x128xf32> -> vector<128x128xf32>
    %c1_49 = arith.constant 1 : index
    %c0_50 = arith.constant 0 : index
    %c0_51 = arith.constant 0 : index
    %72 = vector.load %arg10[%c1_49, %c0_50, %c0_51] : memref<5x1x128xf32, #tpu.memory_space<vmem>>, vector<1x1x128xf32>
    %73 = vector.shape_cast %72 : vector<1x1x128xf32> to vector<1x128xf32>
    %74 = vector.broadcast %73 : vector<1x128xf32> to vector<128x128xf32>
    %75 = arith.addf %71, %74 : vector<128x128xf32>
    %cst_52 = arith.constant 0.000000e+00 : f32
    %76 = vector.broadcast %cst_52 : f32 to vector<128x128xf32>
    %77 = arith.maximumf %75, %76 : vector<128x128xf32>
    %78 = arith.truncf %77 : vector<128x128xf32> to vector<128x128xbf16>
    %c1_53 = arith.constant 1 : index
    %c0_54 = arith.constant 0 : index
    %c0_55 = arith.constant 0 : index
    %79 = vector.load %arg11[%c1_53, %c0_54, %c0_55] : memref<5x128x128xbf16, #tpu.memory_space<vmem>>, vector<1x128x128xbf16>
    %80 = vector.shape_cast %79 : vector<1x128x128xbf16> to vector<128x128xbf16>
    %cst_56 = arith.constant dense<0.000000e+00> : vector<128x128xf32>
    %81 = tpu.matmul %78, %80, %cst_56 {dimension_numbers = #tpu.dot_dimension_numbers<[1], [0], [0], [1], [0, 0, 1, 1], [], []>} : vector<128x128xbf16>, vector<128x128xbf16>, vector<128x128xf32> -> vector<128x128xf32>
    %c1_57 = arith.constant 1 : index
    %c0_58 = arith.constant 0 : index
    %c0_59 = arith.constant 0 : index
    %82 = vector.load %arg12[%c1_57, %c0_58, %c0_59] : memref<5x1x128xf32, #tpu.memory_space<vmem>>, vector<1x1x128xf32>
    %83 = vector.shape_cast %82 : vector<1x1x128xf32> to vector<1x128xf32>
    %84 = vector.broadcast %83 : vector<1x128xf32> to vector<128x128xf32>
    %85 = arith.addf %81, %84 : vector<128x128xf32>
    %cst_60 = arith.constant 0.000000e+00 : f32
    %86 = vector.broadcast %cst_60 : f32 to vector<128x128xf32>
    %87 = arith.maximumf %85, %86 : vector<128x128xf32>
    %88 = arith.truncf %87 : vector<128x128xf32> to vector<128x128xbf16>
    %cst_61 = arith.constant dense<0.000000e+00> : vector<128x128xf32>
    %89 = tpu.matmul %24, %88, %cst_61 {dimension_numbers = #tpu.dot_dimension_numbers<[1], [0], [0], [1], [0, 0, 1, 1], [], []>} : vector<128x128xbf16>, vector<128x128xbf16>, vector<128x128xf32> -> vector<128x128xf32>
    %90 = arith.addf %89, %17 : vector<128x128xf32>
    %cst_62 = arith.constant 0.000000e+00 : f32
    %91 = vector.broadcast %cst_62 : f32 to vector<128x128xf32>
    %92 = arith.maximumf %90, %91 : vector<128x128xf32>
    %93 = arith.truncf %92 : vector<128x128xf32> to vector<128x128xbf16>
    %cst_63 = arith.constant dense<0.000000e+00> : vector<128x128xf32>
    %94 = tpu.matmul %31, %93, %cst_63 {dimension_numbers = #tpu.dot_dimension_numbers<[1], [0], [0], [1], [0, 0, 1, 1], [], []>} : vector<128x128xbf16>, vector<128x128xbf16>, vector<128x128xf32> -> vector<128x128xf32>
    %95 = arith.addf %87, %94 : vector<128x128xf32>
    %96 = arith.truncf %95 : vector<128x128xf32> to vector<128x128xbf16>
    %c2 = arith.constant 2 : index
    %c0_64 = arith.constant 0 : index
    %c0_65 = arith.constant 0 : index
    %97 = vector.load %arg9[%c2, %c0_64, %c0_65] : memref<5x128x128xbf16, #tpu.memory_space<vmem>>, vector<1x128x128xbf16>
    %98 = vector.shape_cast %97 : vector<1x128x128xbf16> to vector<128x128xbf16>
    %cst_66 = arith.constant dense<0.000000e+00> : vector<128x128xf32>
    %99 = tpu.matmul %96, %98, %cst_66 {dimension_numbers = #tpu.dot_dimension_numbers<[1], [0], [0], [1], [0, 0, 1, 1], [], []>} : vector<128x128xbf16>, vector<128x128xbf16>, vector<128x128xf32> -> vector<128x128xf32>
    %c2_67 = arith.constant 2 : index
    %c0_68 = arith.constant 0 : index
    %c0_69 = arith.constant 0 : index
    %100 = vector.load %arg10[%c2_67, %c0_68, %c0_69] : memref<5x1x128xf32, #tpu.memory_space<vmem>>, vector<1x1x128xf32>
    %101 = vector.shape_cast %100 : vector<1x1x128xf32> to vector<1x128xf32>
    %102 = vector.broadcast %101 : vector<1x128xf32> to vector<128x128xf32>
    %103 = arith.addf %99, %102 : vector<128x128xf32>
    %cst_70 = arith.constant 0.000000e+00 : f32
    %104 = vector.broadcast %cst_70 : f32 to vector<128x128xf32>
    %105 = arith.maximumf %103, %104 : vector<128x128xf32>
    %106 = arith.truncf %105 : vector<128x128xf32> to vector<128x128xbf16>
    %c2_71 = arith.constant 2 : index
    %c0_72 = arith.constant 0 : index
    %c0_73 = arith.constant 0 : index
    %107 = vector.load %arg11[%c2_71, %c0_72, %c0_73] : memref<5x128x128xbf16, #tpu.memory_space<vmem>>, vector<1x128x128xbf16>
    %108 = vector.shape_cast %107 : vector<1x128x128xbf16> to vector<128x128xbf16>
    %cst_74 = arith.constant dense<0.000000e+00> : vector<128x128xf32>
    %109 = tpu.matmul %106, %108, %cst_74 {dimension_numbers = #tpu.dot_dimension_numbers<[1], [0], [0], [1], [0, 0, 1, 1], [], []>} : vector<128x128xbf16>, vector<128x128xbf16>, vector<128x128xf32> -> vector<128x128xf32>
    %c2_75 = arith.constant 2 : index
    %c0_76 = arith.constant 0 : index
    %c0_77 = arith.constant 0 : index
    %110 = vector.load %arg12[%c2_75, %c0_76, %c0_77] : memref<5x1x128xf32, #tpu.memory_space<vmem>>, vector<1x1x128xf32>
    %111 = vector.shape_cast %110 : vector<1x1x128xf32> to vector<1x128xf32>
    %112 = vector.broadcast %111 : vector<1x128xf32> to vector<128x128xf32>
    %113 = arith.addf %109, %112 : vector<128x128xf32>
    %cst_78 = arith.constant 0.000000e+00 : f32
    %114 = vector.broadcast %cst_78 : f32 to vector<128x128xf32>
    %115 = arith.maximumf %113, %114 : vector<128x128xf32>
    %116 = arith.truncf %115 : vector<128x128xf32> to vector<128x128xbf16>
    %cst_79 = arith.constant dense<0.000000e+00> : vector<128x128xf32>
    %117 = tpu.matmul %24, %116, %cst_79 {dimension_numbers = #tpu.dot_dimension_numbers<[1], [0], [0], [1], [0, 0, 1, 1], [], []>} : vector<128x128xbf16>, vector<128x128xbf16>, vector<128x128xf32> -> vector<128x128xf32>
    %118 = arith.addf %117, %17 : vector<128x128xf32>
    %cst_80 = arith.constant 0.000000e+00 : f32
    %119 = vector.broadcast %cst_80 : f32 to vector<128x128xf32>
    %120 = arith.maximumf %118, %119 : vector<128x128xf32>
    %121 = arith.truncf %120 : vector<128x128xf32> to vector<128x128xbf16>
    %cst_81 = arith.constant dense<0.000000e+00> : vector<128x128xf32>
    %122 = tpu.matmul %31, %121, %cst_81 {dimension_numbers = #tpu.dot_dimension_numbers<[1], [0], [0], [1], [0, 0, 1, 1], [], []>} : vector<128x128xbf16>, vector<128x128xbf16>, vector<128x128xf32> -> vector<128x128xf32>
    %123 = arith.addf %115, %122 : vector<128x128xf32>
    %124 = arith.truncf %123 : vector<128x128xf32> to vector<128x128xbf16>
    %c3 = arith.constant 3 : index
    %c0_82 = arith.constant 0 : index
    %c0_83 = arith.constant 0 : index
    %125 = vector.load %arg9[%c3, %c0_82, %c0_83] : memref<5x128x128xbf16, #tpu.memory_space<vmem>>, vector<1x128x128xbf16>
    %126 = vector.shape_cast %125 : vector<1x128x128xbf16> to vector<128x128xbf16>
    %cst_84 = arith.constant dense<0.000000e+00> : vector<128x128xf32>
    %127 = tpu.matmul %124, %126, %cst_84 {dimension_numbers = #tpu.dot_dimension_numbers<[1], [0], [0], [1], [0, 0, 1, 1], [], []>} : vector<128x128xbf16>, vector<128x128xbf16>, vector<128x128xf32> -> vector<128x128xf32>
    %c3_85 = arith.constant 3 : index
    %c0_86 = arith.constant 0 : index
    %c0_87 = arith.constant 0 : index
    %128 = vector.load %arg10[%c3_85, %c0_86, %c0_87] : memref<5x1x128xf32, #tpu.memory_space<vmem>>, vector<1x1x128xf32>
    %129 = vector.shape_cast %128 : vector<1x1x128xf32> to vector<1x128xf32>
    %130 = vector.broadcast %129 : vector<1x128xf32> to vector<128x128xf32>
    %131 = arith.addf %127, %130 : vector<128x128xf32>
    %cst_88 = arith.constant 0.000000e+00 : f32
    %132 = vector.broadcast %cst_88 : f32 to vector<128x128xf32>
    %133 = arith.maximumf %131, %132 : vector<128x128xf32>
    %134 = arith.truncf %133 : vector<128x128xf32> to vector<128x128xbf16>
    %c3_89 = arith.constant 3 : index
    %c0_90 = arith.constant 0 : index
    %c0_91 = arith.constant 0 : index
    %135 = vector.load %arg11[%c3_89, %c0_90, %c0_91] : memref<5x128x128xbf16, #tpu.memory_space<vmem>>, vector<1x128x128xbf16>
    %136 = vector.shape_cast %135 : vector<1x128x128xbf16> to vector<128x128xbf16>
    %cst_92 = arith.constant dense<0.000000e+00> : vector<128x128xf32>
    %137 = tpu.matmul %134, %136, %cst_92 {dimension_numbers = #tpu.dot_dimension_numbers<[1], [0], [0], [1], [0, 0, 1, 1], [], []>} : vector<128x128xbf16>, vector<128x128xbf16>, vector<128x128xf32> -> vector<128x128xf32>
    %c3_93 = arith.constant 3 : index
    %c0_94 = arith.constant 0 : index
    %c0_95 = arith.constant 0 : index
    %138 = vector.load %arg12[%c3_93, %c0_94, %c0_95] : memref<5x1x128xf32, #tpu.memory_space<vmem>>, vector<1x1x128xf32>
    %139 = vector.shape_cast %138 : vector<1x1x128xf32> to vector<1x128xf32>
    %140 = vector.broadcast %139 : vector<1x128xf32> to vector<128x128xf32>
    %141 = arith.addf %137, %140 : vector<128x128xf32>
    %cst_96 = arith.constant 0.000000e+00 : f32
    %142 = vector.broadcast %cst_96 : f32 to vector<128x128xf32>
    %143 = arith.maximumf %141, %142 : vector<128x128xf32>
    %144 = arith.truncf %143 : vector<128x128xf32> to vector<128x128xbf16>
    %cst_97 = arith.constant dense<0.000000e+00> : vector<128x128xf32>
    %145 = tpu.matmul %24, %144, %cst_97 {dimension_numbers = #tpu.dot_dimension_numbers<[1], [0], [0], [1], [0, 0, 1, 1], [], []>} : vector<128x128xbf16>, vector<128x128xbf16>, vector<128x128xf32> -> vector<128x128xf32>
    %146 = arith.addf %145, %17 : vector<128x128xf32>
    %cst_98 = arith.constant 0.000000e+00 : f32
    %147 = vector.broadcast %cst_98 : f32 to vector<128x128xf32>
    %148 = arith.maximumf %146, %147 : vector<128x128xf32>
    %149 = arith.truncf %148 : vector<128x128xf32> to vector<128x128xbf16>
    %cst_99 = arith.constant dense<0.000000e+00> : vector<128x128xf32>
    %150 = tpu.matmul %31, %149, %cst_99 {dimension_numbers = #tpu.dot_dimension_numbers<[1], [0], [0], [1], [0, 0, 1, 1], [], []>} : vector<128x128xbf16>, vector<128x128xbf16>, vector<128x128xf32> -> vector<128x128xf32>
    %151 = arith.addf %143, %150 : vector<128x128xf32>
    %152 = arith.truncf %151 : vector<128x128xf32> to vector<128x128xbf16>
    %c4 = arith.constant 4 : index
    %c0_100 = arith.constant 0 : index
    %c0_101 = arith.constant 0 : index
    %153 = vector.load %arg9[%c4, %c0_100, %c0_101] : memref<5x128x128xbf16, #tpu.memory_space<vmem>>, vector<1x128x128xbf16>
    %154 = vector.shape_cast %153 : vector<1x128x128xbf16> to vector<128x128xbf16>
    %cst_102 = arith.constant dense<0.000000e+00> : vector<128x128xf32>
    %155 = tpu.matmul %152, %154, %cst_102 {dimension_numbers = #tpu.dot_dimension_numbers<[1], [0], [0], [1], [0, 0, 1, 1], [], []>} : vector<128x128xbf16>, vector<128x128xbf16>, vector<128x128xf32> -> vector<128x128xf32>
    %c4_103 = arith.constant 4 : index
    %c0_104 = arith.constant 0 : index
    %c0_105 = arith.constant 0 : index
    %156 = vector.load %arg10[%c4_103, %c0_104, %c0_105] : memref<5x1x128xf32, #tpu.memory_space<vmem>>, vector<1x1x128xf32>
    %157 = vector.shape_cast %156 : vector<1x1x128xf32> to vector<1x128xf32>
    %158 = vector.broadcast %157 : vector<1x128xf32> to vector<128x128xf32>
    %159 = arith.addf %155, %158 : vector<128x128xf32>
    %cst_106 = arith.constant 0.000000e+00 : f32
    %160 = vector.broadcast %cst_106 : f32 to vector<128x128xf32>
    %161 = arith.maximumf %159, %160 : vector<128x128xf32>
    %162 = arith.truncf %161 : vector<128x128xf32> to vector<128x128xbf16>
    %c4_107 = arith.constant 4 : index
    %c0_108 = arith.constant 0 : index
    %c0_109 = arith.constant 0 : index
    %163 = vector.load %arg11[%c4_107, %c0_108, %c0_109] : memref<5x128x128xbf16, #tpu.memory_space<vmem>>, vector<1x128x128xbf16>
    %164 = vector.shape_cast %163 : vector<1x128x128xbf16> to vector<128x128xbf16>
    %cst_110 = arith.constant dense<0.000000e+00> : vector<128x128xf32>
    %165 = tpu.matmul %162, %164, %cst_110 {dimension_numbers = #tpu.dot_dimension_numbers<[1], [0], [0], [1], [0, 0, 1, 1], [], []>} : vector<128x128xbf16>, vector<128x128xbf16>, vector<128x128xf32> -> vector<128x128xf32>
    %c4_111 = arith.constant 4 : index
    %c0_112 = arith.constant 0 : index
    %c0_113 = arith.constant 0 : index
    %166 = vector.load %arg12[%c4_111, %c0_112, %c0_113] : memref<5x1x128xf32, #tpu.memory_space<vmem>>, vector<1x1x128xf32>
    %167 = vector.shape_cast %166 : vector<1x1x128xf32> to vector<1x128xf32>
    %168 = vector.broadcast %167 : vector<1x128xf32> to vector<128x128xf32>
    %169 = arith.addf %165, %168 : vector<128x128xf32>
    %cst_114 = arith.constant 0.000000e+00 : f32
    %170 = vector.broadcast %cst_114 : f32 to vector<128x128xf32>
    %171 = arith.maximumf %169, %170 : vector<128x128xf32>
    %c0_115 = arith.constant 0 : index
    %c0_116 = arith.constant 0 : index
    %172 = vector.load %arg13[%c0_115, %c0_116] : memref<1x128xf32, #tpu.memory_space<vmem>>, vector<1x128xf32>
    %173 = arith.truncf %172 : vector<1x128xf32> to vector<1x128xbf16>
    %174 = arith.truncf %171 : vector<128x128xf32> to vector<128x128xbf16>
    %cst_117 = arith.constant dense<0.000000e+00> : vector<1x128xf32>
    %175 = tpu.matmul %173, %174, %cst_117 {dimension_numbers = #tpu.dot_dimension_numbers<[1], [1], [0], [0], [0, 0, 1, 0], [], []>} : vector<1x128xbf16>, vector<128x128xbf16>, vector<1x128xf32> -> vector<1x128xf32>
    %c0_118 = arith.constant 0 : index
    %c0_119 = arith.constant 0 : index
    %176 = memref.load %arg14[%c0_118, %c0_119] : memref<1x1xf32, #tpu.memory_space<smem>>
    %177 = vector.broadcast %176 : f32 to vector<1x128xf32>
    %178 = arith.addf %175, %177 : vector<1x128xf32>
    %cst_120 = arith.constant 0.000000e+00 : f32
    %179 = vector.broadcast %cst_120 : f32 to vector<1x128xf32>
    %180 = arith.subf %179, %178 : vector<1x128xf32>
    %181 = math.exp %180 : vector<1x128xf32>
    %cst_121 = arith.constant 1.000000e+00 : f32
    %182 = vector.broadcast %cst_121 : f32 to vector<1x128xf32>
    %183 = arith.addf %182, %181 : vector<1x128xf32>
    %184 = tpu.reciprocal %183 : vector<1x128xf32> -> vector<1x128xf32>
    %c0_122 = arith.constant 0 : index
    %c0_123 = arith.constant 0 : index
    %c0_124 = arith.constant 0 : index
    %185 = vector.load %arg15[%c0_122, %c0_123, %c0_124] : memref<1x1x128xf32, #tpu.memory_space<vmem>>, vector<1x1x128xf32>
    %186 = vector.shape_cast %185 : vector<1x1x128xf32> to vector<1x128xf32>
    %187 = vector.shape_cast %184 : vector<1x128xf32> to vector<1x1x128xf32>
    tpu.vector_store %arg15[%c0_122, %c0_123, %c0_124], %187 {strides = array<i32>} : memref<1x1x128xf32, #tpu.memory_space<vmem>>, vector<1x1x128xf32>,
    return
  }
  func.func @transform_0(%arg0: i32) -> (i32, i32, i32) {
    %c0_i32 = arith.constant 0 : i32
    %c0_i32_0 = arith.constant 0 : i32
    %c0_i32_1 = arith.constant 0 : i32
    return %arg0, %c0_i32, %c0_i32_0 : i32, i32, i32
  }
  func.func @transform_1(%arg0: i32) -> (i32, i32, i32) {
    %c0_i32 = arith.constant 0 : i32
    %c0_i32_0 = arith.constant 0 : i32
    %c0_i32_1 = arith.constant 0 : i32
    return %arg0, %c0_i32, %c0_i32_0 : i32, i32, i32
  }
  func.func @transform_2(%arg0: i32) -> (i32, i32, i32) {
    %c0_i32 = arith.constant 0 : i32
    %c0_i32_0 = arith.constant 0 : i32
    %c0_i32_1 = arith.constant 0 : i32
    return %arg0, %c0_i32, %c0_i32_0 : i32, i32, i32
  }
  func.func @transform_3(%arg0: i32) -> (i32, i32, i32) {
    %c0_i32 = arith.constant 0 : i32
    %c0_i32_0 = arith.constant 0 : i32
    %c0_i32_1 = arith.constant 0 : i32
    return %arg0, %c0_i32, %c0_i32_0 : i32, i32, i32
  }
  func.func @transform_4(%arg0: i32) -> (i32, i32) {
    %c0_i32 = arith.constant 0 : i32
    %c0_i32_0 = arith.constant 0 : i32
    %c0_i32_1 = arith.constant 0 : i32
    return %c0_i32, %c0_i32_0 : i32, i32
  }
  func.func @transform_5(%arg0: i32) -> (i32, i32) {
    %c0_i32 = arith.constant 0 : i32
    %c0_i32_0 = arith.constant 0 : i32
    %c0_i32_1 = arith.constant 0 : i32
    return %c0_i32, %c0_i32_0 : i32, i32
  }
  func.func @transform_6(%arg0: i32) -> (i32, i32) {
    %c0_i32 = arith.constant 0 : i32
    %c0_i32_0 = arith.constant 0 : i32
    %c0_i32_1 = arith.constant 0 : i32
    return %c0_i32, %c0_i32_0 : i32, i32
  }
  func.func @transform_7(%arg0: i32) -> (i32, i32) {
    %c0_i32 = arith.constant 0 : i32
    %c0_i32_0 = arith.constant 0 : i32
    %c0_i32_1 = arith.constant 0 : i32
    return %c0_i32, %c0_i32_0 : i32, i32
  }
  func.func @transform_8(%arg0: i32) -> (i32, i32, i32) {
    %c0_i32 = arith.constant 0 : i32
    %c0_i32_0 = arith.constant 0 : i32
    %c0_i32_1 = arith.constant 0 : i32
    %c0_i32_2 = arith.constant 0 : i32
    return %c0_i32, %c0_i32_0, %c0_i32_1 : i32, i32, i32
  }
  func.func @transform_9(%arg0: i32) -> (i32, i32, i32) {
    %c0_i32 = arith.constant 0 : i32
    %c0_i32_0 = arith.constant 0 : i32
    %c0_i32_1 = arith.constant 0 : i32
    %c0_i32_2 = arith.constant 0 : i32
    return %c0_i32, %c0_i32_0, %c0_i32_1 : i32, i32, i32
  }
  func.func @transform_10(%arg0: i32) -> (i32, i32, i32) {
    %c0_i32 = arith.constant 0 : i32
    %c0_i32_0 = arith.constant 0 : i32
    %c0_i32_1 = arith.constant 0 : i32
    %c0_i32_2 = arith.constant 0 : i32
    return %c0_i32, %c0_i32_0, %c0_i32_1 : i32, i32, i32
  }
  func.func @transform_11(%arg0: i32) -> (i32, i32, i32) {
    %c0_i32 = arith.constant 0 : i32
    %c0_i32_0 = arith.constant 0 : i32
    %c0_i32_1 = arith.constant 0 : i32
    %c0_i32_2 = arith.constant 0 : i32
    return %c0_i32, %c0_i32_0, %c0_i32_1 : i32, i32, i32
  }
  func.func @transform_12(%arg0: i32) -> (i32, i32) {
    %c0_i32 = arith.constant 0 : i32
    %c0_i32_0 = arith.constant 0 : i32
    %c0_i32_1 = arith.constant 0 : i32
    return %c0_i32, %c0_i32_0 : i32, i32
  }
  func.func @transform_13(%arg0: i32) -> (i32, i32) {
    %c0_i32 = arith.constant 0 : i32
    %c0_i32_0 = arith.constant 0 : i32
    %c0_i32_1 = arith.constant 0 : i32
    return %c0_i32, %c0_i32_0 : i32, i32
  }
  func.func @transform_14(%arg0: i32) -> (i32, i32, i32) {
    %c0_i32 = arith.constant 0 : i32
    %c0_i32_0 = arith.constant 0 : i32
    %c0_i32_1 = arith.constant 0 : i32
    return %arg0, %c0_i32, %c0_i32_0 : i32, i32, i32
  }
}

</mosaic_0001>

<llo_original>
// kernel: tpu_custom_call.1
$region0: #{tpu_custom_call.1}
  #allocation0 [shape = 'u32[]', space=smem, size = 0x4, offset = 0x4, fixed_abs, tag = 'smem constant byte address 0x4 - core index']
  #allocation1 [shape = 'u32[144,128]{1,0:T(1,128)}', space=vmem, size = 0x12000, scoped, tag = 'internal scratch']
  #allocation2 [shape = 'f32[1,1]{1,0:T(1,128)S(6)}', space=smem, size = 0x200, scoped, tag = 'scoped memory for tpu_custom_call.1']
  %s0 = inlined_call_operand.hbm [shape: bf16[2,128,1536], index: 0, kind: input, shape index: {}]
  %s1 = inlined_call_operand.vmem [shape: bf16[2,128,128], index: 1, kind: input, shape index: {}]
  %s2 = inlined_call_operand.vmem [shape: s32[2,128,1], index: 2, kind: input, shape index: {}]
  %s3 = inlined_call_operand.vmem [shape: s32[2,1,128], index: 3, kind: input, shape index: {}]
  %s4 = inlined_call_operand.hbm [shape: bf16[1536,128], index: 4, kind: input, shape index: {}]
  %s5 = inlined_call_operand.vmem [shape: f32[1,128], index: 5, kind: input, shape index: {}]
  %s6 = inlined_call_operand.vmem [shape: bf16[128,128], index: 6, kind: input, shape index: {}]
  %s7 = inlined_call_operand.vmem [shape: f32[1,128], index: 7, kind: input, shape index: {}]
  %s8 = inlined_call_operand.hbm [shape: bf16[5,128,128], index: 8, kind: input, shape index: {}]
  %s9 = inlined_call_operand.vmem [shape: f32[5,1,128], index: 9, kind: input, shape index: {}]
  %s10 = inlined_call_operand.hbm [shape: bf16[5,128,128], index: 10, kind: input, shape index: {}]
  %s11 = inlined_call_operand.vmem [shape: f32[5,1,128], index: 11, kind: input, shape index: {}]
  %s12 = inlined_call_operand.vmem [shape: f32[1,128], index: 12, kind: input, shape index: {}]
  %s13 = inlined_call_operand.<no memory space> [shape: f32[1,1], index: 13, kind: input, shape index: {}]
  %s14 = inlined_call_operand.hbm [shape: f32[2,1,128], index: 14, kind: output, shape index: {}]
  %s15 = sld [smem:[#allocation0]]
  $region105: #{tpu_custom_call.1} parent=0
    _
  %s17 = ssub.s32 1, %s15
  %s18 = scalar_select 0, %s17, %s15
  %19 = sst [smem:[#allocation2]] %s13
  $region1: #{tpu_custom_call.1} parent=0
    #allocation3 [shape = 'u8[786432]{0}', space=vmem, size = 0xc0000, scoped, tag = 'input window, operand 0']
    #allocation4 [shape = 's32[2]{0}', space=sflag, size = 0x8, scoped, tag = 'scoped memory for tpu_custom_call.1']
    #allocation5 [shape = 's32[2]{0}', space=sflag, size = 0x8, scoped, tag = 'scoped memory for tpu_custom_call.1']
    #allocation6 [shape = 'u8[393216]{0}', space=vmem, size = 0x60000, scoped, tag = 'input window, operand 4, single buffered']
    #allocation7 [shape = 's32[1]{0}', space=sflag, size = 0x4, scoped, tag = 'scoped memory for tpu_custom_call.1']
    #allocation8 [shape = 'u8[163840]{0}', space=vmem, size = 0x28000, scoped, tag = 'input window, operand 8, single buffered']
    #allocation9 [shape = 'u8[163840]{0}', space=vmem, size = 0x28000, scoped, tag = 'input window, operand 10, single buffered']
    #allocation10 [shape = 's32[1]{0}', space=sflag, size = 0x4, scoped, tag = 'scoped memory for tpu_custom_call.1']
    #allocation11 [shape = 'u8[1024]{0}', space=vmem, size = 0x400, scoped, tag = 'output window, operand 0']
    %20 = vsyncpa [#allocation4], 0
    %s21 = scalar_lea.sflag [#allocation4], 1
    %22 = vsyncpa %s21, 0
    %23 = vsyncpa [#allocation7], 0
    %24 = vsyncpa [#allocation10], 0
    %25 = vsyncpa [#allocation5], 0
    %s26 = scalar_lea.sflag [#allocation5], 1
    %27 = vsyncpa %s26, 0
    loop: start=0, step=1, limit=4
    $region2: #{tpu_custom_call.1} parent=1 // loop_pre_header
      _
    $region3: #{tpu_custom_call.1} parent=1 // loop_header
      %s29 = sphi 0, %s33
      %p30 = scmp.ge.s32.totalorder %s29, 4
      %s39 = sphi 0, %s41
      %s42 = sphi 0, %s39
      %s43 = sphi 0, %s42
      %s59 = sphi 0, %s43
      %s65 = sphi 0, %s67
      %s68 = sphi 0, %s65
      %s69 = sphi 0, %s68
      %s85 = sphi 0, %s69
      %s91 = sphi 0, %s93
      %s94 = sphi 0, %s91
      %s95 = sphi 0, %s94
      %s111 = sphi 0, %s95
      %s117 = sphi 0, %s119
      %s120 = sphi 0, %s117
      %s121 = sphi 0, %s120
      %s137 = sphi 0, %s121
      %s141 = sphi 0, %s141
      %s143 = sphi 0, %s141
      %s144 = sphi 0, %s143
      %s158 = sphi 0, %s144
      %s162 = sphi 0, %s162
      %s164 = sphi 0, %s162
      %s165 = sphi 0, %s164
      %s179 = sphi 0, %s165
      %s183 = sphi 0, %s183
      %s185 = sphi 0, %s183
      %s186 = sphi 0, %s185
      %s200 = sphi 0, %s186
      %s204 = sphi 0, %s204
      %s206 = sphi 0, %s204
      %s207 = sphi 0, %s206
      %s221 = sphi 0, %s207
      %s225 = sphi 0, %s225
      %s227 = sphi 0, %s225
      %s228 = sphi 0, %s227
      %s242 = sphi 0, %s228
      %s246 = sphi 0, %s246
      %s248 = sphi 0, %s246
      %s249 = sphi 0, %s248
      %s263 = sphi 0, %s249
      %s267 = sphi 0, %s267
      %s269 = sphi 0, %s267
      %s270 = sphi 0, %s269
      %s284 = sphi 0, %s270
      %s288 = sphi 0, %s288
      %s290 = sphi 0, %s288
      %s291 = sphi 0, %s290
      %s305 = sphi 0, %s291
      %s309 = sphi 0, %s309
      %s311 = sphi 0, %s309
      %s312 = sphi 0, %s311
      %s326 = sphi 0, %s312
      %s330 = sphi 0, %s330
      %s332 = sphi 0, %s330
      %s333 = sphi 0, %s332
      %s347 = sphi 0, %s333
      %s353 = sphi 0, %s355
      %s356 = sphi 0, %s353
      %s357 = sphi 0, %s356
      %s373 = sphi 0, %s357
    $region4: #{tpu_custom_call.1} parent=1 // loop_header_branch
      %32 = sbr.rel (%p30) target = $region8
    $region5: #{tpu_custom_call.1} parent=1 // loop_body
      %s34 = ssub.s32 %s29, 1
      %s35 = ssub.s32 %s29, 2
      %s36 = sadd.s32 %s29, 1
      %s37 = ssub.s32 %s29, %s36
      %p38 = scmp.eq.s32.totalorder %s37, 0
      %s40 = sadd.s32 %s39, 1
      %s41 = scalar_select %p38, %s39, %s40
      %p44 = pneg %p38
      %p45 = scmp.eq.s32.totalorder %s29, 1
      %p46 = por %p44, %p45
      %p47 = scmp.ne.s32.totalorder %s39, %s42
      %p48 = scmp.eq.s32.totalorder %s29, 0
      %p49 = por %p47, %p48
      %p50 = scmp.ne.s32.totalorder %s39, %s42
      %p51 = scmp.eq.s32.totalorder %s34, 1
      %p52 = por %p50, %p51
      %p53 = scmp.ne.s32.totalorder %s42, %s43
      %p54 = scmp.eq.s32.totalorder %s34, 0
      %p55 = por %p53, %p54
      %p56 = scmp.ne.s32.totalorder %s42, %s43
      %p57 = scmp.eq.s32.totalorder %s35, 1
      %p58 = por %p56, %p57
      %p60 = scmp.ne.s32.totalorder %s43, %s59
      %p61 = scmp.eq.s32.totalorder %s35, 0
      %p62 = por %p60, %p61
      %s63 = ssub.s32 %s29, %s36
      %p64 = scmp.eq.s32.totalorder %s63, 0
      %s66 = sadd.s32 %s65, 1
      %s67 = scalar_select %p64, %s65, %s66
      %p70 = pneg %p64
      %p71 = scmp.eq.s32.totalorder %s29, 1
      %p72 = por %p70, %p71
      %p73 = scmp.ne.s32.totalorder %s65, %s68
      %p74 = scmp.eq.s32.totalorder %s29, 0
      %p75 = por %p73, %p74
      %p76 = scmp.ne.s32.totalorder %s65, %s68
      %p77 = scmp.eq.s32.totalorder %s34, 1
      %p78 = por %p76, %p77
      %p79 = scmp.ne.s32.totalorder %s68, %s69
      %p80 = scmp.eq.s32.totalorder %s34, 0
      %p81 = por %p79, %p80
      %p82 = scmp.ne.s32.totalorder %s68, %s69
      %p83 = scmp.eq.s32.totalorder %s35, 1
      %p84 = por %p82, %p83
      %p86 = scmp.ne.s32.totalorder %s69, %s85
      %p87 = scmp.eq.s32.totalorder %s35, 0
      %p88 = por %p86, %p87
      %s89 = ssub.s32 %s29, %s36
      %p90 = scmp.eq.s32.totalorder %s89, 0
      %s92 = sadd.s32 %s91, 1
      %s93 = scalar_select %p90, %s91, %s92
      %p96 = pneg %p90
      %p97 = scmp.eq.s32.totalorder %s29, 1
      %p98 = por %p96, %p97
      %p99 = scmp.ne.s32.totalorder %s91, %s94
      %p100 = scmp.eq.s32.totalorder %s29, 0
      %p101 = por %p99, %p100
      %p102 = scmp.ne.s32.totalorder %s91, %s94
      %p103 = scmp.eq.s32.totalorder %s34, 1
      %p104 = por %p102, %p103
      %p105 = scmp.ne.s32.totalorder %s94, %s95
      %p106 = scmp.eq.s32.totalorder %s34, 0
      %p107 = por %p105, %p106
      %p108 = scmp.ne.s32.totalorder %s94, %s95
      %p109 = scmp.eq.s32.totalorder %s35, 1
      %p110 = por %p108, %p109
      %p112 = scmp.ne.s32.totalorder %s95, %s111
      %p113 = scmp.eq.s32.totalorder %s35, 0
      %p114 = por %p112, %p113
      %s115 = ssub.s32 %s29, %s36
      %p116 = scmp.eq.s32.totalorder %s115, 0
      %s118 = sadd.s32 %s117, 1
      %s119 = scalar_select %p116, %s117, %s118
      %p122 = pneg %p116
      %p123 = scmp.eq.s32.totalorder %s29, 1
      %p124 = por %p122, %p123
      %p125 = scmp.ne.s32.totalorder %s117, %s120
      %p126 = scmp.eq.s32.totalorder %s29, 0
      %p127 = por %p125, %p126
      %p128 = scmp.ne.s32.totalorder %s117, %s120
      %p129 = scmp.eq.s32.totalorder %s34, 1
      %p130 = por %p128, %p129
      %p131 = scmp.ne.s32.totalorder %s120, %s121
      %p132 = scmp.eq.s32.totalorder %s34, 0
      %p133 = por %p131, %p132
      %p134 = scmp.ne.s32.totalorder %s120, %s121
      %p135 = scmp.eq.s32.totalorder %s35, 1
      %p136 = por %p134, %p135
      %p138 = scmp.ne.s32.totalorder %s121, %s137
      %p139 = scmp.eq.s32.totalorder %s35, 0
      %p140 = por %p138, %p139
      %s142 = sadd.s32 %s141, 1
      %p145 = scmp.eq.s32.totalorder %s29, 1
      %p146 = scmp.ne.s32.totalorder %s141, %s143
      %p147 = scmp.eq.s32.totalorder %s29, 0
      %p148 = por %p146, %p147
      %p149 = scmp.ne.s32.totalorder %s141, %s143
      %p150 = scmp.eq.s32.totalorder %s34, 1
      %p151 = por %p149, %p150
      %p152 = scmp.ne.s32.totalorder %s143, %s144
      %p153 = scmp.eq.s32.totalorder %s34, 0
      %p154 = por %p152, %p153
      %p155 = scmp.ne.s32.totalorder %s143, %s144
      %p156 = scmp.eq.s32.totalorder %s35, 1
      %p157 = por %p155, %p156
      %p159 = scmp.ne.s32.totalorder %s144, %s158
      %p160 = scmp.eq.s32.totalorder %s35, 0
      %p161 = por %p159, %p160
      %s163 = sadd.s32 %s162, 1
      %p166 = scmp.eq.s32.totalorder %s29, 1
      %p167 = scmp.ne.s32.totalorder %s162, %s164
      %p168 = scmp.eq.s32.totalorder %s29, 0
      %p169 = por %p167, %p168
      %p170 = scmp.ne.s32.totalorder %s162, %s164
      %p171 = scmp.eq.s32.totalorder %s34, 1
      %p172 = por %p170, %p171
      %p173 = scmp.ne.s32.totalorder %s164, %s165
      %p174 = scmp.eq.s32.totalorder %s34, 0
      %p175 = por %p173, %p174
      %p176 = scmp.ne.s32.totalorder %s164, %s165
      %p177 = scmp.eq.s32.totalorder %s35, 1
      %p178 = por %p176, %p177
      %p180 = scmp.ne.s32.totalorder %s165, %s179
      %p181 = scmp.eq.s32.totalorder %s35, 0
      %p182 = por %p180, %p181
      %s184 = sadd.s32 %s183, 1
      %p187 = scmp.eq.s32.totalorder %s29, 1
      %p188 = scmp.ne.s32.totalorder %s183, %s185
      %p189 = scmp.eq.s32.totalorder %s29, 0
      %p190 = por %p188, %p189
      %p191 = scmp.ne.s32.totalorder %s183, %s185
      %p192 = scmp.eq.s32.totalorder %s34, 1
      %p193 = por %p191, %p192
      %p194 = scmp.ne.s32.totalorder %s185, %s186
      %p195 = scmp.eq.s32.totalorder %s34, 0
      %p196 = por %p194, %p195
      %p197 = scmp.ne.s32.totalorder %s185, %s186
      %p198 = scmp.eq.s32.totalorder %s35, 1
      %p199 = por %p197, %p198
      %p201 = scmp.ne.s32.totalorder %s186, %s200
      %p202 = scmp.eq.s32.totalorder %s35, 0
      %p203 = por %p201, %p202
      %s205 = sadd.s32 %s204, 1
      %p208 = scmp.eq.s32.totalorder %s29, 1
      %p209 = scmp.ne.s32.totalorder %s204, %s206
      %p210 = scmp.eq.s32.totalorder %s29, 0
      %p211 = por %p209, %p210
      %p212 = scmp.ne.s32.totalorder %s204, %s206
      %p213 = scmp.eq.s32.totalorder %s34, 1
      %p214 = por %p212, %p213
      %p215 = scmp.ne.s32.totalorder %s206, %s207
      %p216 = scmp.eq.s32.totalorder %s34, 0
      %p217 = por %p215, %p216
      %p218 = scmp.ne.s32.totalorder %s206, %s207
      %p219 = scmp.eq.s32.totalorder %s35, 1
      %p220 = por %p218, %p219
      %p222 = scmp.ne.s32.totalorder %s207, %s221
      %p223 = scmp.eq.s32.totalorder %s35, 0
      %p224 = por %p222, %p223
      %s226 = sadd.s32 %s225, 1
      %p229 = scmp.eq.s32.totalorder %s29, 1
      %p230 = scmp.ne.s32.totalorder %s225, %s227
      %p231 = scmp.eq.s32.totalorder %s29, 0
      %p232 = por %p230, %p231
      %p233 = scmp.ne.s32.totalorder %s225, %s227
      %p234 = scmp.eq.s32.totalorder %s34, 1
      %p235 = por %p233, %p234
      %p236 = scmp.ne.s32.totalorder %s227, %s228
      %p237 = scmp.eq.s32.totalorder %s34, 0
      %p238 = por %p236, %p237
      %p239 = scmp.ne.s32.totalorder %s227, %s228
      %p240 = scmp.eq.s32.totalorder %s35, 1
      %p241 = por %p239, %p240
      %p243 = scmp.ne.s32.totalorder %s228, %s242
      %p244 = scmp.eq.s32.totalorder %s35, 0
      %p245 = por %p243, %p244
      %s247 = sadd.s32 %s246, 1
      %p250 = scmp.eq.s32.totalorder %s29, 1
      %p251 = scmp.ne.s32.totalorder %s246, %s248
      %p252 = scmp.eq.s32.totalorder %s29, 0
      %p253 = por %p251, %p252
      %p254 = scmp.ne.s32.totalorder %s246, %s248
      %p255 = scmp.eq.s32.totalorder %s34, 1
      %p256 = por %p254, %p255
      %p257 = scmp.ne.s32.totalorder %s248, %s249
      %p258 = scmp.eq.s32.totalorder %s34, 0
      %p259 = por %p257, %p258
      %p260 = scmp.ne.s32.totalorder %s248, %s249
      %p261 = scmp.eq.s32.totalorder %s35, 1
      %p262 = por %p260, %p261
      %p264 = scmp.ne.s32.totalorder %s249, %s263
      %p265 = scmp.eq.s32.totalorder %s35, 0
      %p266 = por %p264, %p265
      %s268 = sadd.s32 %s267, 1
      %p271 = scmp.eq.s32.totalorder %s29, 1
      %p272 = scmp.ne.s32.totalorder %s267, %s269
      %p273 = scmp.eq.s32.totalorder %s29, 0
      %p274 = por %p272, %p273
      %p275 = scmp.ne.s32.totalorder %s267, %s269
      %p276 = scmp.eq.s32.totalorder %s34, 1
      %p277 = por %p275, %p276
      %p278 = scmp.ne.s32.totalorder %s269, %s270
      %p279 = scmp.eq.s32.totalorder %s34, 0
      %p280 = por %p278, %p279
      %p281 = scmp.ne.s32.totalorder %s269, %s270
      %p282 = scmp.eq.s32.totalorder %s35, 1
      %p283 = por %p281, %p282
      %p285 = scmp.ne.s32.totalorder %s270, %s284
      %p286 = scmp.eq.s32.totalorder %s35, 0
      %p287 = por %p285, %p286
      %s289 = sadd.s32 %s288, 1
      %p292 = scmp.eq.s32.totalorder %s29, 1
      %p293 = scmp.ne.s32.totalorder %s288, %s290
      %p294 = scmp.eq.s32.totalorder %s29, 0
      %p295 = por %p293, %p294
      %p296 = scmp.ne.s32.totalorder %s288, %s290
      %p297 = scmp.eq.s32.totalorder %s34, 1
      %p298 = por %p296, %p297
      %p299 = scmp.ne.s32.totalorder %s290, %s291
      %p300 = scmp.eq.s32.totalorder %s34, 0
      %p301 = por %p299, %p300
      %p302 = scmp.ne.s32.totalorder %s290, %s291
      %p303 = scmp.eq.s32.totalorder %s35, 1
      %p304 = por %p302, %p303
      %p306 = scmp.ne.s32.totalorder %s291, %s305
      %p307 = scmp.eq.s32.totalorder %s35, 0
      %p308 = por %p306, %p307
      %s310 = sadd.s32 %s309, 1
      %p313 = scmp.eq.s32.totalorder %s29, 1
      %p314 = scmp.ne.s32.totalorder %s309, %s311
      %p315 = scmp.eq.s32.totalorder %s29, 0
      %p316 = por %p314, %p315
      %p317 = scmp.ne.s32.totalorder %s309, %s311
      %p318 = scmp.eq.s32.totalorder %s34, 1
      %p319 = por %p317, %p318
      %p320 = scmp.ne.s32.totalorder %s311, %s312
      %p321 = scmp.eq.s32.totalorder %s34, 0
      %p322 = por %p320, %p321
      %p323 = scmp.ne.s32.totalorder %s311, %s312
      %p324 = scmp.eq.s32.totalorder %s35, 1
      %p325 = por %p323, %p324
      %p327 = scmp.ne.s32.totalorder %s312, %s326
      %p328 = scmp.eq.s32.totalorder %s35, 0
      %p329 = por %p327, %p328
      %s331 = sadd.s32 %s330, 1
      %p334 = scmp.eq.s32.totalorder %s29, 1
      %p335 = scmp.ne.s32.totalorder %s330, %s332
      %p336 = scmp.eq.s32.totalorder %s29, 0
      %p337 = por %p335, %p336
      %p338 = scmp.ne.s32.totalorder %s330, %s332
      %p339 = scmp.eq.s32.totalorder %s34, 1
      %p340 = por %p338, %p339
      %p341 = scmp.ne.s32.totalorder %s332, %s333
      %p342 = scmp.eq.s32.totalorder %s34, 0
      %p343 = por %p341, %p342
      %p344 = scmp.ne.s32.totalorder %s332, %s333
      %p345 = scmp.eq.s32.totalorder %s35, 1
      %p346 = por %p344, %p345
      %p348 = scmp.ne.s32.totalorder %s333, %s347
      %p349 = scmp.eq.s32.totalorder %s35, 0
      %p350 = por %p348, %p349
      %s351 = ssub.s32 %s29, %s36
      %p352 = scmp.eq.s32.totalorder %s351, 0
      %s354 = sadd.s32 %s353, 1
      %s355 = scalar_select %p352, %s353, %s354
      %p358 = pneg %p352
      %p359 = scmp.eq.s32.totalorder %s29, 1
      %p360 = por %p358, %p359
      %p361 = scmp.ne.s32.totalorder %s353, %s356
      %p362 = scmp.eq.s32.totalorder %s29, 0
      %p363 = por %p361, %p362
      %p364 = scmp.ne.s32.totalorder %s353, %s356
      %p365 = scmp.eq.s32.totalorder %s34, 1
      %p366 = por %p364, %p365
      %p367 = scmp.ne.s32.totalorder %s356, %s357
      %p368 = scmp.eq.s32.totalorder %s34, 0
      %p369 = por %p367, %p368
      %p370 = scmp.ne.s32.totalorder %s356, %s357
      %p371 = scmp.eq.s32.totalorder %s35, 1
      %p372 = por %p370, %p371
      %p374 = scmp.ne.s32.totalorder %s357, %s373
      %p375 = scmp.eq.s32.totalorder %s35, 0
      %p376 = por %p374, %p375
      %p377 = scmp.le.s32.totalorder 1, %s29
      %p378 = scmp.lt.s32.totalorder %s29, 3
      %p379 = pnand %p377, %p378
      %p380 = pneg %p379
      // Predicated region
      $region9: #{tpu_custom_call.1} parent=5 // pred_check
        _
      $region10: #{tpu_custom_call.1} parent=5 // pred_check_branch
        %382 = sbr.rel (%p379) target = $region12
      $region11: #{tpu_custom_call.1} parent=5 // pred_region
        %s383 = ssub.s32 %s29, 1
        // Predicated region
        $region13: #{tpu_custom_call.1} parent=11 // pred_check
          %p384 = pneg %p154
        $region14: #{tpu_custom_call.1} parent=11 // pred_check_branch
          %386 = sbr.rel (%p384) target = $region16
        $region15: #{tpu_custom_call.1} parent=11 // pred_region
          %s388 = ssub.s32 12288, 12288
          %389 = vsyncadd [#allocation7], %s388
          %s390 = sshll.u32 [#allocation6], 4
          %s391 = int_to_ptr.vmem [resolvable:$true] %s390
          %396 = dma.hbm_to_vmem [thread:$0]  %s4, 12288, %s391, [#allocation7], 64, 64, 4
        $region16: #{tpu_custom_call.1} parent=11 // pred_fallthru
          _
        // Predicated region
        $region17: #{tpu_custom_call.1} parent=11 // pred_check
          %p397 = pneg %p175
        $region18: #{tpu_custom_call.1} parent=11 // pred_check_branch
          %399 = sbr.rel (%p397) target = $region20
        $region19: #{tpu_custom_call.1} parent=11 // pred_region
          _
        $region20: #{tpu_custom_call.1} parent=11 // pred_fallthru
          _
        // Predicated region
        $region21: #{tpu_custom_call.1} parent=11 // pred_check
          %p400 = pneg %p196
        $region22: #{tpu_custom_call.1} parent=11 // pred_check_branch
          %402 = sbr.rel (%p400) target = $region24
        $region23: #{tpu_custom_call.1} parent=11 // pred_region
          _
        $region24: #{tpu_custom_call.1} parent=11 // pred_fallthru
          _
        // Predicated region
        $region25: #{tpu_custom_call.1} parent=11 // pred_check
          %p403 = pneg %p217
        $region26: #{tpu_custom_call.1} parent=11 // pred_check_branch
          %405 = sbr.rel (%p403) target = $region28
        $region27: #{tpu_custom_call.1} parent=11 // pred_region
          _
        $region28: #{tpu_custom_call.1} parent=11 // pred_fallthru
          _
        // Predicated region
        $region29: #{tpu_custom_call.1} parent=11 // pred_check
          %p406 = pneg %p238
        $region30: #{tpu_custom_call.1} parent=11 // pred_check_branch
          %408 = sbr.rel (%p406) target = $region32
        $region31: #{tpu_custom_call.1} parent=11 // pred_region
          %s410 = ssub.s32 5120, 5120
          %411 = vsyncadd [#allocation7], %s410
          %s412 = sshll.u32 [#allocation8], 4
          %s413 = int_to_ptr.vmem [resolvable:$true] %s412
          %418 = dma.hbm_to_vmem [thread:$0]  %s8, 5120, %s413, [#allocation7], 64, 64, 4
        $region32: #{tpu_custom_call.1} parent=11 // pred_fallthru
          _
        // Predicated region
        $region33: #{tpu_custom_call.1} parent=11 // pred_check
          %p419 = pneg %p259
        $region34: #{tpu_custom_call.1} parent=11 // pred_check_branch
          %421 = sbr.rel (%p419) target = $region36
        $region35: #{tpu_custom_call.1} parent=11 // pred_region
          _
        $region36: #{tpu_custom_call.1} parent=11 // pred_fallthru
          _
        // Predicated region
        $region37: #{tpu_custom_call.1} parent=11 // pred_check
          %p422 = pneg %p280
        $region38: #{tpu_custom_call.1} parent=11 // pred_check_branch
          %424 = sbr.rel (%p422) target = $region40
        $region39: #{tpu_custom_call.1} parent=11 // pred_region
          %s426 = ssub.s32 5120, 5120
          %427 = vsyncadd [#allocation10], %s426
          %s428 = sshll.u32 [#allocation9], 4
          %s429 = int_to_ptr.vmem [resolvable:$true] %s428
          %434 = dma.hbm_to_vmem [thread:$0]  %s10, 5120, %s429, [#allocation10], 64, 64, 4
        $region40: #{tpu_custom_call.1} parent=11 // pred_fallthru
          _
        // Predicated region
        $region41: #{tpu_custom_call.1} parent=11 // pred_check
          %p435 = pneg %p301
        $region42: #{tpu_custom_call.1} parent=11 // pred_check_branch
          %437 = sbr.rel (%p435) target = $region44
        $region43: #{tpu_custom_call.1} parent=11 // pred_region
          _
        $region44: #{tpu_custom_call.1} parent=11 // pred_fallthru
          _
        // Predicated region
        $region45: #{tpu_custom_call.1} parent=11 // pred_check
          %p438 = pneg %p322
        $region46: #{tpu_custom_call.1} parent=11 // pred_check_branch
          %440 = sbr.rel (%p438) target = $region48
        $region47: #{tpu_custom_call.1} parent=11 // pred_region
          _
        $region48: #{tpu_custom_call.1} parent=11 // pred_fallthru
          _
        // Predicated region
        $region49: #{tpu_custom_call.1} parent=11 // pred_check
          %p441 = pneg %p343
        $region50: #{tpu_custom_call.1} parent=11 // pred_check_branch
          %443 = sbr.rel (%p441) target = $region52
        $region51: #{tpu_custom_call.1} parent=11 // pred_region
          _
        $region52: #{tpu_custom_call.1} parent=11 // pred_fallthru
          _
      $region12: #{tpu_custom_call.1} parent=5 // pred_fallthru
        _
      %p444 = scmp.lt.s32.totalorder %s29, 2
      // Predicated region
      $region53: #{tpu_custom_call.1} parent=5 // pred_check
        %p445 = pneg %p444
      $region54: #{tpu_custom_call.1} parent=5 // pred_check_branch
        %447 = sbr.rel (%p445) target = $region56
      $region55: #{tpu_custom_call.1} parent=5 // pred_region
        // Predicated region
        $region57: #{tpu_custom_call.1} parent=55 // pred_check
          %p448 = pneg %p49
        $region58: #{tpu_custom_call.1} parent=55 // pred_check_branch
          %450 = sbr.rel (%p448) target = $region60
        $region59: #{tpu_custom_call.1} parent=55 // pred_region
          %s451 = sand.u32 %s39, 1
          %s452 = scalar_lea.sflag [#allocation4], %s451
          %s453 = sand.u32 %s39, 1
          %s454 = smul.addr %s453, 768
          %s455 = scalar_lea.vmem [#allocation3], %s454
          %s457 = ssub.s32 12288, 12288
          %458 = vsyncadd %s452, %s457
          %s459 = smul.addr %s29, 192
          %s460 = smul.addr %s459, 64
          %s461 = scalar_lea.hbm %s0, %s460
          %s462 = sshll.u32 %s455, 4
          %s463 = int_to_ptr.vmem [resolvable:$true] %s462
          %468 = dma.hbm_to_vmem [thread:$0]  %s461, 12288, %s463, %s452, 768, 768, 48
        $region60: #{tpu_custom_call.1} parent=55 // pred_fallthru
          _
        // Predicated region
        $region61: #{tpu_custom_call.1} parent=55 // pred_check
          %p469 = pneg %p75
        $region62: #{tpu_custom_call.1} parent=55 // pred_check_branch
          %471 = sbr.rel (%p469) target = $region64
        $region63: #{tpu_custom_call.1} parent=55 // pred_region
          %p472 = scmp.lt.s32.totalorder %s29, 1
          %s473 = scalar_select %p472, %s29, 1
          %s474 = smul.addr %s473, 16
          %s475 = smul.addr %s474, 4
          %s476 = scalar_lea.vmem %s1, %s475
        $region64: #{tpu_custom_call.1} parent=55 // pred_fallthru
          _
        // Predicated region
        $region65: #{tpu_custom_call.1} parent=55 // pred_check
          %p477 = pneg %p101
        $region66: #{tpu_custom_call.1} parent=55 // pred_check_branch
          %479 = sbr.rel (%p477) target = $region68
        $region67: #{tpu_custom_call.1} parent=55 // pred_region
          %p480 = scmp.lt.s32.totalorder %s29, 1
          %s481 = scalar_select %p480, %s29, 1
          %s482 = smul.addr %s481, 16
          %s483 = smul.addr %s482, 8
          %s484 = scalar_lea.vmem %s2, %s483
        $region68: #{tpu_custom_call.1} parent=55 // pred_fallthru
          _
        // Predicated region
        $region69: #{tpu_custom_call.1} parent=55 // pred_check
          %p485 = pneg %p127
        $region70: #{tpu_custom_call.1} parent=55 // pred_check_branch
          %487 = sbr.rel (%p485) target = $region72
        $region71: #{tpu_custom_call.1} parent=55 // pred_region
          %p488 = scmp.lt.s32.totalorder %s29, 1
          %s489 = scalar_select %p488, %s29, 1
          %s490 = scalar_lea.vmem %s3, %s489
        $region72: #{tpu_custom_call.1} parent=55 // pred_fallthru
          _
      $region56: #{tpu_custom_call.1} parent=5 // pred_fallthru
        _
      %p491 = scmp.le.s32.totalorder 1, %s29
      %p492 = scmp.lt.s32.totalorder %s29, 3
      %p493 = pnand %p491, %p492
      %p494 = pneg %p493
      // Predicated region
      $region73: #{tpu_custom_call.1} parent=5 // pred_check
        _
      $region74: #{tpu_custom_call.1} parent=5 // pred_check_branch
        %496 = sbr.rel (%p493) target = $region76
      $region75: #{tpu_custom_call.1} parent=5 // pred_region
        %s497 = ssub.s32 %s29, 1
        %s498 = sand.u32 %s42, 1
        %s499 = scalar_lea.sflag [#allocation4], %s498
        %s500 = sand.u32 %s42, 1
        %s501 = smul.addr %s500, 768
        %s502 = scalar_lea.vmem [#allocation3], %s501
        // Predicated region
        $region77: #{tpu_custom_call.1} parent=75 // pred_check
          %p503 = pneg %p55
        $region78: #{tpu_custom_call.1} parent=75 // pred_check_branch
          %505 = sbr.rel (%p503) target = $region80
        $region79: #{tpu_custom_call.1} parent=75 // pred_region
          %506 = dma.done %s499, 12288
        $region80: #{tpu_custom_call.1} parent=75 // pred_fallthru
          _
        // Predicated region
        $region81: #{tpu_custom_call.1} parent=75 // pred_check
          %p507 = pneg %p154
        $region82: #{tpu_custom_call.1} parent=75 // pred_check_branch
          %509 = sbr.rel (%p507) target = $region84
        $region83: #{tpu_custom_call.1} parent=75 // pred_region
          %510 = dma.done [#allocation7], 12288
        $region84: #{tpu_custom_call.1} parent=75 // pred_fallthru
          _
        // Predicated region
        $region85: #{tpu_custom_call.1} parent=75 // pred_check
          %p511 = pneg %p238
        $region86: #{tpu_custom_call.1} parent=75 // pred_check_branch
          %513 = sbr.rel (%p511) target = $region88
        $region87: #{tpu_custom_call.1} parent=75 // pred_region
          %514 = dma.done [#allocation7], 5120
        $region88: #{tpu_custom_call.1} parent=75 // pred_fallthru
          _
        // Predicated region
        $region89: #{tpu_custom_call.1} parent=75 // pred_check
          %p515 = pneg %p280
        $region90: #{tpu_custom_call.1} parent=75 // pred_check_branch
          %517 = sbr.rel (%p515) target = $region92
        $region91: #{tpu_custom_call.1} parent=75 // pred_region
          %518 = dma.done [#allocation10], 5120
        $region92: #{tpu_custom_call.1} parent=75 // pred_fallthru
          _
        %s519 = sand.u32 %s42, 1
        %s520 = scalar_lea.sflag [#allocation4], %s519
        %s521 = sand.u32 %s42, 1
        %s522 = smul.addr %s521, 768
        %s523 = scalar_lea.vmem [#allocation3], %s522
        %p524 = pneg %p55
        %p525 = pneg %p52
        %p526 = scmp.lt.s32.totalorder %s34, 1
        %s527 = scalar_select %p526, %s34, 1
        %s528 = smul.addr %s527, 16
        %s529 = smul.addr %s528, 4
        %s530 = scalar_lea.vmem %s1, %s529
        %p531 = pneg %p81
        %p532 = pneg %p78
        %p533 = scmp.lt.s32.totalorder %s34, 1
        %s534 = scalar_select %p533, %s34, 1
        %s535 = smul.addr %s534, 16
        %s536 = smul.addr %s535, 8
        %s537 = scalar_lea.vmem %s2, %s536
        %p538 = pneg %p107
        %p539 = pneg %p104
        %p540 = scmp.lt.s32.totalorder %s34, 1
        %s541 = scalar_select %p540, %s34, 1
        %s542 = scalar_lea.vmem %s3, %s541
        %p543 = pneg %p133
        %p544 = pneg %p130
        %p545 = pneg %p154
        %p546 = pneg %p151
        %p547 = pneg %p175
        %p548 = pneg %p172
        %p549 = pneg %p196
        %p550 = pneg %p193
        %p551 = pneg %p217
        %p552 = pneg %p214
        %p553 = pneg %p238
        %p554 = pneg %p235
        %p555 = pneg %p259
        %p556 = pneg %p256
        %p557 = pneg %p280
        %p558 = pneg %p277
        %p559 = pneg %p301
        %p560 = pneg %p298
        %p561 = pneg %p322
        %p562 = pneg %p319
        %p563 = pneg %p343
        %p564 = pneg %p340
        %p565 = pneg %p369
        %p566 = pneg %p366
        %s567 = sand.u32 %s356, 1
        %s568 = scalar_lea.sflag [#allocation5], %s567
        %s569 = sand.u32 %s356, 1
        %s570 = scalar_lea.vmem [#allocation11], %s569
        %p571 = scmp.lt.s32.totalorder %s34, 1
        %s572 = scalar_select %p571, %s34, 1
        %s573 = smul.addr %s572, 16
        %s574 = smul.addr %s573, 4
        %s575 = scalar_lea.vmem %s1, %s574
        %p576 = scmp.lt.s32.totalorder %s34, 1
        %s577 = scalar_select %p576, %s34, 1
        %s578 = smul.addr %s577, 16
        %s579 = smul.addr %s578, 8
        %s580 = scalar_lea.vmem %s2, %s579
        %p581 = scmp.lt.s32.totalorder %s34, 1
        %s582 = scalar_select %p581, %s34, 1
        %s583 = scalar_lea.vmem %s3, %s582
        %v585 = vld [vmem:[%s502] sm:$0xff]
        %v586 = vld [vmem:[%s502 + $0x8] sm:$0xff]
        %v587 = vld [vmem:[%s502 + $0x10] sm:$0xff]
        %v588 = vld [vmem:[%s502 + $0x18] sm:$0xff]
        %v589 = vld [vmem:[%s502 + $0x20] sm:$0xff]
        %v590 = vld [vmem:[%s502 + $0x28] sm:$0xff]
        %v591 = vld [vmem:[%s502 + $0x30] sm:$0xff]
        %v592 = vld [vmem:[%s502 + $0x38] sm:$0xff]
        %v593 = vld [vmem:[%s502 + $0x40] sm:$0xff]
        %v594 = vld [vmem:[%s502 + $0x48] sm:$0xff]
        %v595 = vld [vmem:[%s502 + $0x50] sm:$0xff]
        %v596 = vld [vmem:[%s502 + $0x58] sm:$0xff]
        %v597 = vld [vmem:[%s502 + $0x60] sm:$0xff]
        %v598 = vld [vmem:[%s502 + $0x68] sm:$0xff]
        %v599 = vld [vmem:[%s502 + $0x70] sm:$0xff]
        %v600 = vld [vmem:[%s502 + $0x78] sm:$0xff]
        %v601 = vld [vmem:[%s502 + $0x80] sm:$0xff]
        %v602 = vld [vmem:[%s502 + $0x88] sm:$0xff]
        %v603 = vld [vmem:[%s502 + $0x90] sm:$0xff]
        %v604 = vld [vmem:[%s502 + $0x98] sm:$0xff]
        %v605 = vld [vmem:[%s502 + $0xa0] sm:$0xff]
        %v606 = vld [vmem:[%s502 + $0xa8] sm:$0xff]
        %v607 = vld [vmem:[%s502 + $0xb0] sm:$0xff]
        %v608 = vld [vmem:[%s502 + $0xb8] sm:$0xff]
        %v609 = vld [vmem:[%s502 + $0xc0] sm:$0xff]
        %v610 = vld [vmem:[%s502 + $0xc8] sm:$0xff]
        %v611 = vld [vmem:[%s502 + $0xd0] sm:$0xff]
        %v612 = vld [vmem:[%s502 + $0xd8] sm:$0xff]
        %v613 = vld [vmem:[%s502 + $0xe0] sm:$0xff]
        %v614 = vld [vmem:[%s502 + $0xe8] sm:$0xff]
        %v615 = vld [vmem:[%s502 + $0xf0] sm:$0xff]
        %v616 = vld [vmem:[%s502 + $0xf8] sm:$0xff]
        %v617 = vld [vmem:[%s502 + $0x100] sm:$0xff]
        %v618 = vld [vmem:[%s502 + $0x108] sm:$0xff]
        %v619 = vld [vmem:[%s502 + $0x110] sm:$0xff]
        %v620 = vld [vmem:[%s502 + $0x118] sm:$0xff]
        %v621 = vld [vmem:[%s502 + $0x120] sm:$0xff]
        %v622 = vld [vmem:[%s502 + $0x128] sm:$0xff]
        %v623 = vld [vmem:[%s502 + $0x130] sm:$0xff]
        %v624 = vld [vmem:[%s502 + $0x138] sm:$0xff]
        %v625 = vld [vmem:[%s502 + $0x140] sm:$0xff]
        %v626 = vld [vmem:[%s502 + $0x148] sm:$0xff]
        %v627 = vld [vmem:[%s502 + $0x150] sm:$0xff]
        %v628 = vld [vmem:[%s502 + $0x158] sm:$0xff]
        %v629 = vld [vmem:[%s502 + $0x160] sm:$0xff]
        %v630 = vld [vmem:[%s502 + $0x168] sm:$0xff]
        %v631 = vld [vmem:[%s502 + $0x170] sm:$0xff]
        %v632 = vld [vmem:[%s502 + $0x178] sm:$0xff]
        %v633 = vld [vmem:[%s502 + $0x180] sm:$0xff]
        %v634 = vld [vmem:[%s502 + $0x188] sm:$0xff]
        %v635 = vld [vmem:[%s502 + $0x190] sm:$0xff]
        %v636 = vld [vmem:[%s502 + $0x198] sm:$0xff]
        %v637 = vld [vmem:[%s502 + $0x1a0] sm:$0xff]
        %v638 = vld [vmem:[%s502 + $0x1a8] sm:$0xff]
        %v639 = vld [vmem:[%s502 + $0x1b0] sm:$0xff]
        %v640 = vld [vmem:[%s502 + $0x1b8] sm:$0xff]
        %v641 = vld [vmem:[%s502 + $0x1c0] sm:$0xff]
        %v642 = vld [vmem:[%s502 + $0x1c8] sm:$0xff]
        %v643 = vld [vmem:[%s502 + $0x1d0] sm:$0xff]
        %v644 = vld [vmem:[%s502 + $0x1d8] sm:$0xff]
        %v645 = vld [vmem:[%s502 + $0x1e0] sm:$0xff]
        %v646 = vld [vmem:[%s502 + $0x1e8] sm:$0xff]
        %v647 = vld [vmem:[%s502 + $0x1f0] sm:$0xff]
        %v648 = vld [vmem:[%s502 + $0x1f8] sm:$0xff]
        %v649 = vld [vmem:[%s502 + $0x200] sm:$0xff]
        %v650 = vld [vmem:[%s502 + $0x208] sm:$0xff]
        %v651 = vld [vmem:[%s502 + $0x210] sm:$0xff]
        %v652 = vld [vmem:[%s502 + $0x218] sm:$0xff]
        %v653 = vld [vmem:[%s502 + $0x220] sm:$0xff]
        %v654 = vld [vmem:[%s502 + $0x228] sm:$0xff]
        %v655 = vld [vmem:[%s502 + $0x230] sm:$0xff]
        %v656 = vld [vmem:[%s502 + $0x238] sm:$0xff]
        %v657 = vld [vmem:[%s502 + $0x240] sm:$0xff]
        %v658 = vld [vmem:[%s502 + $0x248] sm:$0xff]
        %v659 = vld [vmem:[%s502 + $0x250] sm:$0xff]
        %v660 = vld [vmem:[%s502 + $0x258] sm:$0xff]
        %v661 = vld [vmem:[%s502 + $0x260] sm:$0xff]
        %v662 = vld [vmem:[%s502 + $0x268] sm:$0xff]
        %v663 = vld [vmem:[%s502 + $0x270] sm:$0xff]
        %v664 = vld [vmem:[%s502 + $0x278] sm:$0xff]
        %v665 = vld [vmem:[%s502 + $0x280] sm:$0xff]
        %v666 = vld [vmem:[%s502 + $0x288] sm:$0xff]
        %v667 = vld [vmem:[%s502 + $0x290] sm:$0xff]
        %v668 = vld [vmem:[%s502 + $0x298] sm:$0xff]
        %v669 = vld [vmem:[%s502 + $0x2a0] sm:$0xff]
        %v670 = vld [vmem:[%s502 + $0x2a8] sm:$0xff]
        %v671 = vld [vmem:[%s502 + $0x2b0] sm:$0xff]
        %v672 = vld [vmem:[%s502 + $0x2b8] sm:$0xff]
        %v673 = vld [vmem:[%s502 + $0x2c0] sm:$0xff]
        %v674 = vld [vmem:[%s502 + $0x2c8] sm:$0xff]
        %v675 = vld [vmem:[%s502 + $0x2d0] sm:$0xff]
        %v676 = vld [vmem:[%s502 + $0x2d8] sm:$0xff]
        %v677 = vld [vmem:[%s502 + $0x2e0] sm:$0xff]
        %v678 = vld [vmem:[%s502 + $0x2e8] sm:$0xff]
        %v679 = vld [vmem:[%s502 + $0x2f0] sm:$0xff]
        %v680 = vld [vmem:[%s502 + $0x2f8] sm:$0xff]
        %v681 = vld [vmem:[%s575] sm:$0xf]
        %v682 = vld [vmem:[%s575 + $0x4] sm:$0xf]
        %v683 = vld [vmem:[%s575 + $0x8] sm:$0xf]
        %v684 = vld [vmem:[%s575 + $0xc] sm:$0xf]
        %v685 = vld [vmem:[%s575 + $0x10] sm:$0xf]
        %v686 = vld [vmem:[%s575 + $0x14] sm:$0xf]
        %v687 = vld [vmem:[%s575 + $0x18] sm:$0xf]
        %v688 = vld [vmem:[%s575 + $0x1c] sm:$0xf]
        %v689 = vld [vmem:[%s575 + $0x20] sm:$0xf]
        %v690 = vld [vmem:[%s575 + $0x24] sm:$0xf]
        %v691 = vld [vmem:[%s575 + $0x28] sm:$0xf]
        %v692 = vld [vmem:[%s575 + $0x2c] sm:$0xf]
        %v693 = vld [vmem:[%s575 + $0x30] sm:$0xf]
        %v694 = vld [vmem:[%s575 + $0x34] sm:$0xf]
        %v695 = vld [vmem:[%s575 + $0x38] sm:$0xf]
        %v696 = vld [vmem:[%s575 + $0x3c] sm:$0xf]
        %v697 = vld [vmem:[%s580] sm:$0xff]
        %v698 = vld [vmem:[%s580 + $0x8] sm:$0xff]
        %v699 = vld [vmem:[%s580 + $0x10] sm:$0xff]
        %v700 = vld [vmem:[%s580 + $0x18] sm:$0xff]
        %v701 = vld [vmem:[%s580 + $0x20] sm:$0xff]
        %v702 = vld [vmem:[%s580 + $0x28] sm:$0xff]
        %v703 = vld [vmem:[%s580 + $0x30] sm:$0xff]
        %v704 = vld [vmem:[%s580 + $0x38] sm:$0xff]
        %v705 = vld [vmem:[%s580 + $0x40] sm:$0xff]
        %v706 = vld [vmem:[%s580 + $0x48] sm:$0xff]
        %v707 = vld [vmem:[%s580 + $0x50] sm:$0xff]
        %v708 = vld [vmem:[%s580 + $0x58] sm:$0xff]
        %v709 = vld [vmem:[%s580 + $0x60] sm:$0xff]
        %v710 = vld [vmem:[%s580 + $0x68] sm:$0xff]
        %v711 = vld [vmem:[%s580 + $0x70] sm:$0xff]
        %v712 = vld [vmem:[%s580 + $0x78] sm:$0xff]
        %v713 = vld [vmem:[%s583] sm:$0x1]
        %v714 = vld [vmem:[#allocation6] sm:$0xf]
        %v715 = vld [vmem:[#allocation6 + $0x4] sm:$0xf]
        %v716 = vld [vmem:[#allocation6 + $0x8] sm:$0xf]
        %v717 = vld [vmem:[#allocation6 + $0xc] sm:$0xf]
        %v718 = vld [vmem:[#allocation6 + $0x10] sm:$0xf]
        %v719 = vld [vmem:[#allocation6 + $0x14] sm:$0xf]
        %v720 = vld [vmem:[#allocation6 + $0x18] sm:$0xf]
        %v721 = vld [vmem:[#allocation6 + $0x1c] sm:$0xf]
        %v722 = vld [vmem:[#allocation6 + $0x20] sm:$0xf]
        %v723 = vld [vmem:[#allocation6 + $0x24] sm:$0xf]
        %v724 = vld [vmem:[#allocation6 + $0x28] sm:$0xf]
        %v725 = vld [vmem:[#allocation6 + $0x2c] sm:$0xf]
        %v726 = vld [vmem:[#allocation6 + $0x30] sm:$0xf]
        %v727 = vld [vmem:[#allocation6 + $0x34] sm:$0xf]
        %v728 = vld [vmem:[#allocation6 + $0x38] sm:$0xf]
        %v729 = vld [vmem:[#allocation6 + $0x3c] sm:$0xf]
        %v730 = vld [vmem:[#allocation6 + $0x40] sm:$0xf]
        %v731 = vld [vmem:[#allocation6 + $0x44] sm:$0xf]
        %v732 = vld [vmem:[#allocation6 + $0x48] sm:$0xf]
        %v733 = vld [vmem:[#allocation6 + $0x4c] sm:$0xf]
        %v734 = vld [vmem:[#allocation6 + $0x50] sm:$0xf]
        %v735 = vld [vmem:[#allocation6 + $0x54] sm:$0xf]
        %v736 = vld [vmem:[#allocation6 + $0x58] sm:$0xf]
        %v737 = vld [vmem:[#allocation6 + $0x5c] sm:$0xf]
        %v738 = vld [vmem:[#allocation6 + $0x60] sm:$0xf]
        %v739 = vld [vmem:[#allocation6 + $0x64] sm:$0xf]
        %v740 = vld [vmem:[#allocation6 + $0x68] sm:$0xf]
        %v741 = vld [vmem:[#allocation6 + $0x6c] sm:$0xf]
        %v742 = vld [vmem:[#allocation6 + $0x70] sm:$0xf]
        %v743 = vld [vmem:[#allocation6 + $0x74] sm:$0xf]
        %v744 = vld [vmem:[#allocation6 + $0x78] sm:$0xf]
        %v745 = vld [vmem:[#allocation6 + $0x7c] sm:$0xf]
        %v746 = vld [vmem:[#allocation6 + $0x80] sm:$0xf]
        %v747 = vld [vmem:[#allocation6 + $0x84] sm:$0xf]
        %v748 = vld [vmem:[#allocation6 + $0x88] sm:$0xf]
        %v749 = vld [vmem:[#allocation6 + $0x8c] sm:$0xf]
        %v750 = vld [vmem:[#allocation6 + $0x90] sm:$0xf]
        %v751 = vld [vmem:[#allocation6 + $0x94] sm:$0xf]
        %v752 = vld [vmem:[#allocation6 + $0x98] sm:$0xf]
        %v753 = vld [vmem:[#allocation6 + $0x9c] sm:$0xf]
        %v754 = vld [vmem:[#allocation6 + $0xa0] sm:$0xf]
        %v755 = vld [vmem:[#allocation6 + $0xa4] sm:$0xf]
        %v756 = vld [vmem:[#allocation6 + $0xa8] sm:$0xf]
        %v757 = vld [vmem:[#allocation6 + $0xac] sm:$0xf]
        %v758 = vld [vmem:[#allocation6 + $0xb0] sm:$0xf]
        %v759 = vld [vmem:[#allocation6 + $0xb4] sm:$0xf]
        %v760 = vld [vmem:[#allocation6 + $0xb8] sm:$0xf]
        %v761 = vld [vmem:[#allocation6 + $0xbc] sm:$0xf]
        %v762 = vld [vmem:[#allocation6 + $0xc0] sm:$0xf]
        %v763 = vld [vmem:[#allocation6 + $0xc4] sm:$0xf]
        %v764 = vld [vmem:[#allocation6 + $0xc8] sm:$0xf]
        %v765 = vld [vmem:[#allocation6 + $0xcc] sm:$0xf]
        %v766 = vld [vmem:[#allocation6 + $0xd0] sm:$0xf]
        %v767 = vld [vmem:[#allocation6 + $0xd4] sm:$0xf]
        %v768 = vld [vmem:[#allocation6 + $0xd8] sm:$0xf]
        %v769 = vld [vmem:[#allocation6 + $0xdc] sm:$0xf]
        %v770 = vld [vmem:[#allocation6 + $0xe0] sm:$0xf]
        %v771 = vld [vmem:[#allocation6 + $0xe4] sm:$0xf]
        %v772 = vld [vmem:[#allocation6 + $0xe8] sm:$0xf]
        %v773 = vld [vmem:[#allocation6 + $0xec] sm:$0xf]
        %v774 = vld [vmem:[#allocation6 + $0xf0] sm:$0xf]
        %v775 = vld [vmem:[#allocation6 + $0xf4] sm:$0xf]
        %v776 = vld [vmem:[#allocation6 + $0xf8] sm:$0xf]
        %v777 = vld [vmem:[#allocation6 + $0xfc] sm:$0xf]
        %v778 = vld [vmem:[#allocation6 + $0x100] sm:$0xf]
        %v779 = vld [vmem:[#allocation6 + $0x104] sm:$0xf]
        %v780 = vld [vmem:[#allocation6 + $0x108] sm:$0xf]
        %v781 = vld [vmem:[#allocation6 + $0x10c] sm:$0xf]
        %v782 = vld [vmem:[#allocation6 + $0x110] sm:$0xf]
        %v783 = vld [vmem:[#allocation6 + $0x114] sm:$0xf]
        %v784 = vld [vmem:[#allocation6 + $0x118] sm:$0xf]
        %v785 = vld [vmem:[#allocation6 + $0x11c] sm:$0xf]
        %v786 = vld [vmem:[#allocation6 + $0x120] sm:$0xf]
        %v787 = vld [vmem:[#allocation6 + $0x124] sm:$0xf]
        %v788 = vld [vmem:[#allocation6 + $0x128] sm:$0xf]
        %v789 = vld [vmem:[#allocation6 + $0x12c] sm:$0xf]
        %v790 = vld [vmem:[#allocation6 + $0x130] sm:$0xf]
        %v791 = vld [vmem:[#allocation6 + $0x134] sm:$0xf]
        %v792 = vld [vmem:[#allocation6 + $0x138] sm:$0xf]
        %v793 = vld [vmem:[#allocation6 + $0x13c] sm:$0xf]
        %v794 = vld [vmem:[#allocation6 + $0x140] sm:$0xf]
        %v795 = vld [vmem:[#allocation6 + $0x144] sm:$0xf]
        %v796 = vld [vmem:[#allocation6 + $0x148] sm:$0xf]
        %v797 = vld [vmem:[#allocation6 + $0x14c] sm:$0xf]
        %v798 = vld [vmem:[#allocation6 + $0x150] sm:$0xf]
        %v799 = vld [vmem:[#allocation6 + $0x154] sm:$0xf]
        %v800 = vld [vmem:[#allocation6 + $0x158] sm:$0xf]
        %v801 = vld [vmem:[#allocation6 + $0x15c] sm:$0xf]
        %v802 = vld [vmem:[#allocation6 + $0x160] sm:$0xf]
        %v803 = vld [vmem:[#allocation6 + $0x164] sm:$0xf]
        %v804 = vld [vmem:[#allocation6 + $0x168] sm:$0xf]
        %v805 = vld [vmem:[#allocation6 + $0x16c] sm:$0xf]
        %v806 = vld [vmem:[#allocation6 + $0x170] sm:$0xf]
        %v807 = vld [vmem:[#allocation6 + $0x174] sm:$0xf]
        %v808 = vld [vmem:[#allocation6 + $0x178] sm:$0xf]
        %v809 = vld [vmem:[#allocation6 + $0x17c] sm:$0xf]
        %v810 = vld [vmem:[#allocation6 + $0x180] sm:$0xf]
        %v811 = vld [vmem:[#allocation6 + $0x184] sm:$0xf]
        %v812 = vld [vmem:[#allocation6 + $0x188] sm:$0xf]
        %v813 = vld [vmem:[#allocation6 + $0x18c] sm:$0xf]
        %v814 = vld [vmem:[#allocation6 + $0x190] sm:$0xf]
        %v815 = vld [vmem:[#allocation6 + $0x194] sm:$0xf]
        %v816 = vld [vmem:[#allocation6 + $0x198] sm:$0xf]
        %v817 = vld [vmem:[#allocation6 + $0x19c] sm:$0xf]
        %v818 = vld [vmem:[#allocation6 + $0x1a0] sm:$0xf]
        %v819 = vld [vmem:[#allocation6 + $0x1a4] sm:$0xf]
        %v820 = vld [vmem:[#allocation6 + $0x1a8] sm:$0xf]
        %v821 = vld [vmem:[#allocation6 + $0x1ac] sm:$0xf]
        %v822 = vld [vmem:[#allocation6 + $0x1b0] sm:$0xf]
        %v823 = vld [vmem:[#allocation6 + $0x1b4] sm:$0xf]
        %v824 = vld [vmem:[#allocation6 + $0x1b8] sm:$0xf]
        %v825 = vld [vmem:[#allocation6 + $0x1bc] sm:$0xf]
        %v826 = vld [vmem:[#allocation6 + $0x1c0] sm:$0xf]
        %v827 = vld [vmem:[#allocation6 + $0x1c4] sm:$0xf]
        %v828 = vld [vmem:[#allocation6 + $0x1c8] sm:$0xf]
        %v829 = vld [vmem:[#allocation6 + $0x1cc] sm:$0xf]
        %v830 = vld [vmem:[#allocation6 + $0x1d0] sm:$0xf]
        %v831 = vld [vmem:[#allocation6 + $0x1d4] sm:$0xf]
        %v832 = vld [vmem:[#allocation6 + $0x1d8] sm:$0xf]
        %v833 = vld [vmem:[#allocation6 + $0x1dc] sm:$0xf]
        %v834 = vld [vmem:[#allocation6 + $0x1e0] sm:$0xf]
        %v835 = vld [vmem:[#allocation6 + $0x1e4] sm:$0xf]
        %v836 = vld [vmem:[#allocation6 + $0x1e8] sm:$0xf]
        %v837 = vld [vmem:[#allocation6 + $0x1ec] sm:$0xf]
        %v838 = vld [vmem:[#allocation6 + $0x1f0] sm:$0xf]
        %v839 = vld [vmem:[#allocation6 + $0x1f4] sm:$0xf]
        %v840 = vld [vmem:[#allocation6 + $0x1f8] sm:$0xf]
        %v841 = vld [vmem:[#allocation6 + $0x1fc] sm:$0xf]
        %v842 = vld [vmem:[#allocation6 + $0x200] sm:$0xf]
        %v843 = vld [vmem:[#allocation6 + $0x204] sm:$0xf]
        %v844 = vld [vmem:[#allocation6 + $0x208] sm:$0xf]
        %v845 = vld [vmem:[#allocation6 + $0x20c] sm:$0xf]
        %v846 = vld [vmem:[#allocation6 + $0x210] sm:$0xf]
        %v847 = vld [vmem:[#allocation6 + $0x214] sm:$0xf]
        %v848 = vld [vmem:[#allocation6 + $0x218] sm:$0xf]
        %v849 = vld [vmem:[#allocation6 + $0x21c] sm:$0xf]
        %v850 = vld [vmem:[#allocation6 + $0x220] sm:$0xf]
        %v851 = vld [vmem:[#allocation6 + $0x224] sm:$0xf]
        %v852 = vld [vmem:[#allocation6 + $0x228] sm:$0xf]
        %v853 = vld [vmem:[#allocation6 + $0x22c] sm:$0xf]
        %v854 = vld [vmem:[#allocation6 + $0x230] sm:$0xf]
        %v855 = vld [vmem:[#allocation6 + $0x234] sm:$0xf]
        %v856 = vld [vmem:[#allocation6 + $0x238] sm:$0xf]
        %v857 = vld [vmem:[#allocation6 + $0x23c] sm:$0xf]
        %v858 = vld [vmem:[#allocation6 + $0x240] sm:$0xf]
        %v859 = vld [vmem:[#allocation6 + $0x244] sm:$0xf]
        %v860 = vld [vmem:[#allocation6 + $0x248] sm:$0xf]
        %v861 = vld [vmem:[#allocation6 + $0x24c] sm:$0xf]
        %v862 = vld [vmem:[#allocation6 + $0x250] sm:$0xf]
        %v863 = vld [vmem:[#allocation6 + $0x254] sm:$0xf]
        %v864 = vld [vmem:[#allocation6 + $0x258] sm:$0xf]
        %v865 = vld [vmem:[#allocation6 + $0x25c] sm:$0xf]
        %v866 = vld [vmem:[#allocation6 + $0x260] sm:$0xf]
        %v867 = vld [vmem:[#allocation6 + $0x264] sm:$0xf]
        %v868 = vld [vmem:[#allocation6 + $0x268] sm:$0xf]
        %v869 = vld [vmem:[#allocation6 + $0x26c] sm:$0xf]
        %v870 = vld [vmem:[#allocation6 + $0x270] sm:$0xf]
        %v871 = vld [vmem:[#allocation6 + $0x274] sm:$0xf]
        %v872 = vld [vmem:[#allocation6 + $0x278] sm:$0xf]
        %v873 = vld [vmem:[#allocation6 + $0x27c] sm:$0xf]
        %v874 = vld [vmem:[#allocation6 + $0x280] sm:$0xf]
        %v875 = vld [vmem:[#allocation6 + $0x284] sm:$0xf]
        %v876 = vld [vmem:[#allocation6 + $0x288] sm:$0xf]
        %v877 = vld [vmem:[#allocation6 + $0x28c] sm:$0xf]
        %v878 = vld [vmem:[#allocation6 + $0x290] sm:$0xf]
        %v879 = vld [vmem:[#allocation6 + $0x294] sm:$0xf]
        %v880 = vld [vmem:[#allocation6 + $0x298] sm:$0xf]
        %v881 = vld [vmem:[#allocation6 + $0x29c] sm:$0xf]
        %v882 = vld [vmem:[#allocation6 + $0x2a0] sm:$0xf]
        %v883 = vld [vmem:[#allocation6 + $0x2a4] sm:$0xf]
        %v884 = vld [vmem:[#allocation6 + $0x2a8] sm:$0xf]
        %v885 = vld [vmem:[#allocation6 + $0x2ac] sm:$0xf]
        %v886 = vld [vmem:[#allocation6 + $0x2b0] sm:$0xf]
        %v887 = vld [vmem:[#allocation6 + $0x2b4] sm:$0xf]
        %v888 = vld [vmem:[#allocation6 + $0x2b8] sm:$0xf]
        %v889 = vld [vmem:[#allocation6 + $0x2bc] sm:$0xf]
        %v890 = vld [vmem:[#allocation6 + $0x2c0] sm:$0xf]
        %v891 = vld [vmem:[#allocation6 + $0x2c4] sm:$0xf]
        %v892 = vld [vmem:[#allocation6 + $0x2c8] sm:$0xf]
        %v893 = vld [vmem:[#allocation6 + $0x2cc] sm:$0xf]
        %v894 = vld [vmem:[#allocation6 + $0x2d0] sm:$0xf]
        %v895 = vld [vmem:[#allocation6 + $0x2d4] sm:$0xf]
        %v896 = vld [vmem:[#allocation6 + $0x2d8] sm:$0xf]
        %v897 = vld [vmem:[#allocation6 + $0x2dc] sm:$0xf]
        %v898 = vld [vmem:[#allocation6 + $0x2e0] sm:$0xf]
        %v899 = vld [vmem:[#allocation6 + $0x2e4] sm:$0xf]
        %v900 = vld [vmem:[#allocation6 + $0x2e8] sm:$0xf]
        %v901 = vld [vmem:[#allocation6 + $0x2ec] sm:$0xf]
        %v902 = vld [vmem:[#allocation6 + $0x2f0] sm:$0xf]
        %v903 = vld [vmem:[#allocation6 + $0x2f4] sm:$0xf]
        %v904 = vld [vmem:[#allocation6 + $0x2f8] sm:$0xf]
        %v905 = vld [vmem:[#allocation6 + $0x2fc] sm:$0xf]
        %v906 = vld [vmem:[%s5] sm:$0x1]
        %v908 = vlaneseq
        %v909 = vshrl.u32 %v908, 7
        %v910 = vsub.s32 0, %v909
        %v911 = vrot.slane %v906, %v910
        %v1009 = vunpack.c.l.b16 %v585
        %v1010 = vunpack.c.h.b16 %v585
        %v1011 = vunpack.c.l.b16 %v586
        %v1012 = vunpack.c.h.b16 %v586
        %v1013 = vunpack.c.l.b16 %v587
        %v1014 = vunpack.c.h.b16 %v587
        %v1015 = vunpack.c.l.b16 %v588
        %v1016 = vunpack.c.h.b16 %v588
        %v1017 = vunpack.c.l.b16 %v589
        %v1018 = vunpack.c.h.b16 %v589
        %v1019 = vunpack.c.l.b16 %v590
        %v1020 = vunpack.c.h.b16 %v590
        %v1021 = vunpack.c.l.b16 %v591
        %v1022 = vunpack.c.h.b16 %v591
        %v1023 = vunpack.c.l.b16 %v592
        %v1024 = vunpack.c.h.b16 %v592
        %v1025 = vunpack.c.l.b16 %v593
        %v1026 = vunpack.c.h.b16 %v593
        %v1027 = vunpack.c.l.b16 %v594
        %v1028 = vunpack.c.h.b16 %v594
        %v1029 = vunpack.c.l.b16 %v595
        %v1030 = vunpack.c.h.b16 %v595
        %v1031 = vunpack.c.l.b16 %v596
        %v1032 = vunpack.c.h.b16 %v596
        %v1033 = vunpack.c.l.b16 %v597
        %v1034 = vunpack.c.h.b16 %v597
        %v1035 = vunpack.c.l.b16 %v598
        %v1036 = vunpack.c.h.b16 %v598
        %v1037 = vunpack.c.l.b16 %v599
        %v1038 = vunpack.c.h.b16 %v599
        %v1039 = vunpack.c.l.b16 %v600
        %v1040 = vunpack.c.h.b16 %v600
        %v1041 = vunpack.c.l.b16 %v601
        %v1042 = vunpack.c.h.b16 %v601
        %v1043 = vunpack.c.l.b16 %v602
        %v1044 = vunpack.c.h.b16 %v602
        %v1045 = vunpack.c.l.b16 %v603
        %v1046 = vunpack.c.h.b16 %v603
        %v1047 = vunpack.c.l.b16 %v604
        %v1048 = vunpack.c.h.b16 %v604
        %v1049 = vunpack.c.l.b16 %v605
        %v1050 = vunpack.c.h.b16 %v605
        %v1051 = vunpack.c.l.b16 %v606
        %v1052 = vunpack.c.h.b16 %v606
        %v1053 = vunpack.c.l.b16 %v607
        %v1054 = vunpack.c.h.b16 %v607
        %v1055 = vunpack.c.l.b16 %v608
        %v1056 = vunpack.c.h.b16 %v608
        %v1057 = vunpack.c.l.b16 %v609
        %v1058 = vunpack.c.h.b16 %v609
        %v1059 = vunpack.c.l.b16 %v610
        %v1060 = vunpack.c.h.b16 %v610
        %v1061 = vunpack.c.l.b16 %v611
        %v1062 = vunpack.c.h.b16 %v611
        %v1063 = vunpack.c.l.b16 %v612
        %v1064 = vunpack.c.h.b16 %v612
        %v1065 = vunpack.c.l.b16 %v613
        %v1066 = vunpack.c.h.b16 %v613
        %v1067 = vunpack.c.l.b16 %v614
        %v1068 = vunpack.c.h.b16 %v614
        %v1069 = vunpack.c.l.b16 %v615
        %v1070 = vunpack.c.h.b16 %v615
        %v1071 = vunpack.c.l.b16 %v616
        %v1072 = vunpack.c.h.b16 %v616
        %v1073 = vunpack.c.l.b16 %v617
        %v1074 = vunpack.c.h.b16 %v617
        %v1075 = vunpack.c.l.b16 %v618
        %v1076 = vunpack.c.h.b16 %v618
        %v1077 = vunpack.c.l.b16 %v619
        %v1078 = vunpack.c.h.b16 %v619
        %v1079 = vunpack.c.l.b16 %v620
        %v1080 = vunpack.c.h.b16 %v620
        %v1081 = vunpack.c.l.b16 %v621
        %v1082 = vunpack.c.h.b16 %v621
        %v1083 = vunpack.c.l.b16 %v622
        %v1084 = vunpack.c.h.b16 %v622
        %v1085 = vunpack.c.l.b16 %v623
        %v1086 = vunpack.c.h.b16 %v623
        %v1087 = vunpack.c.l.b16 %v624
        %v1088 = vunpack.c.h.b16 %v624
        %v1089 = vunpack.c.l.b16 %v625
        %v1090 = vunpack.c.h.b16 %v625
        %v1091 = vunpack.c.l.b16 %v626
        %v1092 = vunpack.c.h.b16 %v626
        %v1093 = vunpack.c.l.b16 %v627
        %v1094 = vunpack.c.h.b16 %v627
        %v1095 = vunpack.c.l.b16 %v628
        %v1096 = vunpack.c.h.b16 %v628
        %v1097 = vunpack.c.l.b16 %v629
        %v1098 = vunpack.c.h.b16 %v629
        %v1099 = vunpack.c.l.b16 %v630
        %v1100 = vunpack.c.h.b16 %v630
        %v1101 = vunpack.c.l.b16 %v631
        %v1102 = vunpack.c.h.b16 %v631
        %v1103 = vunpack.c.l.b16 %v632
        %v1104 = vunpack.c.h.b16 %v632
        %v1105 = vunpack.c.l.b16 %v633
        %v1106 = vunpack.c.h.b16 %v633
        %v1107 = vunpack.c.l.b16 %v634
        %v1108 = vunpack.c.h.b16 %v634
        %v1109 = vunpack.c.l.b16 %v635
        %v1110 = vunpack.c.h.b16 %v635
        %v1111 = vunpack.c.l.b16 %v636
        %v1112 = vunpack.c.h.b16 %v636
        %v1113 = vunpack.c.l.b16 %v637
        %v1114 = vunpack.c.h.b16 %v637
        %v1115 = vunpack.c.l.b16 %v638
        %v1116 = vunpack.c.h.b16 %v638
        %v1117 = vunpack.c.l.b16 %v639
        %v1118 = vunpack.c.h.b16 %v639
        %v1119 = vunpack.c.l.b16 %v640
        %v1120 = vunpack.c.h.b16 %v640
        %v1121 = vunpack.c.l.b16 %v641
        %v1122 = vunpack.c.h.b16 %v641
        %v1123 = vunpack.c.l.b16 %v642
        %v1124 = vunpack.c.h.b16 %v642
        %v1125 = vunpack.c.l.b16 %v643
        %v1126 = vunpack.c.h.b16 %v643
        %v1127 = vunpack.c.l.b16 %v644
        %v1128 = vunpack.c.h.b16 %v644
        %v1129 = vunpack.c.l.b16 %v645
        %v1130 = vunpack.c.h.b16 %v645
        %v1131 = vunpack.c.l.b16 %v646
        %v1132 = vunpack.c.h.b16 %v646
        %v1133 = vunpack.c.l.b16 %v647
        %v1134 = vunpack.c.h.b16 %v647
        %v1135 = vunpack.c.l.b16 %v648
        %v1136 = vunpack.c.h.b16 %v648
        %v1137 = vunpack.c.l.b16 %v649
        %v1138 = vunpack.c.h.b16 %v649
        %v1139 = vunpack.c.l.b16 %v650
        %v1140 = vunpack.c.h.b16 %v650
        %v1141 = vunpack.c.l.b16 %v651
        %v1142 = vunpack.c.h.b16 %v651
        %v1143 = vunpack.c.l.b16 %v652
        %v1144 = vunpack.c.h.b16 %v652
        %v1145 = vunpack.c.l.b16 %v653
        %v1146 = vunpack.c.h.b16 %v653
        %v1147 = vunpack.c.l.b16 %v654
        %v1148 = vunpack.c.h.b16 %v654
        %v1149 = vunpack.c.l.b16 %v655
        %v1150 = vunpack.c.h.b16 %v655
        %v1151 = vunpack.c.l.b16 %v656
        %v1152 = vunpack.c.h.b16 %v656
        %v1153 = vunpack.c.l.b16 %v657
        %v1154 = vunpack.c.h.b16 %v657
        %v1155 = vunpack.c.l.b16 %v658
        %v1156 = vunpack.c.h.b16 %v658
        %v1157 = vunpack.c.l.b16 %v659
        %v1158 = vunpack.c.h.b16 %v659
        %v1159 = vunpack.c.l.b16 %v660
        %v1160 = vunpack.c.h.b16 %v660
        %v1161 = vunpack.c.l.b16 %v661
        %v1162 = vunpack.c.h.b16 %v661
        %v1163 = vunpack.c.l.b16 %v662
        %v1164 = vunpack.c.h.b16 %v662
        %v1165 = vunpack.c.l.b16 %v663
        %v1166 = vunpack.c.h.b16 %v663
        %v1167 = vunpack.c.l.b16 %v664
        %v1168 = vunpack.c.h.b16 %v664
        %v1169 = vunpack.c.l.b16 %v665
        %v1170 = vunpack.c.h.b16 %v665
        %v1171 = vunpack.c.l.b16 %v666
        %v1172 = vunpack.c.h.b16 %v666
        %v1173 = vunpack.c.l.b16 %v667
        %v1174 = vunpack.c.h.b16 %v667
        %v1175 = vunpack.c.l.b16 %v668
        %v1176 = vunpack.c.h.b16 %v668
        %v1177 = vunpack.c.l.b16 %v669
        %v1178 = vunpack.c.h.b16 %v669
        %v1179 = vunpack.c.l.b16 %v670
        %v1180 = vunpack.c.h.b16 %v670
        %v1181 = vunpack.c.l.b16 %v671
        %v1182 = vunpack.c.h.b16 %v671
        %v1183 = vunpack.c.l.b16 %v672
        %v1184 = vunpack.c.h.b16 %v672
        %v1185 = vunpack.c.l.b16 %v673
        %v1186 = vunpack.c.h.b16 %v673
        %v1187 = vunpack.c.l.b16 %v674
        %v1188 = vunpack.c.h.b16 %v674
        %v1189 = vunpack.c.l.b16 %v675
        %v1190 = vunpack.c.h.b16 %v675
        %v1191 = vunpack.c.l.b16 %v676
        %v1192 = vunpack.c.h.b16 %v676
        %v1193 = vunpack.c.l.b16 %v677
        %v1194 = vunpack.c.h.b16 %v677
        %v1195 = vunpack.c.l.b16 %v678
        %v1196 = vunpack.c.h.b16 %v678
        %v1197 = vunpack.c.l.b16 %v679
        %v1198 = vunpack.c.h.b16 %v679
        %v1199 = vunpack.c.l.b16 %v680
        %v1200 = vunpack.c.h.b16 %v680
        %v1201 = vpack.c.b16 %v1021, %v1009
        %v1202 = vpack.c.b16 %v1022, %v1010
        %v1203 = vpack.c.b16 %v1023, %v1011
        %v1204 = vpack.c.b16 %v1024, %v1012
        %v1205 = vpack.c.b16 %v1025, %v1013
        %v1206 = vpack.c.b16 %v1026, %v1014
        %v1207 = vpack.c.b16 %v1027, %v1015
        %v1208 = vpack.c.b16 %v1028, %v1016
        %v1209 = vpack.c.b16 %v1029, %v1017
        %v1210 = vpack.c.b16 %v1030, %v1018
        %v1211 = vpack.c.b16 %v1031, %v1019
        %v1212 = vpack.c.b16 %v1032, %v1020
        %v1213 = vpack.c.b16 %v1045, %v1033
        %v1214 = vpack.c.b16 %v1046, %v1034
        %v1215 = vpack.c.b16 %v1047, %v1035
        %v1216 = vpack.c.b16 %v1048, %v1036
        %v1217 = vpack.c.b16 %v1049, %v1037
        %v1218 = vpack.c.b16 %v1050, %v1038
        %v1219 = vpack.c.b16 %v1051, %v1039
        %v1220 = vpack.c.b16 %v1052, %v1040
        %v1221 = vpack.c.b16 %v1053, %v1041
        %v1222 = vpack.c.b16 %v1054, %v1042
        %v1223 = vpack.c.b16 %v1055, %v1043
        %v1224 = vpack.c.b16 %v1056, %v1044
        %v1225 = vpack.c.b16 %v1069, %v1057
        %v1226 = vpack.c.b16 %v1070, %v1058
        %v1227 = vpack.c.b16 %v1071, %v1059
        %v1228 = vpack.c.b16 %v1072, %v1060
        %v1229 = vpack.c.b16 %v1073, %v1061
        %v1230 = vpack.c.b16 %v1074, %v1062
        %v1231 = vpack.c.b16 %v1075, %v1063
        %v1232 = vpack.c.b16 %v1076, %v1064
        %v1233 = vpack.c.b16 %v1077, %v1065
        %v1234 = vpack.c.b16 %v1078, %v1066
        %v1235 = vpack.c.b16 %v1079, %v1067
        %v1236 = vpack.c.b16 %v1080, %v1068
        %v1237 = vpack.c.b16 %v1093, %v1081
        %v1238 = vpack.c.b16 %v1094, %v1082
        %v1239 = vpack.c.b16 %v1095, %v1083
        %v1240 = vpack.c.b16 %v1096, %v1084
        %v1241 = vpack.c.b16 %v1097, %v1085
        %v1242 = vpack.c.b16 %v1098, %v1086
        %v1243 = vpack.c.b16 %v1099, %v1087
        %v1244 = vpack.c.b16 %v1100, %v1088
        %v1245 = vpack.c.b16 %v1101, %v1089
        %v1246 = vpack.c.b16 %v1102, %v1090
        %v1247 = vpack.c.b16 %v1103, %v1091
        %v1248 = vpack.c.b16 %v1104, %v1092
        %v1249 = vpack.c.b16 %v1117, %v1105
        %v1250 = vpack.c.b16 %v1118, %v1106
        %v1251 = vpack.c.b16 %v1119, %v1107
        %v1252 = vpack.c.b16 %v1120, %v1108
        %v1253 = vpack.c.b16 %v1121, %v1109
        %v1254 = vpack.c.b16 %v1122, %v1110
        %v1255 = vpack.c.b16 %v1123, %v1111
        %v1256 = vpack.c.b16 %v1124, %v1112
        %v1257 = vpack.c.b16 %v1125, %v1113
        %v1258 = vpack.c.b16 %v1126, %v1114
        %v1259 = vpack.c.b16 %v1127, %v1115
        %v1260 = vpack.c.b16 %v1128, %v1116
        %v1261 = vpack.c.b16 %v1141, %v1129
        %v1262 = vpack.c.b16 %v1142, %v1130
        %v1263 = vpack.c.b16 %v1143, %v1131
        %v1264 = vpack.c.b16 %v1144, %v1132
        %v1265 = vpack.c.b16 %v1145, %v1133
        %v1266 = vpack.c.b16 %v1146, %v1134
        %v1267 = vpack.c.b16 %v1147, %v1135
        %v1268 = vpack.c.b16 %v1148, %v1136
        %v1269 = vpack.c.b16 %v1149, %v1137
        %v1270 = vpack.c.b16 %v1150, %v1138
        %v1271 = vpack.c.b16 %v1151, %v1139
        %v1272 = vpack.c.b16 %v1152, %v1140
        %v1273 = vpack.c.b16 %v1165, %v1153
        %v1274 = vpack.c.b16 %v1166, %v1154
        %v1275 = vpack.c.b16 %v1167, %v1155
        %v1276 = vpack.c.b16 %v1168, %v1156
        %v1277 = vpack.c.b16 %v1169, %v1157
        %v1278 = vpack.c.b16 %v1170, %v1158
        %v1279 = vpack.c.b16 %v1171, %v1159
        %v1280 = vpack.c.b16 %v1172, %v1160
        %v1281 = vpack.c.b16 %v1173, %v1161
        %v1282 = vpack.c.b16 %v1174, %v1162
        %v1283 = vpack.c.b16 %v1175, %v1163
        %v1284 = vpack.c.b16 %v1176, %v1164
        %v1285 = vpack.c.b16 %v1189, %v1177
        %v1286 = vpack.c.b16 %v1190, %v1178
        %v1287 = vpack.c.b16 %v1191, %v1179
        %v1288 = vpack.c.b16 %v1192, %v1180
        %v1289 = vpack.c.b16 %v1193, %v1181
        %v1290 = vpack.c.b16 %v1194, %v1182
        %v1291 = vpack.c.b16 %v1195, %v1183
        %v1292 = vpack.c.b16 %v1196, %v1184
        %v1293 = vpack.c.b16 %v1197, %v1185
        %v1294 = vpack.c.b16 %v1198, %v1186
        %v1295 = vpack.c.b16 %v1199, %v1187
        %v1296 = vpack.c.b16 %v1200, %v1188
        %v1585 = vunpack.c.l.b16 %v714
        %v1586 = vunpack.c.l.b16 %v715
        %v1587 = vunpack.c.l.b16 %v716
        %v1588 = vunpack.c.l.b16 %v717
        %v1589 = vunpack.c.l.b16 %v718
        %v1590 = vunpack.c.l.b16 %v719
        %v1591 = vunpack.c.l.b16 %v720
        %v1592 = vunpack.c.l.b16 %v721
        %v1593 = vunpack.c.l.b16 %v722
        %v1594 = vunpack.c.l.b16 %v723
        %v1595 = vunpack.c.l.b16 %v724
        %v1596 = vunpack.c.l.b16 %v725
        %v1597 = vunpack.c.l.b16 %v726
        %v1598 = vunpack.c.l.b16 %v727
        %v1599 = vunpack.c.l.b16 %v728
        %v1600 = vunpack.c.l.b16 %v729
        %v1601 = vunpack.c.l.b16 %v730
        %v1602 = vunpack.c.l.b16 %v731
        %v1603 = vunpack.c.l.b16 %v732
        %v1604 = vunpack.c.l.b16 %v733
        %v1605 = vunpack.c.l.b16 %v734
        %v1606 = vunpack.c.l.b16 %v735
        %v1607 = vunpack.c.l.b16 %v736
        %v1608 = vunpack.c.l.b16 %v737
        %v1609 = vunpack.c.l.b16 %v738
        %v1610 = vunpack.c.l.b16 %v739
        %v1611 = vunpack.c.l.b16 %v740
        %v1612 = vunpack.c.l.b16 %v741
        %v1613 = vunpack.c.l.b16 %v742
        %v1614 = vunpack.c.l.b16 %v743
        %v1615 = vunpack.c.l.b16 %v744
        %v1616 = vunpack.c.l.b16 %v745
        %v1617 = vunpack.c.l.b16 %v746
        %v1618 = vunpack.c.l.b16 %v747
        %v1619 = vunpack.c.l.b16 %v748
        %v1620 = vunpack.c.l.b16 %v749
        %v1621 = vunpack.c.l.b16 %v750
        %v1622 = vunpack.c.l.b16 %v751
        %v1623 = vunpack.c.l.b16 %v752
        %v1624 = vunpack.c.l.b16 %v753
        %v1625 = vunpack.c.l.b16 %v754
        %v1626 = vunpack.c.l.b16 %v755
        %v1627 = vunpack.c.l.b16 %v756
        %v1628 = vunpack.c.l.b16 %v757
        %v1629 = vunpack.c.l.b16 %v758
        %v1630 = vunpack.c.l.b16 %v759
        %v1631 = vunpack.c.l.b16 %v760
        %v1632 = vunpack.c.l.b16 %v761
        %v1633 = vunpack.c.l.b16 %v762
        %v1634 = vunpack.c.l.b16 %v763
        %v1635 = vunpack.c.l.b16 %v764
        %v1636 = vunpack.c.l.b16 %v765
        %v1637 = vunpack.c.l.b16 %v766
        %v1638 = vunpack.c.l.b16 %v767
        %v1639 = vunpack.c.l.b16 %v768
        %v1640 = vunpack.c.l.b16 %v769
        %v1641 = vunpack.c.l.b16 %v770
        %v1642 = vunpack.c.l.b16 %v771
        %v1643 = vunpack.c.l.b16 %v772
        %v1644 = vunpack.c.l.b16 %v773
        %v1645 = vunpack.c.l.b16 %v774
        %v1646 = vunpack.c.l.b16 %v775
        %v1647 = vunpack.c.l.b16 %v776
        %v1648 = vunpack.c.l.b16 %v777
        %v1649 = vunpack.c.l.b16 %v778
        %v1650 = vunpack.c.l.b16 %v779
        %v1651 = vunpack.c.l.b16 %v780
        %v1652 = vunpack.c.l.b16 %v781
        %v1653 = vunpack.c.l.b16 %v782
        %v1654 = vunpack.c.l.b16 %v783
        %v1655 = vunpack.c.l.b16 %v784
        %v1656 = vunpack.c.l.b16 %v785
        %v1657 = vunpack.c.l.b16 %v786
        %v1658 = vunpack.c.l.b16 %v787
        %v1659 = vunpack.c.l.b16 %v788
        %v1660 = vunpack.c.l.b16 %v789
        %v1661 = vunpack.c.l.b16 %v790
        %v1662 = vunpack.c.l.b16 %v791
        %v1663 = vunpack.c.l.b16 %v792
        %v1664 = vunpack.c.l.b16 %v793
        %v1665 = vunpack.c.l.b16 %v794
        %v1666 = vunpack.c.l.b16 %v795
        %v1667 = vunpack.c.l.b16 %v796
        %v1668 = vunpack.c.l.b16 %v797
        %v1669 = vunpack.c.l.b16 %v798
        %v1670 = vunpack.c.l.b16 %v799
        %v1671 = vunpack.c.l.b16 %v800
        %v1672 = vunpack.c.l.b16 %v801
        %v1673 = vunpack.c.l.b16 %v802
        %v1674 = vunpack.c.l.b16 %v803
        %v1675 = vunpack.c.l.b16 %v804
        %v1676 = vunpack.c.l.b16 %v805
        %v1677 = vunpack.c.l.b16 %v806
        %v1678 = vunpack.c.l.b16 %v807
        %v1679 = vunpack.c.l.b16 %v808
        %v1680 = vunpack.c.l.b16 %v809
        %v1681 = vunpack.c.l.b16 %v810
        %v1682 = vunpack.c.l.b16 %v811
        %v1683 = vunpack.c.l.b16 %v812
        %v1684 = vunpack.c.l.b16 %v813
        %v1685 = vunpack.c.l.b16 %v814
        %v1686 = vunpack.c.l.b16 %v815
        %v1687 = vunpack.c.l.b16 %v816
        %v1688 = vunpack.c.l.b16 %v817
        %v1689 = vunpack.c.l.b16 %v818
        %v1690 = vunpack.c.l.b16 %v819
        %v1691 = vunpack.c.l.b16 %v820
        %v1692 = vunpack.c.l.b16 %v821
        %v1693 = vunpack.c.l.b16 %v822
        %v1694 = vunpack.c.l.b16 %v823
        %v1695 = vunpack.c.l.b16 %v824
        %v1696 = vunpack.c.l.b16 %v825
        %v1697 = vunpack.c.l.b16 %v826
        %v1698 = vunpack.c.l.b16 %v827
        %v1699 = vunpack.c.l.b16 %v828
        %v1700 = vunpack.c.l.b16 %v829
        %v1701 = vunpack.c.l.b16 %v830
        %v1702 = vunpack.c.l.b16 %v831
        %v1703 = vunpack.c.l.b16 %v832
        %v1704 = vunpack.c.l.b16 %v833
        %v1705 = vunpack.c.l.b16 %v834
        %v1706 = vunpack.c.l.b16 %v835
        %v1707 = vunpack.c.l.b16 %v836
        %v1708 = vunpack.c.l.b16 %v837
        %v1709 = vunpack.c.l.b16 %v838
        %v1710 = vunpack.c.l.b16 %v839
        %v1711 = vunpack.c.l.b16 %v840
        %v1712 = vunpack.c.l.b16 %v841
        %v1713 = vunpack.c.l.b16 %v842
        %v1714 = vunpack.c.l.b16 %v843
        %v1715 = vunpack.c.l.b16 %v844
        %v1716 = vunpack.c.l.b16 %v845
        %v1717 = vunpack.c.l.b16 %v846
        %v1718 = vunpack.c.l.b16 %v847
        %v1719 = vunpack.c.l.b16 %v848
        %v1720 = vunpack.c.l.b16 %v849
        %v1721 = vunpack.c.l.b16 %v850
        %v1722 = vunpack.c.l.b16 %v851
        %v1723 = vunpack.c.l.b16 %v852
        %v1724 = vunpack.c.l.b16 %v853
        %v1725 = vunpack.c.l.b16 %v854
        %v1726 = vunpack.c.l.b16 %v855
        %v1727 = vunpack.c.l.b16 %v856
        %v1728 = vunpack.c.l.b16 %v857
        %v1729 = vunpack.c.l.b16 %v858
        %v1730 = vunpack.c.l.b16 %v859
        %v1731 = vunpack.c.l.b16 %v860
        %v1732 = vunpack.c.l.b16 %v861
        %v1733 = vunpack.c.l.b16 %v862
        %v1734 = vunpack.c.l.b16 %v863
        %v1735 = vunpack.c.l.b16 %v864
        %v1736 = vunpack.c.l.b16 %v865
        %v1737 = vunpack.c.l.b16 %v866
        %v1738 = vunpack.c.l.b16 %v867
        %v1739 = vunpack.c.l.b16 %v868
        %v1740 = vunpack.c.l.b16 %v869
        %v1741 = vunpack.c.l.b16 %v870
        %v1742 = vunpack.c.l.b16 %v871
        %v1743 = vunpack.c.l.b16 %v872
        %v1744 = vunpack.c.l.b16 %v873
        %v1745 = vunpack.c.l.b16 %v874
        %v1746 = vunpack.c.l.b16 %v875
        %v1747 = vunpack.c.l.b16 %v876
        %v1748 = vunpack.c.l.b16 %v877
        %v1749 = vunpack.c.l.b16 %v878
        %v1750 = vunpack.c.l.b16 %v879
        %v1751 = vunpack.c.l.b16 %v880
        %v1752 = vunpack.c.l.b16 %v881
        %v1753 = vunpack.c.l.b16 %v882
        %v1754 = vunpack.c.l.b16 %v883
        %v1755 = vunpack.c.l.b16 %v884
        %v1756 = vunpack.c.l.b16 %v885
        %v1757 = vunpack.c.l.b16 %v886
        %v1758 = vunpack.c.l.b16 %v887
        %v1759 = vunpack.c.l.b16 %v888
        %v1760 = vunpack.c.l.b16 %v889
        %v1761 = vunpack.c.l.b16 %v890
        %v1762 = vunpack.c.l.b16 %v891
        %v1763 = vunpack.c.l.b16 %v892
        %v1764 = vunpack.c.l.b16 %v893
        %v1765 = vunpack.c.l.b16 %v894
        %v1766 = vunpack.c.l.b16 %v895
        %v1767 = vunpack.c.l.b16 %v896
        %v1768 = vunpack.c.l.b16 %v897
        %v1769 = vunpack.c.l.b16 %v898
        %v1770 = vunpack.c.l.b16 %v899
        %v1771 = vunpack.c.l.b16 %v900
        %v1772 = vunpack.c.l.b16 %v901
        %v1773 = vunpack.c.l.b16 %v902
        %v1774 = vunpack.c.l.b16 %v903
        %v1775 = vunpack.c.l.b16 %v904
        %v1776 = vunpack.c.l.b16 %v905
        %v1777 = vpack.c.b16 %v1586, %v1585
        %v1778 = vpack.c.b16 %v1588, %v1587
        %v1779 = vpack.c.b16 %v1590, %v1589
        %v1780 = vpack.c.b16 %v1592, %v1591
        %v1781 = vpack.c.b16 %v1594, %v1593
        %v1782 = vpack.c.b16 %v1596, %v1595
        %v1783 = vpack.c.b16 %v1598, %v1597
        %v1784 = vpack.c.b16 %v1600, %v1599
        %v1785 = vpack.c.b16 %v1602, %v1601
        %v1786 = vpack.c.b16 %v1604, %v1603
        %v1787 = vpack.c.b16 %v1606, %v1605
        %v1788 = vpack.c.b16 %v1608, %v1607
        %v1789 = vpack.c.b16 %v1610, %v1609
        %v1790 = vpack.c.b16 %v1612, %v1611
        %v1791 = vpack.c.b16 %v1614, %v1613
        %v1792 = vpack.c.b16 %v1616, %v1615
        %v1793 = vpack.c.b16 %v1618, %v1617
        %v1794 = vpack.c.b16 %v1620, %v1619
        %v1795 = vpack.c.b16 %v1622, %v1621
        %v1796 = vpack.c.b16 %v1624, %v1623
        %v1797 = vpack.c.b16 %v1626, %v1625
        %v1798 = vpack.c.b16 %v1628, %v1627
        %v1799 = vpack.c.b16 %v1630, %v1629
        %v1800 = vpack.c.b16 %v1632, %v1631
        %v1801 = vpack.c.b16 %v1634, %v1633
        %v1802 = vpack.c.b16 %v1636, %v1635
        %v1803 = vpack.c.b16 %v1638, %v1637
        %v1804 = vpack.c.b16 %v1640, %v1639
        %v1805 = vpack.c.b16 %v1642, %v1641
        %v1806 = vpack.c.b16 %v1644, %v1643
        %v1807 = vpack.c.b16 %v1646, %v1645
        %v1808 = vpack.c.b16 %v1648, %v1647
        %v1809 = vpack.c.b16 %v1650, %v1649
        %v1810 = vpack.c.b16 %v1652, %v1651
        %v1811 = vpack.c.b16 %v1654, %v1653
        %v1812 = vpack.c.b16 %v1656, %v1655
        %v1813 = vpack.c.b16 %v1658, %v1657
        %v1814 = vpack.c.b16 %v1660, %v1659
        %v1815 = vpack.c.b16 %v1662, %v1661
        %v1816 = vpack.c.b16 %v1664, %v1663
        %v1817 = vpack.c.b16 %v1666, %v1665
        %v1818 = vpack.c.b16 %v1668, %v1667
        %v1819 = vpack.c.b16 %v1670, %v1669
        %v1820 = vpack.c.b16 %v1672, %v1671
        %v1821 = vpack.c.b16 %v1674, %v1673
        %v1822 = vpack.c.b16 %v1676, %v1675
        %v1823 = vpack.c.b16 %v1678, %v1677
        %v1824 = vpack.c.b16 %v1680, %v1679
        %v1825 = vpack.c.b16 %v1682, %v1681
        %v1826 = vpack.c.b16 %v1684, %v1683
        %v1827 = vpack.c.b16 %v1686, %v1685
        %v1828 = vpack.c.b16 %v1688, %v1687
        %v1829 = vpack.c.b16 %v1690, %v1689
        %v1830 = vpack.c.b16 %v1692, %v1691
        %v1831 = vpack.c.b16 %v1694, %v1693
        %v1832 = vpack.c.b16 %v1696, %v1695
        %v1833 = vpack.c.b16 %v1698, %v1697
        %v1834 = vpack.c.b16 %v1700, %v1699
        %v1835 = vpack.c.b16 %v1702, %v1701
        %v1836 = vpack.c.b16 %v1704, %v1703
        %v1837 = vpack.c.b16 %v1706, %v1705
        %v1838 = vpack.c.b16 %v1708, %v1707
        %v1839 = vpack.c.b16 %v1710, %v1709
        %v1840 = vpack.c.b16 %v1712, %v1711
        %v1841 = vpack.c.b16 %v1714, %v1713
        %v1842 = vpack.c.b16 %v1716, %v1715
        %v1843 = vpack.c.b16 %v1718, %v1717
        %v1844 = vpack.c.b16 %v1720, %v1719
        %v1845 = vpack.c.b16 %v1722, %v1721
        %v1846 = vpack.c.b16 %v1724, %v1723
        %v1847 = vpack.c.b16 %v1726, %v1725
        %v1848 = vpack.c.b16 %v1728, %v1727
        %v1849 = vpack.c.b16 %v1730, %v1729
        %v1850 = vpack.c.b16 %v1732, %v1731
        %v1851 = vpack.c.b16 %v1734, %v1733
        %v1852 = vpack.c.b16 %v1736, %v1735
        %v1853 = vpack.c.b16 %v1738, %v1737
        %v1854 = vpack.c.b16 %v1740, %v1739
        %v1855 = vpack.c.b16 %v1742, %v1741
        %v1856 = vpack.c.b16 %v1744, %v1743
        %v1857 = vpack.c.b16 %v1746, %v1745
        %v1858 = vpack.c.b16 %v1748, %v1747
        %v1859 = vpack.c.b16 %v1750, %v1749
        %v1860 = vpack.c.b16 %v1752, %v1751
        %v1861 = vpack.c.b16 %v1754, %v1753
        %v1862 = vpack.c.b16 %v1756, %v1755
        %v1863 = vpack.c.b16 %v1758, %v1757
        %v1864 = vpack.c.b16 %v1760, %v1759
        %v1865 = vpack.c.b16 %v1762, %v1761
        %v1866 = vpack.c.b16 %v1764, %v1763
        %v1867 = vpack.c.b16 %v1766, %v1765
        %v1868 = vpack.c.b16 %v1768, %v1767
        %v1869 = vpack.c.b16 %v1770, %v1769
        %v1870 = vpack.c.b16 %v1772, %v1771
        %v1871 = vpack.c.b16 %v1774, %v1773
        %v1872 = vpack.c.b16 %v1776, %v1775
        %1969 = vmatprep.subr.bf16.mxu0 0
        %1970 = vmatpush1.bf16.msra.mxu0 %v1784
        %1971 = vmatprep.subr.bf16.mxu0 0
        %1972 = vmatpush1.bf16.msra.mxu0 %v1783
        %1973 = vmatprep.subr.bf16.mxu0 0
        %1974 = vmatpush1.bf16.msra.mxu0 %v1782
        %1975 = vmatprep.subr.bf16.mxu0 0
        %1976 = vmatpush1.bf16.msra.mxu0 %v1781
        %1977 = vmatprep.subr.bf16.mxu0 0
        %1978 = vmatpush1.bf16.msra.mxu0 %v1780
        %1979 = vmatprep.subr.bf16.mxu0 0
        %1980 = vmatpush1.bf16.msra.mxu0 %v1779
        %1981 = vmatprep.subr.bf16.mxu0 0
        %1982 = vmatpush1.bf16.msra.mxu0 %v1778
        %1983 = vmatprep.subr.bf16.mxu0 0
        %1984 = vmatpush1.bf16.msra.mxu0 %v1777
        %1985 = vmatprep.subr.bf16.mxu0 0
        %1986 = vmatpush2.bf16.msra.mxu0 %v1792
        %1987 = vmatprep.subr.bf16.mxu0 0
        %1988 = vmatpush2.bf16.msra.mxu0 %v1791
        %1989 = vmatprep.subr.bf16.mxu0 0
        %1990 = vmatpush2.bf16.msra.mxu0 %v1790
        %1991 = vmatprep.subr.bf16.mxu0 0
        %1992 = vmatpush2.bf16.msra.mxu0 %v1789
        %1993 = vmatprep.subr.bf16.mxu0 0
        %1994 = vmatpush2.bf16.msra.mxu0 %v1788
        %1995 = vmatprep.subr.bf16.mxu0 0
        %1996 = vmatpush2.bf16.msra.mxu0 %v1787
        %1997 = vmatprep.subr.bf16.mxu0 0
        %1998 = vmatpush2.bf16.msra.mxu0 %v1786
        %1999 = vmatprep.subr.bf16.mxu0 0
        %2000 = vmatpush2.bf16.msra.mxu0 %v1785
        %2001 = vmatprep.mubr.bf16.mxu0 %v1202
        %2002 = vmatmul.mubr.bf16.gmra.mxu0 %v1201
        %v2003 = vpop.f32.mrf.mxu0
        %v2004 = vadd.f32 %v911, %v2003
        %v2005 = vpop.f32.mrf.mxu0
        %v2006 = vpop.f32.mrf.mxu0
        %v2007 = vadd.f32 %v911, %v2006
        %v2008 = vpop.f32.mrf.mxu0
        %2009 = vmatprep.mubr.bf16.mxu0 %v1214
        %2010 = vmatmul.mubr.bf16.gmra.mxu0 %v1213
        %v2011 = vpop.f32.mrf.mxu0
        %v2012 = vadd.f32 %v911, %v2011
        %v2013 = vpop.f32.mrf.mxu0
        %v2014 = vpop.f32.mrf.mxu0
        %v2015 = vadd.f32 %v911, %v2014
        %v2016 = vpop.f32.mrf.mxu0
        %2017 = vmatprep.mubr.bf16.mxu0 %v1226
        %2018 = vmatmul.mubr.bf16.gmra.mxu0 %v1225
        %v2019 = vpop.f32.mrf.mxu0
        %v2020 = vadd.f32 %v911, %v2019
        %v2021 = vpop.f32.mrf.mxu0
        %v2022 = vpop.f32.mrf.mxu0
        %v2023 = vadd.f32 %v911, %v2022
        %v2024 = vpop.f32.mrf.mxu0
        %2025 = vmatprep.mubr.bf16.mxu0 %v1238
        %2026 = vmatmul.mubr.bf16.gmra.mxu0 %v1237
        %v2027 = vpop.f32.mrf.mxu0
        %v2028 = vadd.f32 %v911, %v2027
        %v2029 = vpop.f32.mrf.mxu0
        %v2030 = vpop.f32.mrf.mxu0
        %v2031 = vadd.f32 %v911, %v2030
        %v2032 = vpop.f32.mrf.mxu0
        %2033 = vmatprep.mubr.bf16.mxu0 %v1250
        %2034 = vmatmul.mubr.bf16.gmra.mxu0 %v1249
        %v2035 = vpop.f32.mrf.mxu0
        %v2036 = vadd.f32 %v911, %v2035
        %v2037 = vpop.f32.mrf.mxu0
        %v2038 = vpop.f32.mrf.mxu0
        %v2039 = vadd.f32 %v911, %v2038
        %v2040 = vpop.f32.mrf.mxu0
        %2041 = vmatprep.mubr.bf16.mxu0 %v1262
        %2042 = vmatmul.mubr.bf16.gmra.mxu0 %v1261
        %v2043 = vpop.f32.mrf.mxu0
        %v2044 = vadd.f32 %v911, %v2043
        %v2045 = vpop.f32.mrf.mxu0
        %v2046 = vpop.f32.mrf.mxu0
        %v2047 = vadd.f32 %v911, %v2046
        %v2048 = vpop.f32.mrf.mxu0
        %2049 = vmatprep.mubr.bf16.mxu0 %v1274
        %2050 = vmatmul.mubr.bf16.gmra.mxu0 %v1273
        %v2051 = vpop.f32.mrf.mxu0
        %v2052 = vadd.f32 %v911, %v2051
        %v2053 = vpop.f32.mrf.mxu0
        %v2054 = vpop.f32.mrf.mxu0
        %v2055 = vadd.f32 %v911, %v2054
        %v2056 = vpop.f32.mrf.mxu0
        %2057 = vmatprep.mubr.bf16.mxu0 %v1286
        %2058 = vmatmul.mubr.bf16.gmra.mxu0 %v1285
        %v2059 = vpop.f32.mrf.mxu0
        %v2060 = vadd.f32 %v911, %v2059
        %v2061 = vpop.f32.mrf.mxu0
        %v2062 = vpop.f32.mrf.mxu0
        %v2063 = vadd.f32 %v911, %v2062
        %v2064 = vpop.f32.mrf.mxu0
        %2065 = vdwg.mxu0
        %2066 = vmatprep.subr.bf16.mxu0 0
        %2067 = vmatpush1.bf16.msra.mxu0 %v1800
        %2068 = vmatprep.subr.bf16.mxu0 0
        %2069 = vmatpush1.bf16.msra.mxu0 %v1799
        %2070 = vmatprep.subr.bf16.mxu0 0
        %2071 = vmatpush1.bf16.msra.mxu0 %v1798
        %2072 = vmatprep.subr.bf16.mxu0 0
        %2073 = vmatpush1.bf16.msra.mxu0 %v1797
        %2074 = vmatprep.subr.bf16.mxu0 0
        %2075 = vmatpush1.bf16.msra.mxu0 %v1796
        %2076 = vmatprep.subr.bf16.mxu0 0
        %2077 = vmatpush1.bf16.msra.mxu0 %v1795
        %2078 = vmatprep.subr.bf16.mxu0 0
        %2079 = vmatpush1.bf16.msra.mxu0 %v1794
        %2080 = vmatprep.subr.bf16.mxu0 0
        %2081 = vmatpush1.bf16.msra.mxu0 %v1793
        %2082 = vmatprep.subr.bf16.mxu0 0
        %2083 = vmatpush2.bf16.msra.mxu0 %v1808
        %2084 = vmatprep.subr.bf16.mxu0 0
        %2085 = vmatpush2.bf16.msra.mxu0 %v1807
        %2086 = vmatprep.subr.bf16.mxu0 0
        %2087 = vmatpush2.bf16.msra.mxu0 %v1806
        %2088 = vmatprep.subr.bf16.mxu0 0
        %2089 = vmatpush2.bf16.msra.mxu0 %v1805
        %2090 = vmatprep.subr.bf16.mxu0 0
        %2091 = vmatpush2.bf16.msra.mxu0 %v1804
        %2092 = vmatprep.subr.bf16.mxu0 0
        %2093 = vmatpush2.bf16.msra.mxu0 %v1803
        %2094 = vmatprep.subr.bf16.mxu0 0
        %2095 = vmatpush2.bf16.msra.mxu0 %v1802
        %2096 = vmatprep.subr.bf16.mxu0 0
        %2097 = vmatpush2.bf16.msra.mxu0 %v1801
        %2098 = vmatprep.mubr.bf16.mxu0 %v1204
        %2099 = vmatmul.mubr.bf16.gmra.mxu0 %v1203
        %v2100 = vpop.f32.mrf.mxu0
        %v2101 = vadd.f32 %v2004, %v2100
        %v2102 = vpop.f32.mrf.mxu0
        %v2103 = vpop.f32.mrf.mxu0
        %v2104 = vadd.f32 %v2007, %v2103
        %v2105 = vpop.f32.mrf.mxu0
        %2106 = vmatprep.mubr.bf16.mxu0 %v1216
        %2107 = vmatmul.mubr.bf16.gmra.mxu0 %v1215
        %v2108 = vpop.f32.mrf.mxu0
        %v2109 = vadd.f32 %v2012, %v2108
        %v2110 = vpop.f32.mrf.mxu0
        %v2111 = vpop.f32.mrf.mxu0
        %v2112 = vadd.f32 %v2015, %v2111
        %v2113 = vpop.f32.mrf.mxu0
        %2114 = vmatprep.mubr.bf16.mxu0 %v1228
        %2115 = vmatmul.mubr.bf16.gmra.mxu0 %v1227
        %v2116 = vpop.f32.mrf.mxu0
        %v2117 = vadd.f32 %v2020, %v2116
        %v2118 = vpop.f32.mrf.mxu0
        %v2119 = vpop.f32.mrf.mxu0
        %v2120 = vadd.f32 %v2023, %v2119
        %v2121 = vpop.f32.mrf.mxu0
        %2122 = vmatprep.mubr.bf16.mxu0 %v1240
        %2123 = vmatmul.mubr.bf16.gmra.mxu0 %v1239
        %v2124 = vpop.f32.mrf.mxu0
        %v2125 = vadd.f32 %v2028, %v2124
        %v2126 = vpop.f32.mrf.mxu0
        %v2127 = vpop.f32.mrf.mxu0
        %v2128 = vadd.f32 %v2031, %v2127
        %v2129 = vpop.f32.mrf.mxu0
        %2130 = vmatprep.mubr.bf16.mxu0 %v1252
        %2131 = vmatmul.mubr.bf16.gmra.mxu0 %v1251
        %v2132 = vpop.f32.mrf.mxu0
        %v2133 = vadd.f32 %v2036, %v2132
        %v2134 = vpop.f32.mrf.mxu0
        %v2135 = vpop.f32.mrf.mxu0
        %v2136 = vadd.f32 %v2039, %v2135
        %v2137 = vpop.f32.mrf.mxu0
        %2138 = vmatprep.mubr.bf16.mxu0 %v1264
        %2139 = vmatmul.mubr.bf16.gmra.mxu0 %v1263
        %v2140 = vpop.f32.mrf.mxu0
        %v2141 = vadd.f32 %v2044, %v2140
        %v2142 = vpop.f32.mrf.mxu0
        %v2143 = vpop.f32.mrf.mxu0
        %v2144 = vadd.f32 %v2047, %v2143
        %v2145 = vpop.f32.mrf.mxu0
        %2146 = vmatprep.mubr.bf16.mxu0 %v1276
        %2147 = vmatmul.mubr.bf16.gmra.mxu0 %v1275
        %v2148 = vpop.f32.mrf.mxu0
        %v2149 = vadd.f32 %v2052, %v2148
        %v2150 = vpop.f32.mrf.mxu0
        %v2151 = vpop.f32.mrf.mxu0
        %v2152 = vadd.f32 %v2055, %v2151
        %v2153 = vpop.f32.mrf.mxu0
        %2154 = vmatprep.mubr.bf16.mxu0 %v1288
        %2155 = vmatmul.mubr.bf16.gmra.mxu0 %v1287
        %v2156 = vpop.f32.mrf.mxu0
        %v2157 = vadd.f32 %v2060, %v2156
        %v2158 = vpop.f32.mrf.mxu0
        %v2159 = vpop.f32.mrf.mxu0
        %v2160 = vadd.f32 %v2063, %v2159
        %v2161 = vpop.f32.mrf.mxu0
        %2162 = vdwg.mxu0
        %2163 = vmatprep.subr.bf16.mxu0 0
        %2164 = vmatpush1.bf16.msra.mxu0 %v1816
        %2165 = vmatprep.subr.bf16.mxu0 0
        %2166 = vmatpush1.bf16.msra.mxu0 %v1815
        %2167 = vmatprep.subr.bf16.mxu0 0
        %2168 = vmatpush1.bf16.msra.mxu0 %v1814
        %2169 = vmatprep.subr.bf16.mxu0 0
        %2170 = vmatpush1.bf16.msra.mxu0 %v1813
        %2171 = vmatprep.subr.bf16.mxu0 0
        %2172 = vmatpush1.bf16.msra.mxu0 %v1812
        %2173 = vmatprep.subr.bf16.mxu0 0
        %2174 = vmatpush1.bf16.msra.mxu0 %v1811
        %2175 = vmatprep.subr.bf16.mxu0 0
        %2176 = vmatpush1.bf16.msra.mxu0 %v1810
        %2177 = vmatprep.subr.bf16.mxu0 0
        %2178 = vmatpush1.bf16.msra.mxu0 %v1809
        %2179 = vmatprep.subr.bf16.mxu0 0
        %2180 = vmatpush2.bf16.msra.mxu0 %v1824
        %2181 = vmatprep.subr.bf16.mxu0 0
        %2182 = vmatpush2.bf16.msra.mxu0 %v1823
        %2183 = vmatprep.subr.bf16.mxu0 0
        %2184 = vmatpush2.bf16.msra.mxu0 %v1822
        %2185 = vmatprep.subr.bf16.mxu0 0
        %2186 = vmatpush2.bf16.msra.mxu0 %v1821
        %2187 = vmatprep.subr.bf16.mxu0 0
        %2188 = vmatpush2.bf16.msra.mxu0 %v1820
        %2189 = vmatprep.subr.bf16.mxu0 0
        %2190 = vmatpush2.bf16.msra.mxu0 %v1819
        %2191 = vmatprep.subr.bf16.mxu0 0
        %2192 = vmatpush2.bf16.msra.mxu0 %v1818
        %2193 = vmatprep.subr.bf16.mxu0 0
        %2194 = vmatpush2.bf16.msra.mxu0 %v1817
        %2195 = vmatprep.mubr.bf16.mxu0 %v1206
        %2196 = vmatmul.mubr.bf16.gmra.mxu0 %v1205
        %v2197 = vpop.f32.mrf.mxu0
        %v2198 = vadd.f32 %v2101, %v2197
        %v2199 = vpop.f32.mrf.mxu0
        %v2200 = vpop.f32.mrf.mxu0
        %v2201 = vadd.f32 %v2104, %v2200
        %v2202 = vpop.f32.mrf.mxu0
        %2203 = vmatprep.mubr.bf16.mxu0 %v1218
        %2204 = vmatmul.mubr.bf16.gmra.mxu0 %v1217
        %v2205 = vpop.f32.mrf.mxu0
        %v2206 = vadd.f32 %v2109, %v2205
        %v2207 = vpop.f32.mrf.mxu0
        %v2208 = vpop.f32.mrf.mxu0
        %v2209 = vadd.f32 %v2112, %v2208
        %v2210 = vpop.f32.mrf.mxu0
        %2211 = vmatprep.mubr.bf16.mxu0 %v1230
        %2212 = vmatmul.mubr.bf16.gmra.mxu0 %v1229
        %v2213 = vpop.f32.mrf.mxu0
        %v2214 = vadd.f32 %v2117, %v2213
        %v2215 = vpop.f32.mrf.mxu0
        %v2216 = vpop.f32.mrf.mxu0
        %v2217 = vadd.f32 %v2120, %v2216
        %v2218 = vpop.f32.mrf.mxu0
        %2219 = vmatprep.mubr.bf16.mxu0 %v1242
        %2220 = vmatmul.mubr.bf16.gmra.mxu0 %v1241
        %v2221 = vpop.f32.mrf.mxu0
        %v2222 = vadd.f32 %v2125, %v2221
        %v2223 = vpop.f32.mrf.mxu0
        %v2224 = vpop.f32.mrf.mxu0
        %v2225 = vadd.f32 %v2128, %v2224
        %v2226 = vpop.f32.mrf.mxu0
        %2227 = vmatprep.mubr.bf16.mxu0 %v1254
        %2228 = vmatmul.mubr.bf16.gmra.mxu0 %v1253
        %v2229 = vpop.f32.mrf.mxu0
        %v2230 = vadd.f32 %v2133, %v2229
        %v2231 = vpop.f32.mrf.mxu0
        %v2232 = vpop.f32.mrf.mxu0
        %v2233 = vadd.f32 %v2136, %v2232
        %v2234 = vpop.f32.mrf.mxu0
        %2235 = vmatprep.mubr.bf16.mxu0 %v1266
        %2236 = vmatmul.mubr.bf16.gmra.mxu0 %v1265
        %v2237 = vpop.f32.mrf.mxu0
        %v2238 = vadd.f32 %v2141, %v2237
        %v2239 = vpop.f32.mrf.mxu0
        %v2240 = vpop.f32.mrf.mxu0
        %v2241 = vadd.f32 %v2144, %v2240
        %v2242 = vpop.f32.mrf.mxu0
        %2243 = vmatprep.mubr.bf16.mxu0 %v1278
        %2244 = vmatmul.mubr.bf16.gmra.mxu0 %v1277
        %v2245 = vpop.f32.mrf.mxu0
        %v2246 = vadd.f32 %v2149, %v2245
        %v2247 = vpop.f32.mrf.mxu0
        %v2248 = vpop.f32.mrf.mxu0
        %v2249 = vadd.f32 %v2152, %v2248
        %v2250 = vpop.f32.mrf.mxu0
        %2251 = vmatprep.mubr.bf16.mxu0 %v1290
        %2252 = vmatmul.mubr.bf16.gmra.mxu0 %v1289
        %v2253 = vpop.f32.mrf.mxu0
        %v2254 = vadd.f32 %v2157, %v2253
        %v2255 = vpop.f32.mrf.mxu0
        %v2256 = vpop.f32.mrf.mxu0
        %v2257 = vadd.f32 %v2160, %v2256
        %v2258 = vpop.f32.mrf.mxu0
        %2259 = vdwg.mxu0
        %2260 = vmatprep.subr.bf16.mxu0 0
        %2261 = vmatpush1.bf16.msra.mxu0 %v1832
        %2262 = vmatprep.subr.bf16.mxu0 0
        %2263 = vmatpush1.bf16.msra.mxu0 %v1831
        %2264 = vmatprep.subr.bf16.mxu0 0
        %2265 = vmatpush1.bf16.msra.mxu0 %v1830
        %2266 = vmatprep.subr.bf16.mxu0 0
        %2267 = vmatpush1.bf16.msra.mxu0 %v1829
        %2268 = vmatprep.subr.bf16.mxu0 0
        %2269 = vmatpush1.bf16.msra.mxu0 %v1828
        %2270 = vmatprep.subr.bf16.mxu0 0
        %2271 = vmatpush1.bf16.msra.mxu0 %v1827
        %2272 = vmatprep.subr.bf16.mxu0 0
        %2273 = vmatpush1.bf16.msra.mxu0 %v1826
        %2274 = vmatprep.subr.bf16.mxu0 0
        %2275 = vmatpush1.bf16.msra.mxu0 %v1825
        %2276 = vmatprep.subr.bf16.mxu0 0
        %2277 = vmatpush2.bf16.msra.mxu0 %v1840
        %2278 = vmatprep.subr.bf16.mxu0 0
        %2279 = vmatpush2.bf16.msra.mxu0 %v1839
        %2280 = vmatprep.subr.bf16.mxu0 0
        %2281 = vmatpush2.bf16.msra.mxu0 %v1838
        %2282 = vmatprep.subr.bf16.mxu0 0
        %2283 = vmatpush2.bf16.msra.mxu0 %v1837
        %2284 = vmatprep.subr.bf16.mxu0 0
        %2285 = vmatpush2.bf16.msra.mxu0 %v1836
        %2286 = vmatprep.subr.bf16.mxu0 0
        %2287 = vmatpush2.bf16.msra.mxu0 %v1835
        %2288 = vmatprep.subr.bf16.mxu0 0
        %2289 = vmatpush2.bf16.msra.mxu0 %v1834
        %2290 = vmatprep.subr.bf16.mxu0 0
        %2291 = vmatpush2.bf16.msra.mxu0 %v1833
        %2292 = vmatprep.mubr.bf16.mxu0 %v1208
        %2293 = vmatmul.mubr.bf16.gmra.mxu0 %v1207
        %v2294 = vpop.f32.mrf.mxu0
        %v2295 = vadd.f32 %v2198, %v2294
        %v2296 = vpop.f32.mrf.mxu0
        %v2297 = vpop.f32.mrf.mxu0
        %v2298 = vadd.f32 %v2201, %v2297
        %v2299 = vpop.f32.mrf.mxu0
        %2300 = vmatprep.mubr.bf16.mxu0 %v1220
        %2301 = vmatmul.mubr.bf16.gmra.mxu0 %v1219
        %v2302 = vpop.f32.mrf.mxu0
        %v2303 = vadd.f32 %v2206, %v2302
        %v2304 = vpop.f32.mrf.mxu0
        %v2305 = vpop.f32.mrf.mxu0
        %v2306 = vadd.f32 %v2209, %v2305
        %v2307 = vpop.f32.mrf.mxu0
        %2308 = vmatprep.mubr.bf16.mxu0 %v1232
        %2309 = vmatmul.mubr.bf16.gmra.mxu0 %v1231
        %v2310 = vpop.f32.mrf.mxu0
        %v2311 = vadd.f32 %v2214, %v2310
        %v2312 = vpop.f32.mrf.mxu0
        %v2313 = vpop.f32.mrf.mxu0
        %v2314 = vadd.f32 %v2217, %v2313
        %v2315 = vpop.f32.mrf.mxu0
        %2316 = vmatprep.mubr.bf16.mxu0 %v1244
        %2317 = vmatmul.mubr.bf16.gmra.mxu0 %v1243
        %v2318 = vpop.f32.mrf.mxu0
        %v2319 = vadd.f32 %v2222, %v2318
        %v2320 = vpop.f32.mrf.mxu0
        %v2321 = vpop.f32.mrf.mxu0
        %v2322 = vadd.f32 %v2225, %v2321
        %v2323 = vpop.f32.mrf.mxu0
        %2324 = vmatprep.mubr.bf16.mxu0 %v1256
        %2325 = vmatmul.mubr.bf16.gmra.mxu0 %v1255
        %v2326 = vpop.f32.mrf.mxu0
        %v2327 = vadd.f32 %v2230, %v2326
        %v2328 = vpop.f32.mrf.mxu0
        %v2329 = vpop.f32.mrf.mxu0
        %v2330 = vadd.f32 %v2233, %v2329
        %v2331 = vpop.f32.mrf.mxu0
        %2332 = vmatprep.mubr.bf16.mxu0 %v1268
        %2333 = vmatmul.mubr.bf16.gmra.mxu0 %v1267
        %v2334 = vpop.f32.mrf.mxu0
        %v2335 = vadd.f32 %v2238, %v2334
        %v2336 = vpop.f32.mrf.mxu0
        %v2337 = vpop.f32.mrf.mxu0
        %v2338 = vadd.f32 %v2241, %v2337
        %v2339 = vpop.f32.mrf.mxu0
        %2340 = vmatprep.mubr.bf16.mxu0 %v1280
        %2341 = vmatmul.mubr.bf16.gmra.mxu0 %v1279
        %v2342 = vpop.f32.mrf.mxu0
        %v2343 = vadd.f32 %v2246, %v2342
        %v2344 = vpop.f32.mrf.mxu0
        %v2345 = vpop.f32.mrf.mxu0
        %v2346 = vadd.f32 %v2249, %v2345
        %v2347 = vpop.f32.mrf.mxu0
        %2348 = vmatprep.mubr.bf16.mxu0 %v1292
        %2349 = vmatmul.mubr.bf16.gmra.mxu0 %v1291
        %v2350 = vpop.f32.mrf.mxu0
        %v2351 = vadd.f32 %v2254, %v2350
        %v2352 = vpop.f32.mrf.mxu0
        %v2353 = vpop.f32.mrf.mxu0
        %v2354 = vadd.f32 %v2257, %v2353
        %v2355 = vpop.f32.mrf.mxu0
        %2356 = vdwg.mxu0
        %2357 = vmatprep.subr.bf16.mxu0 0
        %2358 = vmatpush1.bf16.msra.mxu0 %v1848
        %2359 = vmatprep.subr.bf16.mxu0 0
        %2360 = vmatpush1.bf16.msra.mxu0 %v1847
        %2361 = vmatprep.subr.bf16.mxu0 0
        %2362 = vmatpush1.bf16.msra.mxu0 %v1846
        %2363 = vmatprep.subr.bf16.mxu0 0
        %2364 = vmatpush1.bf16.msra.mxu0 %v1845
        %2365 = vmatprep.subr.bf16.mxu0 0
        %2366 = vmatpush1.bf16.msra.mxu0 %v1844
        %2367 = vmatprep.subr.bf16.mxu0 0
        %2368 = vmatpush1.bf16.msra.mxu0 %v1843
        %2369 = vmatprep.subr.bf16.mxu0 0
        %2370 = vmatpush1.bf16.msra.mxu0 %v1842
        %2371 = vmatprep.subr.bf16.mxu0 0
        %2372 = vmatpush1.bf16.msra.mxu0 %v1841
        %2373 = vmatprep.subr.bf16.mxu0 0
        %2374 = vmatpush2.bf16.msra.mxu0 %v1856
        %2375 = vmatprep.subr.bf16.mxu0 0
        %2376 = vmatpush2.bf16.msra.mxu0 %v1855
        %2377 = vmatprep.subr.bf16.mxu0 0
        %2378 = vmatpush2.bf16.msra.mxu0 %v1854
        %2379 = vmatprep.subr.bf16.mxu0 0
        %2380 = vmatpush2.bf16.msra.mxu0 %v1853
        %2381 = vmatprep.subr.bf16.mxu0 0
        %2382 = vmatpush2.bf16.msra.mxu0 %v1852
        %2383 = vmatprep.subr.bf16.mxu0 0
        %2384 = vmatpush2.bf16.msra.mxu0 %v1851
        %2385 = vmatprep.subr.bf16.mxu0 0
        %2386 = vmatpush2.bf16.msra.mxu0 %v1850
        %2387 = vmatprep.subr.bf16.mxu0 0
        %2388 = vmatpush2.bf16.msra.mxu0 %v1849
        %2389 = vmatprep.mubr.bf16.mxu0 %v1210
        %2390 = vmatmul.mubr.bf16.gmra.mxu0 %v1209
        %v2391 = vpop.f32.mrf.mxu0
        %v2392 = vadd.f32 %v2295, %v2391
        %v2393 = vpop.f32.mrf.mxu0
        %v2394 = vpop.f32.mrf.mxu0
        %v2395 = vadd.f32 %v2298, %v2394
        %v2396 = vpop.f32.mrf.mxu0
        %2397 = vmatprep.mubr.bf16.mxu0 %v1222
        %2398 = vmatmul.mubr.bf16.gmra.mxu0 %v1221
        %v2399 = vpop.f32.mrf.mxu0
        %v2400 = vadd.f32 %v2303, %v2399
        %v2401 = vpop.f32.mrf.mxu0
        %v2402 = vpop.f32.mrf.mxu0
        %v2403 = vadd.f32 %v2306, %v2402
        %v2404 = vpop.f32.mrf.mxu0
        %2405 = vmatprep.mubr.bf16.mxu0 %v1234
        %2406 = vmatmul.mubr.bf16.gmra.mxu0 %v1233
        %v2407 = vpop.f32.mrf.mxu0
        %v2408 = vadd.f32 %v2311, %v2407
        %v2409 = vpop.f32.mrf.mxu0
        %v2410 = vpop.f32.mrf.mxu0
        %v2411 = vadd.f32 %v2314, %v2410
        %v2412 = vpop.f32.mrf.mxu0
        %2413 = vmatprep.mubr.bf16.mxu0 %v1246
        %2414 = vmatmul.mubr.bf16.gmra.mxu0 %v1245
        %v2415 = vpop.f32.mrf.mxu0
        %v2416 = vadd.f32 %v2319, %v2415
        %v2417 = vpop.f32.mrf.mxu0
        %v2418 = vpop.f32.mrf.mxu0
        %v2419 = vadd.f32 %v2322, %v2418
        %v2420 = vpop.f32.mrf.mxu0
        %2421 = vmatprep.mubr.bf16.mxu0 %v1258
        %2422 = vmatmul.mubr.bf16.gmra.mxu0 %v1257
        %v2423 = vpop.f32.mrf.mxu0
        %v2424 = vadd.f32 %v2327, %v2423
        %v2425 = vpop.f32.mrf.mxu0
        %v2426 = vpop.f32.mrf.mxu0
        %v2427 = vadd.f32 %v2330, %v2426
        %v2428 = vpop.f32.mrf.mxu0
        %2429 = vmatprep.mubr.bf16.mxu0 %v1270
        %2430 = vmatmul.mubr.bf16.gmra.mxu0 %v1269
        %v2431 = vpop.f32.mrf.mxu0
        %v2432 = vadd.f32 %v2335, %v2431
        %v2433 = vpop.f32.mrf.mxu0
        %v2434 = vpop.f32.mrf.mxu0
        %v2435 = vadd.f32 %v2338, %v2434
        %v2436 = vpop.f32.mrf.mxu0
        %2437 = vmatprep.mubr.bf16.mxu0 %v1282
        %2438 = vmatmul.mubr.bf16.gmra.mxu0 %v1281
        %v2439 = vpop.f32.mrf.mxu0
        %v2440 = vadd.f32 %v2343, %v2439
        %v2441 = vpop.f32.mrf.mxu0
        %v2442 = vpop.f32.mrf.mxu0
        %v2443 = vadd.f32 %v2346, %v2442
        %v2444 = vpop.f32.mrf.mxu0
        %2445 = vmatprep.mubr.bf16.mxu0 %v1294
        %2446 = vmatmul.mubr.bf16.gmra.mxu0 %v1293
        %v2447 = vpop.f32.mrf.mxu0
        %v2448 = vadd.f32 %v2351, %v2447
        %v2449 = vpop.f32.mrf.mxu0
        %v2450 = vpop.f32.mrf.mxu0
        %v2451 = vadd.f32 %v2354, %v2450
        %v2452 = vpop.f32.mrf.mxu0
        %2453 = vdwg.mxu0
        %2454 = vmatprep.subr.bf16.mxu0 0
        %2455 = vmatpush1.bf16.msra.mxu0 %v1864
        %2456 = vmatprep.subr.bf16.mxu0 0
        %2457 = vmatpush1.bf16.msra.mxu0 %v1863
        %2458 = vmatprep.subr.bf16.mxu0 0
        %2459 = vmatpush1.bf16.msra.mxu0 %v1862
        %2460 = vmatprep.subr.bf16.mxu0 0
        %2461 = vmatpush1.bf16.msra.mxu0 %v1861
        %2462 = vmatprep.subr.bf16.mxu0 0
        %2463 = vmatpush1.bf16.msra.mxu0 %v1860
        %2464 = vmatprep.subr.bf16.mxu0 0
        %2465 = vmatpush1.bf16.msra.mxu0 %v1859
        %2466 = vmatprep.subr.bf16.mxu0 0
        %2467 = vmatpush1.bf16.msra.mxu0 %v1858
        %2468 = vmatprep.subr.bf16.mxu0 0
        %2469 = vmatpush1.bf16.msra.mxu0 %v1857
        %2470 = vmatprep.subr.bf16.mxu0 0
        %2471 = vmatpush2.bf16.msra.mxu0 %v1872
        %2472 = vmatprep.subr.bf16.mxu0 0
        %2473 = vmatpush2.bf16.msra.mxu0 %v1871
        %2474 = vmatprep.subr.bf16.mxu0 0
        %2475 = vmatpush2.bf16.msra.mxu0 %v1870
        %2476 = vmatprep.subr.bf16.mxu0 0
        %2477 = vmatpush2.bf16.msra.mxu0 %v1869
        %2478 = vmatprep.subr.bf16.mxu0 0
        %2479 = vmatpush2.bf16.msra.mxu0 %v1868
        %2480 = vmatprep.subr.bf16.mxu0 0
        %2481 = vmatpush2.bf16.msra.mxu0 %v1867
        %2482 = vmatprep.subr.bf16.mxu0 0
        %2483 = vmatpush2.bf16.msra.mxu0 %v1866
        %2484 = vmatprep.subr.bf16.mxu0 0
        %2485 = vmatpush2.bf16.msra.mxu0 %v1865
        %2486 = vmatprep.mubr.bf16.mxu0 %v1212
        %2487 = vmatmul.mubr.bf16.gmra.mxu0 %v1211
        %v2488 = vpop.f32.mrf.mxu0
        %v2489 = vadd.f32 %v2392, %v2488
        %v2490 = vpop.f32.mrf.mxu0
        %v2491 = vpop.f32.mrf.mxu0
        %v2492 = vadd.f32 %v2395, %v2491
        %v2493 = vpop.f32.mrf.mxu0
        %2494 = vmatprep.mubr.bf16.mxu0 %v1224
        %2495 = vmatmul.mubr.bf16.gmra.mxu0 %v1223
        %v2496 = vpop.f32.mrf.mxu0
        %v2497 = vadd.f32 %v2400, %v2496
        %v2498 = vpop.f32.mrf.mxu0
        %v2499 = vpop.f32.mrf.mxu0
        %v2500 = vadd.f32 %v2403, %v2499
        %v2501 = vpop.f32.mrf.mxu0
        %2502 = vmatprep.mubr.bf16.mxu0 %v1236
        %2503 = vmatmul.mubr.bf16.gmra.mxu0 %v1235
        %v2504 = vpop.f32.mrf.mxu0
        %v2505 = vadd.f32 %v2408, %v2504
        %v2506 = vpop.f32.mrf.mxu0
        %v2507 = vpop.f32.mrf.mxu0
        %v2508 = vadd.f32 %v2411, %v2507
        %v2509 = vpop.f32.mrf.mxu0
        %2510 = vmatprep.mubr.bf16.mxu0 %v1248
        %2511 = vmatmul.mubr.bf16.gmra.mxu0 %v1247
        %v2512 = vpop.f32.mrf.mxu0
        %v2513 = vadd.f32 %v2416, %v2512
        %v2514 = vpop.f32.mrf.mxu0
        %v2515 = vpop.f32.mrf.mxu0
        %v2516 = vadd.f32 %v2419, %v2515
        %v2517 = vpop.f32.mrf.mxu0
        %2518 = vmatprep.mubr.bf16.mxu0 %v1260
        %2519 = vmatmul.mubr.bf16.gmra.mxu0 %v1259
        %v2520 = vpop.f32.mrf.mxu0
        %v2521 = vadd.f32 %v2424, %v2520
        %v2522 = vpop.f32.mrf.mxu0
        %v2523 = vpop.f32.mrf.mxu0
        %v2524 = vadd.f32 %v2427, %v2523
        %v2525 = vpop.f32.mrf.mxu0
        %2526 = vmatprep.mubr.bf16.mxu0 %v1272
        %2527 = vmatmul.mubr.bf16.gmra.mxu0 %v1271
        %v2528 = vpop.f32.mrf.mxu0
        %v2529 = vadd.f32 %v2432, %v2528
        %v2530 = vpop.f32.mrf.mxu0
        %v2531 = vpop.f32.mrf.mxu0
        %v2532 = vadd.f32 %v2435, %v2531
        %v2533 = vpop.f32.mrf.mxu0
        %2534 = vmatprep.mubr.bf16.mxu0 %v1284
        %2535 = vmatmul.mubr.bf16.gmra.mxu0 %v1283
        %v2536 = vpop.f32.mrf.mxu0
        %v2537 = vadd.f32 %v2440, %v2536
        %v2538 = vpop.f32.mrf.mxu0
        %v2539 = vpop.f32.mrf.mxu0
        %v2540 = vadd.f32 %v2443, %v2539
        %v2541 = vpop.f32.mrf.mxu0
        %2542 = vmatprep.mubr.bf16.mxu0 %v1296
        %2543 = vmatmul.mubr.bf16.gmra.mxu0 %v1295
        %v2544 = vpop.f32.mrf.mxu0
        %v2545 = vadd.f32 %v2448, %v2544
        %v2546 = vpop.f32.mrf.mxu0
        %v2547 = vpop.f32.mrf.mxu0
        %v2548 = vadd.f32 %v2451, %v2547
        %v2549 = vpop.f32.mrf.mxu0
        %2550 = vdwg.mxu0
        %v2551 = vld [vmem:[%s6] sm:$0xf]
        %v2552 = vld [vmem:[%s6 + $0x4] sm:$0xf]
        %v2553 = vld [vmem:[%s6 + $0x8] sm:$0xf]
        %v2554 = vld [vmem:[%s6 + $0xc] sm:$0xf]
        %v2555 = vld [vmem:[%s6 + $0x10] sm:$0xf]
        %v2556 = vld [vmem:[%s6 + $0x14] sm:$0xf]
        %v2557 = vld [vmem:[%s6 + $0x18] sm:$0xf]
        %v2558 = vld [vmem:[%s6 + $0x1c] sm:$0xf]
        %v2559 = vld [vmem:[%s6 + $0x20] sm:$0xf]
        %v2560 = vld [vmem:[%s6 + $0x24] sm:$0xf]
        %v2561 = vld [vmem:[%s6 + $0x28] sm:$0xf]
        %v2562 = vld [vmem:[%s6 + $0x2c] sm:$0xf]
        %v2563 = vld [vmem:[%s6 + $0x30] sm:$0xf]
        %v2564 = vld [vmem:[%s6 + $0x34] sm:$0xf]
        %v2565 = vld [vmem:[%s6 + $0x38] sm:$0xf]
        %v2566 = vld [vmem:[%s6 + $0x3c] sm:$0xf]
        %v2567 = vld [vmem:[%s7] sm:$0x1]
        %v2569 = vlaneseq
        %v2570 = vshrl.u32 %v2569, 7
        %v2571 = vsub.s32 0, %v2570
        %v2572 = vrot.slane %v2567, %v2571
        %v2590 = vunpack.c.l.b16 %v681
        %v2591 = vunpack.c.l.b16 %v682
        %v2592 = vunpack.c.l.b16 %v683
        %v2593 = vunpack.c.l.b16 %v684
        %v2594 = vunpack.c.l.b16 %v685
        %v2595 = vunpack.c.l.b16 %v686
        %v2596 = vunpack.c.l.b16 %v687
        %v2597 = vunpack.c.l.b16 %v688
        %v2598 = vunpack.c.l.b16 %v689
        %v2599 = vunpack.c.l.b16 %v690
        %v2600 = vunpack.c.l.b16 %v691
        %v2601 = vunpack.c.l.b16 %v692
        %v2602 = vunpack.c.l.b16 %v693
        %v2603 = vunpack.c.l.b16 %v694
        %v2604 = vunpack.c.l.b16 %v695
        %v2605 = vunpack.c.l.b16 %v696
        %v2606 = vpack.c.b16 %v2591, %v2590
        %v2607 = vpack.c.b16 %v2593, %v2592
        %v2608 = vpack.c.b16 %v2595, %v2594
        %v2609 = vpack.c.b16 %v2597, %v2596
        %v2610 = vpack.c.b16 %v2599, %v2598
        %v2611 = vpack.c.b16 %v2601, %v2600
        %v2612 = vpack.c.b16 %v2603, %v2602
        %v2613 = vpack.c.b16 %v2605, %v2604
        %v2638 = vunpack.c.l.b16 %v2551
        %v2639 = vunpack.c.l.b16 %v2552
        %v2640 = vunpack.c.l.b16 %v2553
        %v2641 = vunpack.c.l.b16 %v2554
        %v2642 = vunpack.c.l.b16 %v2555
        %v2643 = vunpack.c.l.b16 %v2556
        %v2644 = vunpack.c.l.b16 %v2557
        %v2645 = vunpack.c.l.b16 %v2558
        %v2646 = vunpack.c.l.b16 %v2559
        %v2647 = vunpack.c.l.b16 %v2560
        %v2648 = vunpack.c.l.b16 %v2561
        %v2649 = vunpack.c.l.b16 %v2562
        %v2650 = vunpack.c.l.b16 %v2563
        %v2651 = vunpack.c.l.b16 %v2564
        %v2652 = vunpack.c.l.b16 %v2565
        %v2653 = vunpack.c.l.b16 %v2566
        %v2654 = vpack.c.b16 %v2639, %v2638
        %v2655 = vpack.c.b16 %v2641, %v2640
        %v2656 = vpack.c.b16 %v2643, %v2642
        %v2657 = vpack.c.b16 %v2645, %v2644
        %v2658 = vpack.c.b16 %v2647, %v2646
        %v2659 = vpack.c.b16 %v2649, %v2648
        %v2660 = vpack.c.b16 %v2651, %v2650
        %v2661 = vpack.c.b16 %v2653, %v2652
        %2670 = vmatprep.subr.bf16.mxu0 0
        %2671 = vmatpush1.bf16.msra.mxu0 %v2661
        %2672 = vmatprep.subr.bf16.mxu0 0
        %2673 = vmatpush1.bf16.msra.mxu0 %v2660
        %2674 = vmatprep.subr.bf16.mxu0 0
        %2675 = vmatpush1.bf16.msra.mxu0 %v2659
        %2676 = vmatprep.subr.bf16.mxu0 0
        %2677 = vmatpush1.bf16.msra.mxu0 %v2658
        %2678 = vmatprep.subr.bf16.mxu0 0
        %2679 = vmatpush1.bf16.msra.mxu0 %v2657
        %2680 = vmatprep.subr.bf16.mxu0 0
        %2681 = vmatpush1.bf16.msra.mxu0 %v2656
        %2682 = vmatprep.subr.bf16.mxu0 0
        %2683 = vmatpush1.bf16.msra.mxu0 %v2655
        %2684 = vmatprep.subr.bf16.mxu0 0
        %2685 = vmatpush1.bf16.msra.mxu0 %v2654
        %2686 = vmatprep.subr.bf16.mxu0 0
        %2687 = vmatpush2.bf16.msra.mxu0 0
        %2688 = vmatprep.subr.bf16.mxu0 0
        %2689 = vmatpush2.bf16.msra.mxu0 0
        %2690 = vmatprep.subr.bf16.mxu0 0
        %2691 = vmatpush2.bf16.msra.mxu0 0
        %2692 = vmatprep.subr.bf16.mxu0 0
        %2693 = vmatpush2.bf16.msra.mxu0 0
        %2694 = vmatprep.subr.bf16.mxu0 0
        %2695 = vmatpush2.bf16.msra.mxu0 0
        %2696 = vmatprep.subr.bf16.mxu0 0
        %2697 = vmatpush2.bf16.msra.mxu0 0
        %2698 = vmatprep.subr.bf16.mxu0 0
        %2699 = vmatpush2.bf16.msra.mxu0 0
        %2700 = vmatprep.subr.bf16.mxu0 0
        %2701 = vmatpush2.bf16.msra.mxu0 0
        %2702 = vmatprep.mubr.bf16.mxu0 0
        %2703 = vmatmul.mubr.bf16.gmra.mxu0 %v2606
        %v2704 = vpop.f32.mrf.mxu0
        %v2705 = vadd.f32 %v2572, %v2704
        %v2706 = vpop.f32.mrf.mxu0
        %v2707 = vpop.f32.mrf.mxu0
        %v2708 = vadd.f32 %v2572, %v2707
        %v2709 = vpop.f32.mrf.mxu0
        %2710 = vmatprep.mubr.bf16.mxu0 0
        %2711 = vmatmul.mubr.bf16.gmra.mxu0 %v2607
        %v2712 = vpop.f32.mrf.mxu0
        %v2713 = vadd.f32 %v2572, %v2712
        %v2714 = vpop.f32.mrf.mxu0
        %v2715 = vpop.f32.mrf.mxu0
        %v2716 = vadd.f32 %v2572, %v2715
        %v2717 = vpop.f32.mrf.mxu0
        %2718 = vmatprep.mubr.bf16.mxu0 0
        %2719 = vmatmul.mubr.bf16.gmra.mxu0 %v2608
        %v2720 = vpop.f32.mrf.mxu0
        %v2721 = vadd.f32 %v2572, %v2720
        %v2722 = vpop.f32.mrf.mxu0
        %v2723 = vpop.f32.mrf.mxu0
        %v2724 = vadd.f32 %v2572, %v2723
        %v2725 = vpop.f32.mrf.mxu0
        %2726 = vmatprep.mubr.bf16.mxu0 0
        %2727 = vmatmul.mubr.bf16.gmra.mxu0 %v2609
        %v2728 = vpop.f32.mrf.mxu0
        %v2729 = vadd.f32 %v2572, %v2728
        %v2730 = vpop.f32.mrf.mxu0
        %v2731 = vpop.f32.mrf.mxu0
        %v2732 = vadd.f32 %v2572, %v2731
        %v2733 = vpop.f32.mrf.mxu0
        %2734 = vmatprep.mubr.bf16.mxu0 0
        %2735 = vmatmul.mubr.bf16.gmra.mxu0 %v2610
        %v2736 = vpop.f32.mrf.mxu0
        %v2737 = vadd.f32 %v2572, %v2736
        %v2738 = vpop.f32.mrf.mxu0
        %v2739 = vpop.f32.mrf.mxu0
        %v2740 = vadd.f32 %v2572, %v2739
        %v2741 = vpop.f32.mrf.mxu0
        %2742 = vmatprep.mubr.bf16.mxu0 0
        %2743 = vmatmul.mubr.bf16.gmra.mxu0 %v2611
        %v2744 = vpop.f32.mrf.mxu0
        %v2745 = vadd.f32 %v2572, %v2744
        %v2746 = vpop.f32.mrf.mxu0
        %v2747 = vpop.f32.mrf.mxu0
        %v2748 = vadd.f32 %v2572, %v2747
        %v2749 = vpop.f32.mrf.mxu0
        %2750 = vmatprep.mubr.bf16.mxu0 0
        %2751 = vmatmul.mubr.bf16.gmra.mxu0 %v2612
        %v2752 = vpop.f32.mrf.mxu0
        %v2753 = vadd.f32 %v2572, %v2752
        %v2754 = vpop.f32.mrf.mxu0
        %v2755 = vpop.f32.mrf.mxu0
        %v2756 = vadd.f32 %v2572, %v2755
        %v2757 = vpop.f32.mrf.mxu0
        %2758 = vmatprep.mubr.bf16.mxu0 0
        %2759 = vmatmul.mubr.bf16.gmra.mxu0 %v2613
        %v2760 = vpop.f32.mrf.mxu0
        %v2761 = vadd.f32 %v2572, %v2760
        %v2762 = vpop.f32.mrf.mxu0
        %v2763 = vpop.f32.mrf.mxu0
        %v2764 = vadd.f32 %v2572, %v2763
        %v2765 = vpop.f32.mrf.mxu0
        %2766 = vdwg.mxu0
        %v2767 = vlaneseq
        %v2768 = vand.u32 %v2767, 127
        %2769 = vset.pattern.permute.xlu0 0
        %2770 = vperm.xlu0 %2769, %v697
        %v2771 = vpop.permute.xlu0 %2770
        %2772 = vset.pattern.permute.xlu0 0
        %2773 = vperm.xlu0 %2772, %v698
        %v2774 = vpop.permute.xlu0 %2773
        %2775 = vset.pattern.permute.xlu0 0
        %2776 = vperm.xlu0 %2775, %v699
        %v2777 = vpop.permute.xlu0 %2776
        %2778 = vset.pattern.permute.xlu0 0
        %2779 = vperm.xlu0 %2778, %v700
        %v2780 = vpop.permute.xlu0 %2779
        %2781 = vset.pattern.permute.xlu0 0
        %2782 = vperm.xlu0 %2781, %v701
        %v2783 = vpop.permute.xlu0 %2782
        %2784 = vset.pattern.permute.xlu0 0
        %2785 = vperm.xlu0 %2784, %v702
        %v2786 = vpop.permute.xlu0 %2785
        %2787 = vset.pattern.permute.xlu0 0
        %2788 = vperm.xlu0 %2787, %v703
        %v2789 = vpop.permute.xlu0 %2788
        %2790 = vset.pattern.permute.xlu0 0
        %2791 = vperm.xlu0 %2790, %v704
        %v2792 = vpop.permute.xlu0 %2791
        %2793 = vset.pattern.permute.xlu0 0
        %2794 = vperm.xlu0 %2793, %v705
        %v2795 = vpop.permute.xlu0 %2794
        %2796 = vset.pattern.permute.xlu0 0
        %2797 = vperm.xlu0 %2796, %v706
        %v2798 = vpop.permute.xlu0 %2797
        %2799 = vset.pattern.permute.xlu0 0
        %2800 = vperm.xlu0 %2799, %v707
        %v2801 = vpop.permute.xlu0 %2800
        %2802 = vset.pattern.permute.xlu0 0
        %2803 = vperm.xlu0 %2802, %v708
        %v2804 = vpop.permute.xlu0 %2803
        %2805 = vset.pattern.permute.xlu0 0
        %2806 = vperm.xlu0 %2805, %v709
        %v2807 = vpop.permute.xlu0 %2806
        %2808 = vset.pattern.permute.xlu0 0
        %2809 = vperm.xlu0 %2808, %v710
        %v2810 = vpop.permute.xlu0 %2809
        %2811 = vset.pattern.permute.xlu0 0
        %2812 = vperm.xlu0 %2811, %v711
        %v2813 = vpop.permute.xlu0 %2812
        %2814 = vset.pattern.permute.xlu0 0
        %2815 = vperm.xlu0 %2814, %v712
        %v2816 = vpop.permute.xlu0 %2815
        %vm2817 = vcmp.eq.s32.totalorder %v2768, %v2771
        %vm2818 = vcmp.eq.s32.totalorder %v2768, %v2774
        %vm2819 = vcmp.eq.s32.totalorder %v2768, %v2777
        %vm2820 = vcmp.eq.s32.totalorder %v2768, %v2780
        %vm2821 = vcmp.eq.s32.totalorder %v2768, %v2783
        %vm2822 = vcmp.eq.s32.totalorder %v2768, %v2786
        %vm2823 = vcmp.eq.s32.totalorder %v2768, %v2789
        %vm2824 = vcmp.eq.s32.totalorder %v2768, %v2792
        %vm2825 = vcmp.eq.s32.totalorder %v2768, %v2795
        %vm2826 = vcmp.eq.s32.totalorder %v2768, %v2798
        %vm2827 = vcmp.eq.s32.totalorder %v2768, %v2801
        %vm2828 = vcmp.eq.s32.totalorder %v2768, %v2804
        %vm2829 = vcmp.eq.s32.totalorder %v2768, %v2807
        %vm2830 = vcmp.eq.s32.totalorder %v2768, %v2810
        %vm2831 = vcmp.eq.s32.totalorder %v2768, %v2813
        %vm2832 = vcmp.eq.s32.totalorder %v2768, %v2816
        %v2833 = vsel %vm2817, 1.0, 0.0
        %v2834 = vsel %vm2818, 1.0, 0.0
        %v2835 = vsel %vm2819, 1.0, 0.0
        %v2836 = vsel %vm2820, 1.0, 0.0
        %v2837 = vsel %vm2821, 1.0, 0.0
        %v2838 = vsel %vm2822, 1.0, 0.0
        %v2839 = vsel %vm2823, 1.0, 0.0
        %v2840 = vsel %vm2824, 1.0, 0.0
        %v2841 = vsel %vm2825, 1.0, 0.0
        %v2842 = vsel %vm2826, 1.0, 0.0
        %v2843 = vsel %vm2827, 1.0, 0.0
        %v2844 = vsel %vm2828, 1.0, 0.0
        %v2845 = vsel %vm2829, 1.0, 0.0
        %v2846 = vsel %vm2830, 1.0, 0.0
        %v2847 = vsel %vm2831, 1.0, 0.0
        %v2848 = vsel %vm2832, 1.0, 0.0
        %v2849 = vpack.c.bf16 %v2834, %v2833
        %v2850 = vpack.c.bf16 %v2836, %v2835
        %v2851 = vpack.c.bf16 %v2838, %v2837
        %v2852 = vpack.c.bf16 %v2840, %v2839
        %v2853 = vpack.c.bf16 %v2842, %v2841
        %v2854 = vpack.c.bf16 %v2844, %v2843
        %v2855 = vpack.c.bf16 %v2846, %v2845
        %v2856 = vpack.c.bf16 %v2848, %v2847
        %v2857 = vlaneseq
        %v2858 = vshrl.u32 %v2857, 7
        %v2859 = vadd.s32 %v2858, 8
        %v2860 = vadd.s32 %v2858, 16
        %v2861 = vadd.s32 %v2858, 24
        %v2862 = vadd.s32 %v2858, 32
        %v2863 = vadd.s32 %v2858, 40
        %v2864 = vadd.s32 %v2858, 48
        %v2865 = vadd.s32 %v2858, 56
        %v2866 = vadd.s32 %v2858, 64
        %v2867 = vadd.s32 %v2858, 72
        %v2868 = vadd.s32 %v2858, 80
        %v2869 = vadd.s32 %v2858, 88
        %v2870 = vadd.s32 %v2858, 96
        %v2871 = vadd.s32 %v2858, 104
        %v2872 = vadd.s32 %v2858, 112
        %v2873 = vadd.s32 %v2858, 120
        %v2874 = vlaneseq
        %v2875 = vshrl.u32 %v2874, 7
        %v2876 = vsub.s32 0, %v2875
        %v2877 = vrot.slane %v713, %v2876
        %vm2878 = vcmp.eq.s32.totalorder %v2858, %v2877
        %vm2879 = vcmp.eq.s32.totalorder %v2859, %v2877
        %vm2880 = vcmp.eq.s32.totalorder %v2860, %v2877
        %vm2881 = vcmp.eq.s32.totalorder %v2861, %v2877
        %vm2882 = vcmp.eq.s32.totalorder %v2862, %v2877
        %vm2883 = vcmp.eq.s32.totalorder %v2863, %v2877
        %vm2884 = vcmp.eq.s32.totalorder %v2864, %v2877
        %vm2885 = vcmp.eq.s32.totalorder %v2865, %v2877
        %vm2886 = vcmp.eq.s32.totalorder %v2866, %v2877
        %vm2887 = vcmp.eq.s32.totalorder %v2867, %v2877
        %vm2888 = vcmp.eq.s32.totalorder %v2868, %v2877
        %vm2889 = vcmp.eq.s32.totalorder %v2869, %v2877
        %vm2890 = vcmp.eq.s32.totalorder %v2870, %v2877
        %vm2891 = vcmp.eq.s32.totalorder %v2871, %v2877
        %vm2892 = vcmp.eq.s32.totalorder %v2872, %v2877
        %vm2893 = vcmp.eq.s32.totalorder %v2873, %v2877
        %v2894 = vsel %vm2878, 1.0, 0.0
        %v2895 = vsel %vm2879, 1.0, 0.0
        %v2896 = vsel %vm2880, 1.0, 0.0
        %v2897 = vsel %vm2881, 1.0, 0.0
        %v2898 = vsel %vm2882, 1.0, 0.0
        %v2899 = vsel %vm2883, 1.0, 0.0
        %v2900 = vsel %vm2884, 1.0, 0.0
        %v2901 = vsel %vm2885, 1.0, 0.0
        %v2902 = vsel %vm2886, 1.0, 0.0
        %v2903 = vsel %vm2887, 1.0, 0.0
        %v2904 = vsel %vm2888, 1.0, 0.0
        %v2905 = vsel %vm2889, 1.0, 0.0
        %v2906 = vsel %vm2890, 1.0, 0.0
        %v2907 = vsel %vm2891, 1.0, 0.0
        %v2908 = vsel %vm2892, 1.0, 0.0
        %v2909 = vsel %vm2893, 1.0, 0.0
        %v2910 = vpack.c.bf16 %v2895, %v2894
        %v2911 = vpack.c.bf16 %v2897, %v2896
        %v2912 = vpack.c.bf16 %v2899, %v2898
        %v2913 = vpack.c.bf16 %v2901, %v2900
        %v2914 = vpack.c.bf16 %v2903, %v2902
        %v2915 = vpack.c.bf16 %v2905, %v2904
        %v2916 = vpack.c.bf16 %v2907, %v2906
        %v2917 = vpack.c.bf16 %v2909, %v2908
        %v2918 = vpack.c.bf16 %v2492, %v2489
        %v2919 = vpack.c.bf16 %v2500, %v2497
        %v2920 = vpack.c.bf16 %v2508, %v2505
        %v2921 = vpack.c.bf16 %v2516, %v2513
        %v2922 = vpack.c.bf16 %v2524, %v2521
        %v2923 = vpack.c.bf16 %v2532, %v2529
        %v2924 = vpack.c.bf16 %v2540, %v2537
        %v2925 = vpack.c.bf16 %v2548, %v2545
        %2926 = vmatprep.subr.bf16.mxu0 0
        %2927 = vmatpush1.bf16.msra.mxu0 %v2925
        %2928 = vmatprep.subr.bf16.mxu0 0
        %2929 = vmatpush1.bf16.msra.mxu0 %v2924
        %2930 = vmatprep.subr.bf16.mxu0 0
        %2931 = vmatpush1.bf16.msra.mxu0 %v2923
        %2932 = vmatprep.subr.bf16.mxu0 0
        %2933 = vmatpush1.bf16.msra.mxu0 %v2922
        %2934 = vmatprep.subr.bf16.mxu0 0
        %2935 = vmatpush1.bf16.msra.mxu0 %v2921
        %2936 = vmatprep.subr.bf16.mxu0 0
        %2937 = vmatpush1.bf16.msra.mxu0 %v2920
        %2938 = vmatprep.subr.bf16.mxu0 0
        %2939 = vmatpush1.bf16.msra.mxu0 %v2919
        %2940 = vmatprep.subr.bf16.mxu0 0
        %2941 = vmatpush1.bf16.msra.mxu0 %v2918
        %2942 = vmatprep.subr.bf16.mxu0 0
        %2943 = vmatpush2.bf16.msra.mxu0 0
        %2944 = vmatprep.subr.bf16.mxu0 0
        %2945 = vmatpush2.bf16.msra.mxu0 0
        %2946 = vmatprep.subr.bf16.mxu0 0
        %2947 = vmatpush2.bf16.msra.mxu0 0
        %2948 = vmatprep.subr.bf16.mxu0 0
        %2949 = vmatpush2.bf16.msra.mxu0 0
        %2950 = vmatprep.subr.bf16.mxu0 0
        %2951 = vmatpush2.bf16.msra.mxu0 0
        %2952 = vmatprep.subr.bf16.mxu0 0
        %2953 = vmatpush2.bf16.msra.mxu0 0
        %2954 = vmatprep.subr.bf16.mxu0 0
        %2955 = vmatpush2.bf16.msra.mxu0 0
        %2956 = vmatprep.subr.bf16.mxu0 0
        %2957 = vmatpush2.bf16.msra.mxu0 0
        %2958 = vmatprep.mubr.bf16.mxu0 0
        %2959 = vmatmul.mubr.bf16.gmra.mxu0 %v2849
        %v2960 = vpop.f32.mrf.mxu0
        %v2961 = vadd.f32 %v2705, %v2960
        %v2962 = vpop.f32.mrf.mxu0
        %v2963 = vpop.f32.mrf.mxu0
        %v2964 = vadd.f32 %v2708, %v2963
        %v2965 = vpop.f32.mrf.mxu0
        %2966 = vmatprep.mubr.bf16.mxu0 0
        %2967 = vmatmul.mubr.bf16.gmra.mxu0 %v2850
        %v2968 = vpop.f32.mrf.mxu0
        %v2969 = vadd.f32 %v2713, %v2968
        %v2970 = vpop.f32.mrf.mxu0
        %v2971 = vpop.f32.mrf.mxu0
        %v2972 = vadd.f32 %v2716, %v2971
        %v2973 = vpop.f32.mrf.mxu0
        %2974 = vmatprep.mubr.bf16.mxu0 0
        %2975 = vmatmul.mubr.bf16.gmra.mxu0 %v2851
        %v2976 = vpop.f32.mrf.mxu0
        %v2977 = vadd.f32 %v2721, %v2976
        %v2978 = vpop.f32.mrf.mxu0
        %v2979 = vpop.f32.mrf.mxu0
        %v2980 = vadd.f32 %v2724, %v2979
        %v2981 = vpop.f32.mrf.mxu0
        %2982 = vmatprep.mubr.bf16.mxu0 0
        %2983 = vmatmul.mubr.bf16.gmra.mxu0 %v2852
        %v2984 = vpop.f32.mrf.mxu0
        %v2985 = vadd.f32 %v2729, %v2984
        %v2986 = vpop.f32.mrf.mxu0
        %v2987 = vpop.f32.mrf.mxu0
        %v2988 = vadd.f32 %v2732, %v2987
        %v2989 = vpop.f32.mrf.mxu0
        %2990 = vmatprep.mubr.bf16.mxu0 0
        %2991 = vmatmul.mubr.bf16.gmra.mxu0 %v2853
        %v2992 = vpop.f32.mrf.mxu0
        %v2993 = vadd.f32 %v2737, %v2992
        %v2994 = vpop.f32.mrf.mxu0
        %v2995 = vpop.f32.mrf.mxu0
        %v2996 = vadd.f32 %v2740, %v2995
        %v2997 = vpop.f32.mrf.mxu0
        %2998 = vmatprep.mubr.bf16.mxu0 0
        %2999 = vmatmul.mubr.bf16.gmra.mxu0 %v2854
        %v3000 = vpop.f32.mrf.mxu0
        %v3001 = vadd.f32 %v2745, %v3000
        %v3002 = vpop.f32.mrf.mxu0
        %v3003 = vpop.f32.mrf.mxu0
        %v3004 = vadd.f32 %v2748, %v3003
        %v3005 = vpop.f32.mrf.mxu0
        %3006 = vmatprep.mubr.bf16.mxu0 0
        %3007 = vmatmul.mubr.bf16.gmra.mxu0 %v2855
        %v3008 = vpop.f32.mrf.mxu0
        %v3009 = vadd.f32 %v2753, %v3008
        %v3010 = vpop.f32.mrf.mxu0
        %v3011 = vpop.f32.mrf.mxu0
        %v3012 = vadd.f32 %v2756, %v3011
        %v3013 = vpop.f32.mrf.mxu0
        %3014 = vmatprep.mubr.bf16.mxu0 0
        %3015 = vmatmul.mubr.bf16.gmra.mxu0 %v2856
        %v3016 = vpop.f32.mrf.mxu0
        %v3017 = vadd.f32 %v2761, %v3016
        %v3018 = vpop.f32.mrf.mxu0
        %v3019 = vpop.f32.mrf.mxu0
        %v3020 = vadd.f32 %v2764, %v3019
        %v3021 = vpop.f32.mrf.mxu0
        %3022 = vdwg.mxu0
        %v3023 = vmax.f32 %v2961, 0.0
        %v3024 = vmax.f32 %v2964, 0.0
        %v3025 = vmax.f32 %v2969, 0.0
        %v3026 = vmax.f32 %v2972, 0.0
        %v3027 = vmax.f32 %v2977, 0.0
        %v3028 = vmax.f32 %v2980, 0.0
        %v3029 = vmax.f32 %v2985, 0.0
        %v3030 = vmax.f32 %v2988, 0.0
        %v3031 = vmax.f32 %v2993, 0.0
        %v3032 = vmax.f32 %v2996, 0.0
        %v3033 = vmax.f32 %v3001, 0.0
        %v3034 = vmax.f32 %v3004, 0.0
        %v3035 = vmax.f32 %v3009, 0.0
        %v3036 = vmax.f32 %v3012, 0.0
        %v3037 = vmax.f32 %v3017, 0.0
        %v3038 = vmax.f32 %v3020, 0.0
        %v3039 = vpack.c.bf16 %v3024, %v3023
        %v3040 = vpack.c.bf16 %v3026, %v3025
        %v3041 = vpack.c.bf16 %v3028, %v3027
        %v3042 = vpack.c.bf16 %v3030, %v3029
        %v3043 = vpack.c.bf16 %v3032, %v3031
        %v3044 = vpack.c.bf16 %v3034, %v3033
        %v3045 = vpack.c.bf16 %v3036, %v3035
        %v3046 = vpack.c.bf16 %v3038, %v3037
        %3047 = vmatprep.subr.bf16.mxu0 0
        %3048 = vmatpush1.bf16.msra.mxu0 %v3046
        %3049 = vmatprep.subr.bf16.mxu0 0
        %3050 = vmatpush1.bf16.msra.mxu0 %v3045
        %3051 = vmatprep.subr.bf16.mxu0 0
        %3052 = vmatpush1.bf16.msra.mxu0 %v3044
        %3053 = vmatprep.subr.bf16.mxu0 0
        %3054 = vmatpush1.bf16.msra.mxu0 %v3043
        %3055 = vmatprep.subr.bf16.mxu0 0
        %3056 = vmatpush1.bf16.msra.mxu0 %v3042
        %3057 = vmatprep.subr.bf16.mxu0 0
        %3058 = vmatpush1.bf16.msra.mxu0 %v3041
        %3059 = vmatprep.subr.bf16.mxu0 0
        %3060 = vmatpush1.bf16.msra.mxu0 %v3040
        %3061 = vmatprep.subr.bf16.mxu0 0
        %3062 = vmatpush1.bf16.msra.mxu0 %v3039
        %3063 = vmatprep.subr.bf16.mxu0 0
        %3064 = vmatpush2.bf16.msra.mxu0 0
        %3065 = vmatprep.subr.bf16.mxu0 0
        %3066 = vmatpush2.bf16.msra.mxu0 0
        %3067 = vmatprep.subr.bf16.mxu0 0
        %3068 = vmatpush2.bf16.msra.mxu0 0
        %3069 = vmatprep.subr.bf16.mxu0 0
        %3070 = vmatpush2.bf16.msra.mxu0 0
        %3071 = vmatprep.subr.bf16.mxu0 0
        %3072 = vmatpush2.bf16.msra.mxu0 0
        %3073 = vmatprep.subr.bf16.mxu0 0
        %3074 = vmatpush2.bf16.msra.mxu0 0
        %3075 = vmatprep.subr.bf16.mxu0 0
        %3076 = vmatpush2.bf16.msra.mxu0 0
        %3077 = vmatprep.subr.bf16.mxu0 0
        %3078 = vmatpush2.bf16.msra.mxu0 0
        %3079 = vmatprep.mubr.bf16.mxu0 0
        %3080 = vmatmul.mubr.bf16.gmra.mxu0 %v2910
        %v3081 = vpop.f32.mrf.mxu0
        %v3082 = vadd.f32 0.0, %v3081
        %v3083 = vpop.f32.mrf.mxu0
        %v3084 = vpop.f32.mrf.mxu0
        %v3085 = vadd.f32 0.0, %v3084
        %v3086 = vpop.f32.mrf.mxu0
        %3087 = vmatprep.mubr.bf16.mxu0 0
        %3088 = vmatmul.mubr.bf16.gmra.mxu0 %v2911
        %v3089 = vpop.f32.mrf.mxu0
        %v3090 = vadd.f32 0.0, %v3089
        %v3091 = vpop.f32.mrf.mxu0
        %v3092 = vpop.f32.mrf.mxu0
        %v3093 = vadd.f32 0.0, %v3092
        %v3094 = vpop.f32.mrf.mxu0
        %3095 = vmatprep.mubr.bf16.mxu0 0
        %3096 = vmatmul.mubr.bf16.gmra.mxu0 %v2912
        %v3097 = vpop.f32.mrf.mxu0
        %v3098 = vadd.f32 0.0, %v3097
        %v3099 = vpop.f32.mrf.mxu0
        %v3100 = vpop.f32.mrf.mxu0
        %v3101 = vadd.f32 0.0, %v3100
        %v3102 = vpop.f32.mrf.mxu0
        %3103 = vmatprep.mubr.bf16.mxu0 0
        %3104 = vmatmul.mubr.bf16.gmra.mxu0 %v2913
        %v3105 = vpop.f32.mrf.mxu0
        %v3106 = vadd.f32 0.0, %v3105
        %v3107 = vpop.f32.mrf.mxu0
        %v3108 = vpop.f32.mrf.mxu0
        %v3109 = vadd.f32 0.0, %v3108
        %v3110 = vpop.f32.mrf.mxu0
        %3111 = vmatprep.mubr.bf16.mxu0 0
        %3112 = vmatmul.mubr.bf16.gmra.mxu0 %v2914
        %v3113 = vpop.f32.mrf.mxu0
        %v3114 = vadd.f32 0.0, %v3113
        %v3115 = vpop.f32.mrf.mxu0
        %v3116 = vpop.f32.mrf.mxu0
        %v3117 = vadd.f32 0.0, %v3116
        %v3118 = vpop.f32.mrf.mxu0
        %3119 = vmatprep.mubr.bf16.mxu0 0
        %3120 = vmatmul.mubr.bf16.gmra.mxu0 %v2915
        %v3121 = vpop.f32.mrf.mxu0
        %v3122 = vadd.f32 0.0, %v3121
        %v3123 = vpop.f32.mrf.mxu0
        %v3124 = vpop.f32.mrf.mxu0
        %v3125 = vadd.f32 0.0, %v3124
        %v3126 = vpop.f32.mrf.mxu0
        %3127 = vmatprep.mubr.bf16.mxu0 0
        %3128 = vmatmul.mubr.bf16.gmra.mxu0 %v2916
        %v3129 = vpop.f32.mrf.mxu0
        %v3130 = vadd.f32 0.0, %v3129
        %v3131 = vpop.f32.mrf.mxu0
        %v3132 = vpop.f32.mrf.mxu0
        %v3133 = vadd.f32 0.0, %v3132
        %v3134 = vpop.f32.mrf.mxu0
        %3135 = vmatprep.mubr.bf16.mxu0 0
        %3136 = vmatmul.mubr.bf16.gmra.mxu0 %v2917
        %v3137 = vpop.f32.mrf.mxu0
        %v3138 = vadd.f32 0.0, %v3137
        %v3139 = vpop.f32.mrf.mxu0
        %v3140 = vpop.f32.mrf.mxu0
        %v3141 = vadd.f32 0.0, %v3140
        %v3142 = vpop.f32.mrf.mxu0
        %3143 = vdwg.mxu0
        %v3144 = vadd.f32 %v2489, %v3082
        %v3145 = vadd.f32 %v2492, %v3085
        %v3146 = vadd.f32 %v2497, %v3090
        %v3147 = vadd.f32 %v2500, %v3093
        %v3148 = vadd.f32 %v2505, %v3098
        %v3149 = vadd.f32 %v2508, %v3101
        %v3150 = vadd.f32 %v2513, %v3106
        %v3151 = vadd.f32 %v2516, %v3109
        %v3152 = vadd.f32 %v2521, %v3114
        %v3153 = vadd.f32 %v2524, %v3117
        %v3154 = vadd.f32 %v2529, %v3122
        %v3155 = vadd.f32 %v2532, %v3125
        %v3156 = vadd.f32 %v2537, %v3130
        %v3157 = vadd.f32 %v2540, %v3133
        %v3158 = vadd.f32 %v2545, %v3138
        %v3159 = vadd.f32 %v2548, %v3141
        %v3160 = vpack.c.bf16 %v3145, %v3144
        %v3161 = vpack.c.bf16 %v3147, %v3146
        %v3162 = vpack.c.bf16 %v3149, %v3148
        %v3163 = vpack.c.bf16 %v3151, %v3150
        %v3164 = vpack.c.bf16 %v3153, %v3152
        %v3165 = vpack.c.bf16 %v3155, %v3154
        %v3166 = vpack.c.bf16 %v3157, %v3156
        %v3167 = vpack.c.bf16 %v3159, %v3158
        %v3168 = vld [vmem:[#allocation8] sm:$0xf]
        %v3169 = vld [vmem:[#allocation8 + $0x4] sm:$0xf]
        %v3170 = vld [vmem:[#allocation8 + $0x8] sm:$0xf]
        %v3171 = vld [vmem:[#allocation8 + $0xc] sm:$0xf]
        %v3172 = vld [vmem:[#allocation8 + $0x10] sm:$0xf]
        %v3173 = vld [vmem:[#allocation8 + $0x14] sm:$0xf]
        %v3174 = vld [vmem:[#allocation8 + $0x18] sm:$0xf]
        %v3175 = vld [vmem:[#allocation8 + $0x1c] sm:$0xf]
        %v3176 = vld [vmem:[#allocation8 + $0x20] sm:$0xf]
        %v3177 = vld [vmem:[#allocation8 + $0x24] sm:$0xf]
        %v3178 = vld [vmem:[#allocation8 + $0x28] sm:$0xf]
        %v3179 = vld [vmem:[#allocation8 + $0x2c] sm:$0xf]
        %v3180 = vld [vmem:[#allocation8 + $0x30] sm:$0xf]
        %v3181 = vld [vmem:[#allocation8 + $0x34] sm:$0xf]
        %v3182 = vld [vmem:[#allocation8 + $0x38] sm:$0xf]
        %v3183 = vld [vmem:[#allocation8 + $0x3c] sm:$0xf]
        %v3184 = vld [vmem:[%s9] sm:$0x1]
        %v3186 = vlaneseq
        %v3187 = vshrl.u32 %v3186, 7
        %v3188 = vsub.s32 0, %v3187
        %v3189 = vrot.slane %v3184, %v3188
        %v3207 = vunpack.c.l.b16 %v3168
        %v3208 = vunpack.c.l.b16 %v3169
        %v3209 = vunpack.c.l.b16 %v3170
        %v3210 = vunpack.c.l.b16 %v3171
        %v3211 = vunpack.c.l.b16 %v3172
        %v3212 = vunpack.c.l.b16 %v3173
        %v3213 = vunpack.c.l.b16 %v3174
        %v3214 = vunpack.c.l.b16 %v3175
        %v3215 = vunpack.c.l.b16 %v3176
        %v3216 = vunpack.c.l.b16 %v3177
        %v3217 = vunpack.c.l.b16 %v3178
        %v3218 = vunpack.c.l.b16 %v3179
        %v3219 = vunpack.c.l.b16 %v3180
        %v3220 = vunpack.c.l.b16 %v3181
        %v3221 = vunpack.c.l.b16 %v3182
        %v3222 = vunpack.c.l.b16 %v3183
        %v3223 = vpack.c.b16 %v3208, %v3207
        %v3224 = vpack.c.b16 %v3210, %v3209
        %v3225 = vpack.c.b16 %v3212, %v3211
        %v3226 = vpack.c.b16 %v3214, %v3213
        %v3227 = vpack.c.b16 %v3216, %v3215
        %v3228 = vpack.c.b16 %v3218, %v3217
        %v3229 = vpack.c.b16 %v3220, %v3219
        %v3230 = vpack.c.b16 %v3222, %v3221
        %3239 = vmatprep.subr.bf16.mxu0 0
        %3240 = vmatpush1.bf16.msra.mxu0 %v3230
        %3241 = vmatprep.subr.bf16.mxu0 0
        %3242 = vmatpush1.bf16.msra.mxu0 %v3229
        %3243 = vmatprep.subr.bf16.mxu0 0
        %3244 = vmatpush1.bf16.msra.mxu0 %v3228
        %3245 = vmatprep.subr.bf16.mxu0 0
        %3246 = vmatpush1.bf16.msra.mxu0 %v3227
        %3247 = vmatprep.subr.bf16.mxu0 0
        %3248 = vmatpush1.bf16.msra.mxu0 %v3226
        %3249 = vmatprep.subr.bf16.mxu0 0
        %3250 = vmatpush1.bf16.msra.mxu0 %v3225
        %3251 = vmatprep.subr.bf16.mxu0 0
        %3252 = vmatpush1.bf16.msra.mxu0 %v3224
        %3253 = vmatprep.subr.bf16.mxu0 0
        %3254 = vmatpush1.bf16.msra.mxu0 %v3223
        %3255 = vmatprep.subr.bf16.mxu0 0
        %3256 = vmatpush2.bf16.msra.mxu0 0
        %3257 = vmatprep.subr.bf16.mxu0 0
        %3258 = vmatpush2.bf16.msra.mxu0 0
        %3259 = vmatprep.subr.bf16.mxu0 0
        %3260 = vmatpush2.bf16.msra.mxu0 0
        %3261 = vmatprep.subr.bf16.mxu0 0
        %3262 = vmatpush2.bf16.msra.mxu0 0
        %3263 = vmatprep.subr.bf16.mxu0 0
        %3264 = vmatpush2.bf16.msra.mxu0 0
        %3265 = vmatprep.subr.bf16.mxu0 0
        %3266 = vmatpush2.bf16.msra.mxu0 0
        %3267 = vmatprep.subr.bf16.mxu0 0
        %3268 = vmatpush2.bf16.msra.mxu0 0
        %3269 = vmatprep.subr.bf16.mxu0 0
        %3270 = vmatpush2.bf16.msra.mxu0 0
        %3271 = vmatprep.mubr.bf16.mxu0 0
        %3272 = vmatmul.mubr.bf16.gmra.mxu0 %v3160
        %v3273 = vpop.f32.mrf.mxu0
        %v3274 = vadd.f32 %v3189, %v3273
        %v3275 = vpop.f32.mrf.mxu0
        %v3276 = vpop.f32.mrf.mxu0
        %v3277 = vadd.f32 %v3189, %v3276
        %v3278 = vpop.f32.mrf.mxu0
        %3279 = vmatprep.mubr.bf16.mxu0 0
        %3280 = vmatmul.mubr.bf16.gmra.mxu0 %v3161
        %v3281 = vpop.f32.mrf.mxu0
        %v3282 = vadd.f32 %v3189, %v3281
        %v3283 = vpop.f32.mrf.mxu0
        %v3284 = vpop.f32.mrf.mxu0
        %v3285 = vadd.f32 %v3189, %v3284
        %v3286 = vpop.f32.mrf.mxu0
        %3287 = vmatprep.mubr.bf16.mxu0 0
        %3288 = vmatmul.mubr.bf16.gmra.mxu0 %v3162
        %v3289 = vpop.f32.mrf.mxu0
        %v3290 = vadd.f32 %v3189, %v3289
        %v3291 = vpop.f32.mrf.mxu0
        %v3292 = vpop.f32.mrf.mxu0
        %v3293 = vadd.f32 %v3189, %v3292
        %v3294 = vpop.f32.mrf.mxu0
        %3295 = vmatprep.mubr.bf16.mxu0 0
        %3296 = vmatmul.mubr.bf16.gmra.mxu0 %v3163
        %v3297 = vpop.f32.mrf.mxu0
        %v3298 = vadd.f32 %v3189, %v3297
        %v3299 = vpop.f32.mrf.mxu0
        %v3300 = vpop.f32.mrf.mxu0
        %v3301 = vadd.f32 %v3189, %v3300
        %v3302 = vpop.f32.mrf.mxu0
        %3303 = vmatprep.mubr.bf16.mxu0 0
        %3304 = vmatmul.mubr.bf16.gmra.mxu0 %v3164
        %v3305 = vpop.f32.mrf.mxu0
        %v3306 = vadd.f32 %v3189, %v3305
        %v3307 = vpop.f32.mrf.mxu0
        %v3308 = vpop.f32.mrf.mxu0
        %v3309 = vadd.f32 %v3189, %v3308
        %v3310 = vpop.f32.mrf.mxu0
        %3311 = vmatprep.mubr.bf16.mxu0 0
        %3312 = vmatmul.mubr.bf16.gmra.mxu0 %v3165
        %v3313 = vpop.f32.mrf.mxu0
        %v3314 = vadd.f32 %v3189, %v3313
        %v3315 = vpop.f32.mrf.mxu0
        %v3316 = vpop.f32.mrf.mxu0
        %v3317 = vadd.f32 %v3189, %v3316
        %v3318 = vpop.f32.mrf.mxu0
        %3319 = vmatprep.mubr.bf16.mxu0 0
        %3320 = vmatmul.mubr.bf16.gmra.mxu0 %v3166
        %v3321 = vpop.f32.mrf.mxu0
        %v3322 = vadd.f32 %v3189, %v3321
        %v3323 = vpop.f32.mrf.mxu0
        %v3324 = vpop.f32.mrf.mxu0
        %v3325 = vadd.f32 %v3189, %v3324
        %v3326 = vpop.f32.mrf.mxu0
        %3327 = vmatprep.mubr.bf16.mxu0 0
        %3328 = vmatmul.mubr.bf16.gmra.mxu0 %v3167
        %v3329 = vpop.f32.mrf.mxu0
        %v3330 = vadd.f32 %v3189, %v3329
        %v3331 = vpop.f32.mrf.mxu0
        %v3332 = vpop.f32.mrf.mxu0
        %v3333 = vadd.f32 %v3189, %v3332
        %v3334 = vpop.f32.mrf.mxu0
        %3335 = vdwg.mxu0
        %v3336 = vmax.f32 %v3274, 0.0
        %v3337 = vmax.f32 %v3277, 0.0
        %v3338 = vmax.f32 %v3282, 0.0
        %v3339 = vmax.f32 %v3285, 0.0
        %v3340 = vmax.f32 %v3290, 0.0
        %v3341 = vmax.f32 %v3293, 0.0
        %v3342 = vmax.f32 %v3298, 0.0
        %v3343 = vmax.f32 %v3301, 0.0
        %v3344 = vmax.f32 %v3306, 0.0
        %v3345 = vmax.f32 %v3309, 0.0
        %v3346 = vmax.f32 %v3314, 0.0
        %v3347 = vmax.f32 %v3317, 0.0
        %v3348 = vmax.f32 %v3322, 0.0
        %v3349 = vmax.f32 %v3325, 0.0
        %v3350 = vmax.f32 %v3330, 0.0
        %v3351 = vmax.f32 %v3333, 0.0
        %v3352 = vpack.c.bf16 %v3337, %v3336
        %v3353 = vpack.c.bf16 %v3339, %v3338
        %v3354 = vpack.c.bf16 %v3341, %v3340
        %v3355 = vpack.c.bf16 %v3343, %v3342
        %v3356 = vpack.c.bf16 %v3345, %v3344
        %v3357 = vpack.c.bf16 %v3347, %v3346
        %v3358 = vpack.c.bf16 %v3349, %v3348
        %v3359 = vpack.c.bf16 %v3351, %v3350
        %v3360 = vld [vmem:[#allocation9] sm:$0xf]
        %v3361 = vld [vmem:[#allocation9 + $0x4] sm:$0xf]
        %v3362 = vld [vmem:[#allocation9 + $0x8] sm:$0xf]
        %v3363 = vld [vmem:[#allocation9 + $0xc] sm:$0xf]
        %v3364 = vld [vmem:[#allocation9 + $0x10] sm:$0xf]
        %v3365 = vld [vmem:[#allocation9 + $0x14] sm:$0xf]
        %v3366 = vld [vmem:[#allocation9 + $0x18] sm:$0xf]
        %v3367 = vld [vmem:[#allocation9 + $0x1c] sm:$0xf]
        %v3368 = vld [vmem:[#allocation9 + $0x20] sm:$0xf]
        %v3369 = vld [vmem:[#allocation9 + $0x24] sm:$0xf]
        %v3370 = vld [vmem:[#allocation9 + $0x28] sm:$0xf]
        %v3371 = vld [vmem:[#allocation9 + $0x2c] sm:$0xf]
        %v3372 = vld [vmem:[#allocation9 + $0x30] sm:$0xf]
        %v3373 = vld [vmem:[#allocation9 + $0x34] sm:$0xf]
        %v3374 = vld [vmem:[#allocation9 + $0x38] sm:$0xf]
        %v3375 = vld [vmem:[#allocation9 + $0x3c] sm:$0xf]
        %v3376 = vld [vmem:[%s11] sm:$0x1]
        %v3378 = vlaneseq
        %v3379 = vshrl.u32 %v3378, 7
        %v3380 = vsub.s32 0, %v3379
        %v3381 = vrot.slane %v3376, %v3380
        %v3399 = vunpack.c.l.b16 %v3360
        %v3400 = vunpack.c.l.b16 %v3361
        %v3401 = vunpack.c.l.b16 %v3362
        %v3402 = vunpack.c.l.b16 %v3363
        %v3403 = vunpack.c.l.b16 %v3364
        %v3404 = vunpack.c.l.b16 %v3365
        %v3405 = vunpack.c.l.b16 %v3366
        %v3406 = vunpack.c.l.b16 %v3367
        %v3407 = vunpack.c.l.b16 %v3368
        %v3408 = vunpack.c.l.b16 %v3369
        %v3409 = vunpack.c.l.b16 %v3370
        %v3410 = vunpack.c.l.b16 %v3371
        %v3411 = vunpack.c.l.b16 %v3372
        %v3412 = vunpack.c.l.b16 %v3373
        %v3413 = vunpack.c.l.b16 %v3374
        %v3414 = vunpack.c.l.b16 %v3375
        %v3415 = vpack.c.b16 %v3400, %v3399
        %v3416 = vpack.c.b16 %v3402, %v3401
        %v3417 = vpack.c.b16 %v3404, %v3403
        %v3418 = vpack.c.b16 %v3406, %v3405
        %v3419 = vpack.c.b16 %v3408, %v3407
        %v3420 = vpack.c.b16 %v3410, %v3409
        %v3421 = vpack.c.b16 %v3412, %v3411
        %v3422 = vpack.c.b16 %v3414, %v3413
        %3431 = vmatprep.subr.bf16.mxu0 0
        %3432 = vmatpush1.bf16.msra.mxu0 %v3422
        %3433 = vmatprep.subr.bf16.mxu0 0
        %3434 = vmatpush1.bf16.msra.mxu0 %v3421
        %3435 = vmatprep.subr.bf16.mxu0 0
        %3436 = vmatpush1.bf16.msra.mxu0 %v3420
        %3437 = vmatprep.subr.bf16.mxu0 0
        %3438 = vmatpush1.bf16.msra.mxu0 %v3419
        %3439 = vmatprep.subr.bf16.mxu0 0
        %3440 = vmatpush1.bf16.msra.mxu0 %v3418
        %3441 = vmatprep.subr.bf16.mxu0 0
        %3442 = vmatpush1.bf16.msra.mxu0 %v3417
        %3443 = vmatprep.subr.bf16.mxu0 0
        %3444 = vmatpush1.bf16.msra.mxu0 %v3416
        %3445 = vmatprep.subr.bf16.mxu0 0
        %3446 = vmatpush1.bf16.msra.mxu0 %v3415
        %3447 = vmatprep.subr.bf16.mxu0 0
        %3448 = vmatpush2.bf16.msra.mxu0 0
        %3449 = vmatprep.subr.bf16.mxu0 0
        %3450 = vmatpush2.bf16.msra.mxu0 0
        %3451 = vmatprep.subr.bf16.mxu0 0
        %3452 = vmatpush2.bf16.msra.mxu0 0
        %3453 = vmatprep.subr.bf16.mxu0 0
        %3454 = vmatpush2.bf16.msra.mxu0 0
        %3455 = vmatprep.subr.bf16.mxu0 0
        %3456 = vmatpush2.bf16.msra.mxu0 0
        %3457 = vmatprep.subr.bf16.mxu0 0
        %3458 = vmatpush2.bf16.msra.mxu0 0
        %3459 = vmatprep.subr.bf16.mxu0 0
        %3460 = vmatpush2.bf16.msra.mxu0 0
        %3461 = vmatprep.subr.bf16.mxu0 0
        %3462 = vmatpush2.bf16.msra.mxu0 0
        %3463 = vmatprep.mubr.bf16.mxu0 0
        %3464 = vmatmul.mubr.bf16.gmra.mxu0 %v3352
        %v3465 = vpop.f32.mrf.mxu0
        %v3466 = vadd.f32 %v3381, %v3465
        %v3467 = vpop.f32.mrf.mxu0
        %v3468 = vpop.f32.mrf.mxu0
        %v3469 = vadd.f32 %v3381, %v3468
        %v3470 = vpop.f32.mrf.mxu0
        %3471 = vmatprep.mubr.bf16.mxu0 0
        %3472 = vmatmul.mubr.bf16.gmra.mxu0 %v3353
        %v3473 = vpop.f32.mrf.mxu0
        %v3474 = vadd.f32 %v3381, %v3473
        %v3475 = vpop.f32.mrf.mxu0
        %v3476 = vpop.f32.mrf.mxu0
        %v3477 = vadd.f32 %v3381, %v3476
        %v3478 = vpop.f32.mrf.mxu0
        %3479 = vmatprep.mubr.bf16.mxu0 0
        %3480 = vmatmul.mubr.bf16.gmra.mxu0 %v3354
        %v3481 = vpop.f32.mrf.mxu0
        %v3482 = vadd.f32 %v3381, %v3481
        %v3483 = vpop.f32.mrf.mxu0
        %v3484 = vpop.f32.mrf.mxu0
        %v3485 = vadd.f32 %v3381, %v3484
        %v3486 = vpop.f32.mrf.mxu0
        %3487 = vmatprep.mubr.bf16.mxu0 0
        %3488 = vmatmul.mubr.bf16.gmra.mxu0 %v3355
        %v3489 = vpop.f32.mrf.mxu0
        %v3490 = vadd.f32 %v3381, %v3489
        %v3491 = vpop.f32.mrf.mxu0
        %v3492 = vpop.f32.mrf.mxu0
        %v3493 = vadd.f32 %v3381, %v3492
        %v3494 = vpop.f32.mrf.mxu0
        %3495 = vmatprep.mubr.bf16.mxu0 0
        %3496 = vmatmul.mubr.bf16.gmra.mxu0 %v3356
        %v3497 = vpop.f32.mrf.mxu0
        %v3498 = vadd.f32 %v3381, %v3497
        %v3499 = vpop.f32.mrf.mxu0
        %v3500 = vpop.f32.mrf.mxu0
        %v3501 = vadd.f32 %v3381, %v3500
        %v3502 = vpop.f32.mrf.mxu0
        %3503 = vmatprep.mubr.bf16.mxu0 0
        %3504 = vmatmul.mubr.bf16.gmra.mxu0 %v3357
        %v3505 = vpop.f32.mrf.mxu0
        %v3506 = vadd.f32 %v3381, %v3505
        %v3507 = vpop.f32.mrf.mxu0
        %v3508 = vpop.f32.mrf.mxu0
        %v3509 = vadd.f32 %v3381, %v3508
        %v3510 = vpop.f32.mrf.mxu0
        %3511 = vmatprep.mubr.bf16.mxu0 0
        %3512 = vmatmul.mubr.bf16.gmra.mxu0 %v3358
        %v3513 = vpop.f32.mrf.mxu0
        %v3514 = vadd.f32 %v3381, %v3513
        %v3515 = vpop.f32.mrf.mxu0
        %v3516 = vpop.f32.mrf.mxu0
        %v3517 = vadd.f32 %v3381, %v3516
        %v3518 = vpop.f32.mrf.mxu0
        %3519 = vmatprep.mubr.bf16.mxu0 0
        %3520 = vmatmul.mubr.bf16.gmra.mxu0 %v3359
        %v3521 = vpop.f32.mrf.mxu0
        %v3522 = vadd.f32 %v3381, %v3521
        %v3523 = vpop.f32.mrf.mxu0
        %v3524 = vpop.f32.mrf.mxu0
        %v3525 = vadd.f32 %v3381, %v3524
        %v3526 = vpop.f32.mrf.mxu0
        %3527 = vdwg.mxu0
        %v3528 = vmax.f32 %v3466, 0.0
        %v3529 = vmax.f32 %v3469, 0.0
        %v3530 = vmax.f32 %v3474, 0.0
        %v3531 = vmax.f32 %v3477, 0.0
        %v3532 = vmax.f32 %v3482, 0.0
        %v3533 = vmax.f32 %v3485, 0.0
        %v3534 = vmax.f32 %v3490, 0.0
        %v3535 = vmax.f32 %v3493, 0.0
        %v3536 = vmax.f32 %v3498, 0.0
        %v3537 = vmax.f32 %v3501, 0.0
        %v3538 = vmax.f32 %v3506, 0.0
        %v3539 = vmax.f32 %v3509, 0.0
        %v3540 = vmax.f32 %v3514, 0.0
        %v3541 = vmax.f32 %v3517, 0.0
        %v3542 = vmax.f32 %v3522, 0.0
        %v3543 = vmax.f32 %v3525, 0.0
        %v3544 = vpack.c.bf16 %v3529, %v3528
        %v3545 = vpack.c.bf16 %v3531, %v3530
        %v3546 = vpack.c.bf16 %v3533, %v3532
        %v3547 = vpack.c.bf16 %v3535, %v3534
        %v3548 = vpack.c.bf16 %v3537, %v3536
        %v3549 = vpack.c.bf16 %v3539, %v3538
        %v3550 = vpack.c.bf16 %v3541, %v3540
        %v3551 = vpack.c.bf16 %v3543, %v3542
        %3552 = vmatprep.subr.bf16.mxu0 0
        %3553 = vmatpush1.bf16.msra.mxu0 %v3551
        %3554 = vmatprep.subr.bf16.mxu0 0
        %3555 = vmatpush1.bf16.msra.mxu0 %v3550
        %3556 = vmatprep.subr.bf16.mxu0 0
        %3557 = vmatpush1.bf16.msra.mxu0 %v3549
        %3558 = vmatprep.subr.bf16.mxu0 0
        %3559 = vmatpush1.bf16.msra.mxu0 %v3548
        %3560 = vmatprep.subr.bf16.mxu0 0
        %3561 = vmatpush1.bf16.msra.mxu0 %v3547
        %3562 = vmatprep.subr.bf16.mxu0 0
        %3563 = vmatpush1.bf16.msra.mxu0 %v3546
        %3564 = vmatprep.subr.bf16.mxu0 0
        %3565 = vmatpush1.bf16.msra.mxu0 %v3545
        %3566 = vmatprep.subr.bf16.mxu0 0
        %3567 = vmatpush1.bf16.msra.mxu0 %v3544
        %3568 = vmatprep.subr.bf16.mxu0 0
        %3569 = vmatpush2.bf16.msra.mxu0 0
        %3570 = vmatprep.subr.bf16.mxu0 0
        %3571 = vmatpush2.bf16.msra.mxu0 0
        %3572 = vmatprep.subr.bf16.mxu0 0
        %3573 = vmatpush2.bf16.msra.mxu0 0
        %3574 = vmatprep.subr.bf16.mxu0 0
        %3575 = vmatpush2.bf16.msra.mxu0 0
        %3576 = vmatprep.subr.bf16.mxu0 0
        %3577 = vmatpush2.bf16.msra.mxu0 0
        %3578 = vmatprep.subr.bf16.mxu0 0
        %3579 = vmatpush2.bf16.msra.mxu0 0
        %3580 = vmatprep.subr.bf16.mxu0 0
        %3581 = vmatpush2.bf16.msra.mxu0 0
        %3582 = vmatprep.subr.bf16.mxu0 0
        %3583 = vmatpush2.bf16.msra.mxu0 0
        %3584 = vmatprep.mubr.bf16.mxu0 0
        %3585 = vmatmul.mubr.bf16.gmra.mxu0 %v2849
        %v3586 = vpop.f32.mrf.mxu0
        %v3587 = vadd.f32 %v2705, %v3586
        %v3588 = vpop.f32.mrf.mxu0
        %v3589 = vpop.f32.mrf.mxu0
        %v3590 = vadd.f32 %v2708, %v3589
        %v3591 = vpop.f32.mrf.mxu0
        %3592 = vmatprep.mubr.bf16.mxu0 0
        %3593 = vmatmul.mubr.bf16.gmra.mxu0 %v2850
        %v3594 = vpop.f32.mrf.mxu0
        %v3595 = vadd.f32 %v2713, %v3594
        %v3596 = vpop.f32.mrf.mxu0
        %v3597 = vpop.f32.mrf.mxu0
        %v3598 = vadd.f32 %v2716, %v3597
        %v3599 = vpop.f32.mrf.mxu0
        %3600 = vmatprep.mubr.bf16.mxu0 0
        %3601 = vmatmul.mubr.bf16.gmra.mxu0 %v2851
        %v3602 = vpop.f32.mrf.mxu0
        %v3603 = vadd.f32 %v2721, %v3602
        %v3604 = vpop.f32.mrf.mxu0
        %v3605 = vpop.f32.mrf.mxu0
        %v3606 = vadd.f32 %v2724, %v3605
        %v3607 = vpop.f32.mrf.mxu0
        %3608 = vmatprep.mubr.bf16.mxu0 0
        %3609 = vmatmul.mubr.bf16.gmra.mxu0 %v2852
        %v3610 = vpop.f32.mrf.mxu0
        %v3611 = vadd.f32 %v2729, %v3610
        %v3612 = vpop.f32.mrf.mxu0
        %v3613 = vpop.f32.mrf.mxu0
        %v3614 = vadd.f32 %v2732, %v3613
        %v3615 = vpop.f32.mrf.mxu0
        %3616 = vmatprep.mubr.bf16.mxu0 0
        %3617 = vmatmul.mubr.bf16.gmra.mxu0 %v2853
        %v3618 = vpop.f32.mrf.mxu0
        %v3619 = vadd.f32 %v2737, %v3618
        %v3620 = vpop.f32.mrf.mxu0
        %v3621 = vpop.f32.mrf.mxu0
        %v3622 = vadd.f32 %v2740, %v3621
        %v3623 = vpop.f32.mrf.mxu0
        %3624 = vmatprep.mubr.bf16.mxu0 0
        %3625 = vmatmul.mubr.bf16.gmra.mxu0 %v2854
        %v3626 = vpop.f32.mrf.mxu0
        %v3627 = vadd.f32 %v2745, %v3626
        %v3628 = vpop.f32.mrf.mxu0
        %v3629 = vpop.f32.mrf.mxu0
        %v3630 = vadd.f32 %v2748, %v3629
        %v3631 = vpop.f32.mrf.mxu0
        %3632 = vmatprep.mubr.bf16.mxu0 0
        %3633 = vmatmul.mubr.bf16.gmra.mxu0 %v2855
        %v3634 = vpop.f32.mrf.mxu0
        %v3635 = vadd.f32 %v2753, %v3634
        %v3636 = vpop.f32.mrf.mxu0
        %v3637 = vpop.f32.mrf.mxu0
        %v3638 = vadd.f32 %v2756, %v3637
        %v3639 = vpop.f32.mrf.mxu0
        %3640 = vmatprep.mubr.bf16.mxu0 0
        %3641 = vmatmul.mubr.bf16.gmra.mxu0 %v2856
        %v3642 = vpop.f32.mrf.mxu0
        %v3643 = vadd.f32 %v2761, %v3642
        %v3644 = vpop.f32.mrf.mxu0
        %v3645 = vpop.f32.mrf.mxu0
        %v3646 = vadd.f32 %v2764, %v3645
        %v3647 = vpop.f32.mrf.mxu0
        %3648 = vdwg.mxu0
        %v3649 = vmax.f32 %v3587, 0.0
        %v3650 = vmax.f32 %v3590, 0.0
        %v3651 = vmax.f32 %v3595, 0.0
        %v3652 = vmax.f32 %v3598, 0.0
        %v3653 = vmax.f32 %v3603, 0.0
        %v3654 = vmax.f32 %v3606, 0.0
        %v3655 = vmax.f32 %v3611, 0.0
        %v3656 = vmax.f32 %v3614, 0.0
        %v3657 = vmax.f32 %v3619, 0.0
        %v3658 = vmax.f32 %v3622, 0.0
        %v3659 = vmax.f32 %v3627, 0.0
        %v3660 = vmax.f32 %v3630, 0.0
        %v3661 = vmax.f32 %v3635, 0.0
        %v3662 = vmax.f32 %v3638, 0.0
        %v3663 = vmax.f32 %v3643, 0.0
        %v3664 = vmax.f32 %v3646, 0.0
        %v3665 = vpack.c.bf16 %v3650, %v3649
        %v3666 = vpack.c.bf16 %v3652, %v3651
        %v3667 = vpack.c.bf16 %v3654, %v3653
        %v3668 = vpack.c.bf16 %v3656, %v3655
        %v3669 = vpack.c.bf16 %v3658, %v3657
        %v3670 = vpack.c.bf16 %v3660, %v3659
        %v3671 = vpack.c.bf16 %v3662, %v3661
        %v3672 = vpack.c.bf16 %v3664, %v3663
        %3673 = vmatprep.subr.bf16.mxu0 0
        %3674 = vmatpush1.bf16.msra.mxu0 %v3672
        %3675 = vmatprep.subr.bf16.mxu0 0
        %3676 = vmatpush1.bf16.msra.mxu0 %v3671
        %3677 = vmatprep.subr.bf16.mxu0 0
        %3678 = vmatpush1.bf16.msra.mxu0 %v3670
        %3679 = vmatprep.subr.bf16.mxu0 0
        %3680 = vmatpush1.bf16.msra.mxu0 %v3669
        %3681 = vmatprep.subr.bf16.mxu0 0
        %3682 = vmatpush1.bf16.msra.mxu0 %v3668
        %3683 = vmatprep.subr.bf16.mxu0 0
        %3684 = vmatpush1.bf16.msra.mxu0 %v3667
        %3685 = vmatprep.subr.bf16.mxu0 0
        %3686 = vmatpush1.bf16.msra.mxu0 %v3666
        %3687 = vmatprep.subr.bf16.mxu0 0
        %3688 = vmatpush1.bf16.msra.mxu0 %v3665
        %3689 = vmatprep.subr.bf16.mxu0 0
        %3690 = vmatpush2.bf16.msra.mxu0 0
        %3691 = vmatprep.subr.bf16.mxu0 0
        %3692 = vmatpush2.bf16.msra.mxu0 0
        %3693 = vmatprep.subr.bf16.mxu0 0
        %3694 = vmatpush2.bf16.msra.mxu0 0
        %3695 = vmatprep.subr.bf16.mxu0 0
        %3696 = vmatpush2.bf16.msra.mxu0 0
        %3697 = vmatprep.subr.bf16.mxu0 0
        %3698 = vmatpush2.bf16.msra.mxu0 0
        %3699 = vmatprep.subr.bf16.mxu0 0
        %3700 = vmatpush2.bf16.msra.mxu0 0
        %3701 = vmatprep.subr.bf16.mxu0 0
        %3702 = vmatpush2.bf16.msra.mxu0 0
        %3703 = vmatprep.subr.bf16.mxu0 0
        %3704 = vmatpush2.bf16.msra.mxu0 0
        %3705 = vmatprep.mubr.bf16.mxu0 0
        %3706 = vmatmul.mubr.bf16.gmra.mxu0 %v2910
        %v3707 = vpop.f32.mrf.mxu0
        %v3708 = vadd.f32 0.0, %v3707
        %v3709 = vpop.f32.mrf.mxu0
        %v3710 = vpop.f32.mrf.mxu0
        %v3711 = vadd.f32 0.0, %v3710
        %v3712 = vpop.f32.mrf.mxu0
        %3713 = vmatprep.mubr.bf16.mxu0 0
        %3714 = vmatmul.mubr.bf16.gmra.mxu0 %v2911
        %v3715 = vpop.f32.mrf.mxu0
        %v3716 = vadd.f32 0.0, %v3715
        %v3717 = vpop.f32.mrf.mxu0
        %v3718 = vpop.f32.mrf.mxu0
        %v3719 = vadd.f32 0.0, %v3718
        %v3720 = vpop.f32.mrf.mxu0
        %3721 = vmatprep.mubr.bf16.mxu0 0
        %3722 = vmatmul.mubr.bf16.gmra.mxu0 %v2912
        %v3723 = vpop.f32.mrf.mxu0
        %v3724 = vadd.f32 0.0, %v3723
        %v3725 = vpop.f32.mrf.mxu0
        %v3726 = vpop.f32.mrf.mxu0
        %v3727 = vadd.f32 0.0, %v3726
        %v3728 = vpop.f32.mrf.mxu0
        %3729 = vmatprep.mubr.bf16.mxu0 0
        %3730 = vmatmul.mubr.bf16.gmra.mxu0 %v2913
        %v3731 = vpop.f32.mrf.mxu0
        %v3732 = vadd.f32 0.0, %v3731
        %v3733 = vpop.f32.mrf.mxu0
        %v3734 = vpop.f32.mrf.mxu0
        %v3735 = vadd.f32 0.0, %v3734
        %v3736 = vpop.f32.mrf.mxu0
        %3737 = vmatprep.mubr.bf16.mxu0 0
        %3738 = vmatmul.mubr.bf16.gmra.mxu0 %v2914
        %v3739 = vpop.f32.mrf.mxu0
        %v3740 = vadd.f32 0.0, %v3739
        %v3741 = vpop.f32.mrf.mxu0
        %v3742 = vpop.f32.mrf.mxu0
        %v3743 = vadd.f32 0.0, %v3742
        %v3744 = vpop.f32.mrf.mxu0
        %3745 = vmatprep.mubr.bf16.mxu0 0
        %3746 = vmatmul.mubr.bf16.gmra.mxu0 %v2915
        %v3747 = vpop.f32.mrf.mxu0
        %v3748 = vadd.f32 0.0, %v3747
        %v3749 = vpop.f32.mrf.mxu0
        %v3750 = vpop.f32.mrf.mxu0
        %v3751 = vadd.f32 0.0, %v3750
        %v3752 = vpop.f32.mrf.mxu0
        %3753 = vmatprep.mubr.bf16.mxu0 0
        %3754 = vmatmul.mubr.bf16.gmra.mxu0 %v2916
        %v3755 = vpop.f32.mrf.mxu0
        %v3756 = vadd.f32 0.0, %v3755
        %v3757 = vpop.f32.mrf.mxu0
        %v3758 = vpop.f32.mrf.mxu0
        %v3759 = vadd.f32 0.0, %v3758
        %v3760 = vpop.f32.mrf.mxu0
        %3761 = vmatprep.mubr.bf16.mxu0 0
        %3762 = vmatmul.mubr.bf16.gmra.mxu0 %v2917
        %v3763 = vpop.f32.mrf.mxu0
        %v3764 = vadd.f32 0.0, %v3763
        %v3765 = vpop.f32.mrf.mxu0
        %v3766 = vpop.f32.mrf.mxu0
        %v3767 = vadd.f32 0.0, %v3766
        %v3768 = vpop.f32.mrf.mxu0
        %3769 = vdwg.mxu0
        %v3770 = vadd.f32 %v3528, %v3708
        %v3771 = vadd.f32 %v3529, %v3711
        %v3772 = vadd.f32 %v3530, %v3716
        %v3773 = vadd.f32 %v3531, %v3719
        %v3774 = vadd.f32 %v3532, %v3724
        %v3775 = vadd.f32 %v3533, %v3727
        %v3776 = vadd.f32 %v3534, %v3732
        %v3777 = vadd.f32 %v3535, %v3735
        %v3778 = vadd.f32 %v3536, %v3740
        %v3779 = vadd.f32 %v3537, %v3743
        %v3780 = vadd.f32 %v3538, %v3748
        %v3781 = vadd.f32 %v3539, %v3751
        %v3782 = vadd.f32 %v3540, %v3756
        %v3783 = vadd.f32 %v3541, %v3759
        %v3784 = vadd.f32 %v3542, %v3764
        %v3785 = vadd.f32 %v3543, %v3767
        %v3786 = vpack.c.bf16 %v3771, %v3770
        %v3787 = vpack.c.bf16 %v3773, %v3772
        %v3788 = vpack.c.bf16 %v3775, %v3774
        %v3789 = vpack.c.bf16 %v3777, %v3776
        %v3790 = vpack.c.bf16 %v3779, %v3778
        %v3791 = vpack.c.bf16 %v3781, %v3780
        %v3792 = vpack.c.bf16 %v3783, %v3782
        %v3793 = vpack.c.bf16 %v3785, %v3784
        %s3794 = scalar_lea.vmem [#allocation8], 64
        %v3795 = vld [vmem:[%s3794] sm:$0xf]
        %v3796 = vld [vmem:[%s3794 + $0x4] sm:$0xf]
        %v3797 = vld [vmem:[%s3794 + $0x8] sm:$0xf]
        %v3798 = vld [vmem:[%s3794 + $0xc] sm:$0xf]
        %v3799 = vld [vmem:[%s3794 + $0x10] sm:$0xf]
        %v3800 = vld [vmem:[%s3794 + $0x14] sm:$0xf]
        %v3801 = vld [vmem:[%s3794 + $0x18] sm:$0xf]
        %v3802 = vld [vmem:[%s3794 + $0x1c] sm:$0xf]
        %v3803 = vld [vmem:[%s3794 + $0x20] sm:$0xf]
        %v3804 = vld [vmem:[%s3794 + $0x24] sm:$0xf]
        %v3805 = vld [vmem:[%s3794 + $0x28] sm:$0xf]
        %v3806 = vld [vmem:[%s3794 + $0x2c] sm:$0xf]
        %v3807 = vld [vmem:[%s3794 + $0x30] sm:$0xf]
        %v3808 = vld [vmem:[%s3794 + $0x34] sm:$0xf]
        %v3809 = vld [vmem:[%s3794 + $0x38] sm:$0xf]
        %v3810 = vld [vmem:[%s3794 + $0x3c] sm:$0xf]
        %s3811 = scalar_lea.vmem %s9, 1
        %v3812 = vld [vmem:[%s3811] sm:$0x1]
        %v3814 = vlaneseq
        %v3815 = vshrl.u32 %v3814, 7
        %v3816 = vsub.s32 0, %v3815
        %v3817 = vrot.slane %v3812, %v3816
        %v3835 = vunpack.c.l.b16 %v3795
        %v3836 = vunpack.c.l.b16 %v3796
        %v3837 = vunpack.c.l.b16 %v3797
        %v3838 = vunpack.c.l.b16 %v3798
        %v3839 = vunpack.c.l.b16 %v3799
        %v3840 = vunpack.c.l.b16 %v3800
        %v3841 = vunpack.c.l.b16 %v3801
        %v3842 = vunpack.c.l.b16 %v3802
        %v3843 = vunpack.c.l.b16 %v3803
        %v3844 = vunpack.c.l.b16 %v3804
        %v3845 = vunpack.c.l.b16 %v3805
        %v3846 = vunpack.c.l.b16 %v3806
        %v3847 = vunpack.c.l.b16 %v3807
        %v3848 = vunpack.c.l.b16 %v3808
        %v3849 = vunpack.c.l.b16 %v3809
        %v3850 = vunpack.c.l.b16 %v3810
        %v3851 = vpack.c.b16 %v3836, %v3835
        %v3852 = vpack.c.b16 %v3838, %v3837
        %v3853 = vpack.c.b16 %v3840, %v3839
        %v3854 = vpack.c.b16 %v3842, %v3841
        %v3855 = vpack.c.b16 %v3844, %v3843
        %v3856 = vpack.c.b16 %v3846, %v3845
        %v3857 = vpack.c.b16 %v3848, %v3847
        %v3858 = vpack.c.b16 %v3850, %v3849
        %3867 = vmatprep.subr.bf16.mxu0 0
        %3868 = vmatpush1.bf16.msra.mxu0 %v3858
        %3869 = vmatprep.subr.bf16.mxu0 0
        %3870 = vmatpush1.bf16.msra.mxu0 %v3857
        %3871 = vmatprep.subr.bf16.mxu0 0
        %3872 = vmatpush1.bf16.msra.mxu0 %v3856
        %3873 = vmatprep.subr.bf16.mxu0 0
        %3874 = vmatpush1.bf16.msra.mxu0 %v3855
        %3875 = vmatprep.subr.bf16.mxu0 0
        %3876 = vmatpush1.bf16.msra.mxu0 %v3854
        %3877 = vmatprep.subr.bf16.mxu0 0
        %3878 = vmatpush1.bf16.msra.mxu0 %v3853
        %3879 = vmatprep.subr.bf16.mxu0 0
        %3880 = vmatpush1.bf16.msra.mxu0 %v3852
        %3881 = vmatprep.subr.bf16.mxu0 0
        %3882 = vmatpush1.bf16.msra.mxu0 %v3851
        %3883 = vmatprep.subr.bf16.mxu0 0
        %3884 = vmatpush2.bf16.msra.mxu0 0
        %3885 = vmatprep.subr.bf16.mxu0 0
        %3886 = vmatpush2.bf16.msra.mxu0 0
        %3887 = vmatprep.subr.bf16.mxu0 0
        %3888 = vmatpush2.bf16.msra.mxu0 0
        %3889 = vmatprep.subr.bf16.mxu0 0
        %3890 = vmatpush2.bf16.msra.mxu0 0
        %3891 = vmatprep.subr.bf16.mxu0 0
        %3892 = vmatpush2.bf16.msra.mxu0 0
        %3893 = vmatprep.subr.bf16.mxu0 0
        %3894 = vmatpush2.bf16.msra.mxu0 0
        %3895 = vmatprep.subr.bf16.mxu0 0
        %3896 = vmatpush2.bf16.msra.mxu0 0
        %3897 = vmatprep.subr.bf16.mxu0 0
        %3898 = vmatpush2.bf16.msra.mxu0 0
        %3899 = vmatprep.mubr.bf16.mxu0 0
        %3900 = vmatmul.mubr.bf16.gmra.mxu0 %v3786
        %v3901 = vpop.f32.mrf.mxu0
        %v3902 = vadd.f32 %v3817, %v3901
        %v3903 = vpop.f32.mrf.mxu0
        %v3904 = vpop.f32.mrf.mxu0
        %v3905 = vadd.f32 %v3817, %v3904
        %v3906 = vpop.f32.mrf.mxu0
        %3907 = vmatprep.mubr.bf16.mxu0 0
        %3908 = vmatmul.mubr.bf16.gmra.mxu0 %v3787
        %v3909 = vpop.f32.mrf.mxu0
        %v3910 = vadd.f32 %v3817, %v3909
        %v3911 = vpop.f32.mrf.mxu0
        %v3912 = vpop.f32.mrf.mxu0
        %v3913 = vadd.f32 %v3817, %v3912
        %v3914 = vpop.f32.mrf.mxu0
        %3915 = vmatprep.mubr.bf16.mxu0 0
        %3916 = vmatmul.mubr.bf16.gmra.mxu0 %v3788
        %v3917 = vpop.f32.mrf.mxu0
        %v3918 = vadd.f32 %v3817, %v3917
        %v3919 = vpop.f32.mrf.mxu0
        %v3920 = vpop.f32.mrf.mxu0
        %v3921 = vadd.f32 %v3817, %v3920
        %v3922 = vpop.f32.mrf.mxu0
        %3923 = vmatprep.mubr.bf16.mxu0 0
        %3924 = vmatmul.mubr.bf16.gmra.mxu0 %v3789
        %v3925 = vpop.f32.mrf.mxu0
        %v3926 = vadd.f32 %v3817, %v3925
        %v3927 = vpop.f32.mrf.mxu0
        %v3928 = vpop.f32.mrf.mxu0
        %v3929 = vadd.f32 %v3817, %v3928
        %v3930 = vpop.f32.mrf.mxu0
        %3931 = vmatprep.mubr.bf16.mxu0 0
        %3932 = vmatmul.mubr.bf16.gmra.mxu0 %v3790
        %v3933 = vpop.f32.mrf.mxu0
        %v3934 = vadd.f32 %v3817, %v3933
        %v3935 = vpop.f32.mrf.mxu0
        %v3936 = vpop.f32.mrf.mxu0
        %v3937 = vadd.f32 %v3817, %v3936
        %v3938 = vpop.f32.mrf.mxu0
        %3939 = vmatprep.mubr.bf16.mxu0 0
        %3940 = vmatmul.mubr.bf16.gmra.mxu0 %v3791
        %v3941 = vpop.f32.mrf.mxu0
        %v3942 = vadd.f32 %v3817, %v3941
        %v3943 = vpop.f32.mrf.mxu0
        %v3944 = vpop.f32.mrf.mxu0
        %v3945 = vadd.f32 %v3817, %v3944
        %v3946 = vpop.f32.mrf.mxu0
        %3947 = vmatprep.mubr.bf16.mxu0 0
        %3948 = vmatmul.mubr.bf16.gmra.mxu0 %v3792
        %v3949 = vpop.f32.mrf.mxu0
        %v3950 = vadd.f32 %v3817, %v3949
        %v3951 = vpop.f32.mrf.mxu0
        %v3952 = vpop.f32.mrf.mxu0
        %v3953 = vadd.f32 %v3817, %v3952
        %v3954 = vpop.f32.mrf.mxu0
        %3955 = vmatprep.mubr.bf16.mxu0 0
        %3956 = vmatmul.mubr.bf16.gmra.mxu0 %v3793
        %v3957 = vpop.f32.mrf.mxu0
        %v3958 = vadd.f32 %v3817, %v3957
        %v3959 = vpop.f32.mrf.mxu0
        %v3960 = vpop.f32.mrf.mxu0
        %v3961 = vadd.f32 %v3817, %v3960
        %v3962 = vpop.f32.mrf.mxu0
        %3963 = vdwg.mxu0
        %v3964 = vmax.f32 %v3902, 0.0
        %v3965 = vmax.f32 %v3905, 0.0
        %v3966 = vmax.f32 %v3910, 0.0
        %v3967 = vmax.f32 %v3913, 0.0
        %v3968 = vmax.f32 %v3918, 0.0
        %v3969 = vmax.f32 %v3921, 0.0
        %v3970 = vmax.f32 %v3926, 0.0
        %v3971 = vmax.f32 %v3929, 0.0
        %v3972 = vmax.f32 %v3934, 0.0
        %v3973 = vmax.f32 %v3937, 0.0
        %v3974 = vmax.f32 %v3942, 0.0
        %v3975 = vmax.f32 %v3945, 0.0
        %v3976 = vmax.f32 %v3950, 0.0
        %v3977 = vmax.f32 %v3953, 0.0
        %v3978 = vmax.f32 %v3958, 0.0
        %v3979 = vmax.f32 %v3961, 0.0
        %v3980 = vpack.c.bf16 %v3965, %v3964
        %v3981 = vpack.c.bf16 %v3967, %v3966
        %v3982 = vpack.c.bf16 %v3969, %v3968
        %v3983 = vpack.c.bf16 %v3971, %v3970
        %v3984 = vpack.c.bf16 %v3973, %v3972
        %v3985 = vpack.c.bf16 %v3975, %v3974
        %v3986 = vpack.c.bf16 %v3977, %v3976
        %v3987 = vpack.c.bf16 %v3979, %v3978
        %s3988 = scalar_lea.vmem [#allocation9], 64
        %v3989 = vld [vmem:[%s3988] sm:$0xf]
        %v3990 = vld [vmem:[%s3988 + $0x4] sm:$0xf]
        %v3991 = vld [vmem:[%s3988 + $0x8] sm:$0xf]
        %v3992 = vld [vmem:[%s3988 + $0xc] sm:$0xf]
        %v3993 = vld [vmem:[%s3988 + $0x10] sm:$0xf]
        %v3994 = vld [vmem:[%s3988 + $0x14] sm:$0xf]
        %v3995 = vld [vmem:[%s3988 + $0x18] sm:$0xf]
        %v3996 = vld [vmem:[%s3988 + $0x1c] sm:$0xf]
        %v3997 = vld [vmem:[%s3988 + $0x20] sm:$0xf]
        %v3998 = vld [vmem:[%s3988 + $0x24] sm:$0xf]
        %v3999 = vld [vmem:[%s3988 + $0x28] sm:$0xf]
        %v4000 = vld [vmem:[%s3988 + $0x2c] sm:$0xf]
        %v4001 = vld [vmem:[%s3988 + $0x30] sm:$0xf]
        %v4002 = vld [vmem:[%s3988 + $0x34] sm:$0xf]
        %v4003 = vld [vmem:[%s3988 + $0x38] sm:$0xf]
        %v4004 = vld [vmem:[%s3988 + $0x3c] sm:$0xf]
        %s4005 = scalar_lea.vmem %s11, 1
        %v4006 = vld [vmem:[%s4005] sm:$0x1]
        %v4008 = vlaneseq
        %v4009 = vshrl.u32 %v4008, 7
        %v4010 = vsub.s32 0, %v4009
        %v4011 = vrot.slane %v4006, %v4010
        %v4029 = vunpack.c.l.b16 %v3989
        %v4030 = vunpack.c.l.b16 %v3990
        %v4031 = vunpack.c.l.b16 %v3991
        %v4032 = vunpack.c.l.b16 %v3992
        %v4033 = vunpack.c.l.b16 %v3993
        %v4034 = vunpack.c.l.b16 %v3994
        %v4035 = vunpack.c.l.b16 %v3995
        %v4036 = vunpack.c.l.b16 %v3996
        %v4037 = vunpack.c.l.b16 %v3997
        %v4038 = vunpack.c.l.b16 %v3998
        %v4039 = vunpack.c.l.b16 %v3999
        %v4040 = vunpack.c.l.b16 %v4000
        %v4041 = vunpack.c.l.b16 %v4001
        %v4042 = vunpack.c.l.b16 %v4002
        %v4043 = vunpack.c.l.b16 %v4003
        %v4044 = vunpack.c.l.b16 %v4004
        %v4045 = vpack.c.b16 %v4030, %v4029
        %v4046 = vpack.c.b16 %v4032, %v4031
        %v4047 = vpack.c.b16 %v4034, %v4033
        %v4048 = vpack.c.b16 %v4036, %v4035
        %v4049 = vpack.c.b16 %v4038, %v4037
        %v4050 = vpack.c.b16 %v4040, %v4039
        %v4051 = vpack.c.b16 %v4042, %v4041
        %v4052 = vpack.c.b16 %v4044, %v4043
        %4061 = vmatprep.subr.bf16.mxu0 0
        %4062 = vmatpush1.bf16.msra.mxu0 %v4052
        %4063 = vmatprep.subr.bf16.mxu0 0
        %4064 = vmatpush1.bf16.msra.mxu0 %v4051
        %4065 = vmatprep.subr.bf16.mxu0 0
        %4066 = vmatpush1.bf16.msra.mxu0 %v4050
        %4067 = vmatprep.subr.bf16.mxu0 0
        %4068 = vmatpush1.bf16.msra.mxu0 %v4049
        %4069 = vmatprep.subr.bf16.mxu0 0
        %4070 = vmatpush1.bf16.msra.mxu0 %v4048
        %4071 = vmatprep.subr.bf16.mxu0 0
        %4072 = vmatpush1.bf16.msra.mxu0 %v4047
        %4073 = vmatprep.subr.bf16.mxu0 0
        %4074 = vmatpush1.bf16.msra.mxu0 %v4046
        %4075 = vmatprep.subr.bf16.mxu0 0
        %4076 = vmatpush1.bf16.msra.mxu0 %v4045
        %4077 = vmatprep.subr.bf16.mxu0 0
        %4078 = vmatpush2.bf16.msra.mxu0 0
        %4079 = vmatprep.subr.bf16.mxu0 0
        %4080 = vmatpush2.bf16.msra.mxu0 0
        %4081 = vmatprep.subr.bf16.mxu0 0
        %4082 = vmatpush2.bf16.msra.mxu0 0
        %4083 = vmatprep.subr.bf16.mxu0 0
        %4084 = vmatpush2.bf16.msra.mxu0 0
        %4085 = vmatprep.subr.bf16.mxu0 0
        %4086 = vmatpush2.bf16.msra.mxu0 0
        %4087 = vmatprep.subr.bf16.mxu0 0
        %4088 = vmatpush2.bf16.msra.mxu0 0
        %4089 = vmatprep.subr.bf16.mxu0 0
        %4090 = vmatpush2.bf16.msra.mxu0 0
        %4091 = vmatprep.subr.bf16.mxu0 0
        %4092 = vmatpush2.bf16.msra.mxu0 0
        %4093 = vmatprep.mubr.bf16.mxu0 0
        %4094 = vmatmul.mubr.bf16.gmra.mxu0 %v3980
        %v4095 = vpop.f32.mrf.mxu0
        %v4096 = vadd.f32 %v4011, %v4095
        %v4097 = vpop.f32.mrf.mxu0
        %v4098 = vpop.f32.mrf.mxu0
        %v4099 = vadd.f32 %v4011, %v4098
        %v4100 = vpop.f32.mrf.mxu0
        %4101 = vmatprep.mubr.bf16.mxu0 0
        %4102 = vmatmul.mubr.bf16.gmra.mxu0 %v3981
        %v4103 = vpop.f32.mrf.mxu0
        %v4104 = vadd.f32 %v4011, %v4103
        %v4105 = vpop.f32.mrf.mxu0
        %v4106 = vpop.f32.mrf.mxu0
        %v4107 = vadd.f32 %v4011, %v4106
        %v4108 = vpop.f32.mrf.mxu0
        %4109 = vmatprep.mubr.bf16.mxu0 0
        %4110 = vmatmul.mubr.bf16.gmra.mxu0 %v3982
        %v4111 = vpop.f32.mrf.mxu0
        %v4112 = vadd.f32 %v4011, %v4111
        %v4113 = vpop.f32.mrf.mxu0
        %v4114 = vpop.f32.mrf.mxu0
        %v4115 = vadd.f32 %v4011, %v4114
        %v4116 = vpop.f32.mrf.mxu0
        %4117 = vmatprep.mubr.bf16.mxu0 0
        %4118 = vmatmul.mubr.bf16.gmra.mxu0 %v3983
        %v4119 = vpop.f32.mrf.mxu0
        %v4120 = vadd.f32 %v4011, %v4119
        %v4121 = vpop.f32.mrf.mxu0
        %v4122 = vpop.f32.mrf.mxu0
        %v4123 = vadd.f32 %v4011, %v4122
        %v4124 = vpop.f32.mrf.mxu0
        %4125 = vmatprep.mubr.bf16.mxu0 0
        %4126 = vmatmul.mubr.bf16.gmra.mxu0 %v3984
        %v4127 = vpop.f32.mrf.mxu0
        %v4128 = vadd.f32 %v4011, %v4127
        %v4129 = vpop.f32.mrf.mxu0
        %v4130 = vpop.f32.mrf.mxu0
        %v4131 = vadd.f32 %v4011, %v4130
        %v4132 = vpop.f32.mrf.mxu0
        %4133 = vmatprep.mubr.bf16.mxu0 0
        %4134 = vmatmul.mubr.bf16.gmra.mxu0 %v3985
        %v4135 = vpop.f32.mrf.mxu0
        %v4136 = vadd.f32 %v4011, %v4135
        %v4137 = vpop.f32.mrf.mxu0
        %v4138 = vpop.f32.mrf.mxu0
        %v4139 = vadd.f32 %v4011, %v4138
        %v4140 = vpop.f32.mrf.mxu0
        %4141 = vmatprep.mubr.bf16.mxu0 0
        %4142 = vmatmul.mubr.bf16.gmra.mxu0 %v3986
        %v4143 = vpop.f32.mrf.mxu0
        %v4144 = vadd.f32 %v4011, %v4143
        %v4145 = vpop.f32.mrf.mxu0
        %v4146 = vpop.f32.mrf.mxu0
        %v4147 = vadd.f32 %v4011, %v4146
        %v4148 = vpop.f32.mrf.mxu0
        %4149 = vmatprep.mubr.bf16.mxu0 0
        %4150 = vmatmul.mubr.bf16.gmra.mxu0 %v3987
        %v4151 = vpop.f32.mrf.mxu0
        %v4152 = vadd.f32 %v4011, %v4151
        %v4153 = vpop.f32.mrf.mxu0
        %v4154 = vpop.f32.mrf.mxu0
        %v4155 = vadd.f32 %v4011, %v4154
        %v4156 = vpop.f32.mrf.mxu0
        %4157 = vdwg.mxu0
        %v4158 = vmax.f32 %v4096, 0.0
        %v4159 = vmax.f32 %v4099, 0.0
        %v4160 = vmax.f32 %v4104, 0.0
        %v4161 = vmax.f32 %v4107, 0.0
        %v4162 = vmax.f32 %v4112, 0.0
        %v4163 = vmax.f32 %v4115, 0.0
        %v4164 = vmax.f32 %v4120, 0.0
        %v4165 = vmax.f32 %v4123, 0.0
        %v4166 = vmax.f32 %v4128, 0.0
        %v4167 = vmax.f32 %v4131, 0.0
        %v4168 = vmax.f32 %v4136, 0.0
        %v4169 = vmax.f32 %v4139, 0.0
        %v4170 = vmax.f32 %v4144, 0.0
        %v4171 = vmax.f32 %v4147, 0.0
        %v4172 = vmax.f32 %v4152, 0.0
        %v4173 = vmax.f32 %v4155, 0.0
        %v4174 = vpack.c.bf16 %v4159, %v4158
        %v4175 = vpack.c.bf16 %v4161, %v4160
        %v4176 = vpack.c.bf16 %v4163, %v4162
        %v4177 = vpack.c.bf16 %v4165, %v4164
        %v4178 = vpack.c.bf16 %v4167, %v4166
        %v4179 = vpack.c.bf16 %v4169, %v4168
        %v4180 = vpack.c.bf16 %v4171, %v4170
        %v4181 = vpack.c.bf16 %v4173, %v4172
        %4182 = vmatprep.subr.bf16.mxu0 0
        %4183 = vmatpush1.bf16.msra.mxu0 %v4181
        %4184 = vmatprep.subr.bf16.mxu0 0
        %4185 = vmatpush1.bf16.msra.mxu0 %v4180
        %4186 = vmatprep.subr.bf16.mxu0 0
        %4187 = vmatpush1.bf16.msra.mxu0 %v4179
        %4188 = vmatprep.subr.bf16.mxu0 0
        %4189 = vmatpush1.bf16.msra.mxu0 %v4178
        %4190 = vmatprep.subr.bf16.mxu0 0
        %4191 = vmatpush1.bf16.msra.mxu0 %v4177
        %4192 = vmatprep.subr.bf16.mxu0 0
        %4193 = vmatpush1.bf16.msra.mxu0 %v4176
        %4194 = vmatprep.subr.bf16.mxu0 0
        %4195 = vmatpush1.bf16.msra.mxu0 %v4175
        %4196 = vmatprep.subr.bf16.mxu0 0
        %4197 = vmatpush1.bf16.msra.mxu0 %v4174
        %4198 = vmatprep.subr.bf16.mxu0 0
        %4199 = vmatpush2.bf16.msra.mxu0 0
        %4200 = vmatprep.subr.bf16.mxu0 0
        %4201 = vmatpush2.bf16.msra.mxu0 0
        %4202 = vmatprep.subr.bf16.mxu0 0
        %4203 = vmatpush2.bf16.msra.mxu0 0
        %4204 = vmatprep.subr.bf16.mxu0 0
        %4205 = vmatpush2.bf16.msra.mxu0 0
        %4206 = vmatprep.subr.bf16.mxu0 0
        %4207 = vmatpush2.bf16.msra.mxu0 0
        %4208 = vmatprep.subr.bf16.mxu0 0
        %4209 = vmatpush2.bf16.msra.mxu0 0
        %4210 = vmatprep.subr.bf16.mxu0 0
        %4211 = vmatpush2.bf16.msra.mxu0 0
        %4212 = vmatprep.subr.bf16.mxu0 0
        %4213 = vmatpush2.bf16.msra.mxu0 0
        %4214 = vmatprep.mubr.bf16.mxu0 0
        %4215 = vmatmul.mubr.bf16.gmra.mxu0 %v2849
        %v4216 = vpop.f32.mrf.mxu0
        %v4217 = vadd.f32 %v2705, %v4216
        %v4218 = vpop.f32.mrf.mxu0
        %v4219 = vpop.f32.mrf.mxu0
        %v4220 = vadd.f32 %v2708, %v4219
        %v4221 = vpop.f32.mrf.mxu0
        %4222 = vmatprep.mubr.bf16.mxu0 0
        %4223 = vmatmul.mubr.bf16.gmra.mxu0 %v2850
        %v4224 = vpop.f32.mrf.mxu0
        %v4225 = vadd.f32 %v2713, %v4224
        %v4226 = vpop.f32.mrf.mxu0
        %v4227 = vpop.f32.mrf.mxu0
        %v4228 = vadd.f32 %v2716, %v4227
        %v4229 = vpop.f32.mrf.mxu0
        %4230 = vmatprep.mubr.bf16.mxu0 0
        %4231 = vmatmul.mubr.bf16.gmra.mxu0 %v2851
        %v4232 = vpop.f32.mrf.mxu0
        %v4233 = vadd.f32 %v2721, %v4232
        %v4234 = vpop.f32.mrf.mxu0
        %v4235 = vpop.f32.mrf.mxu0
        %v4236 = vadd.f32 %v2724, %v4235
        %v4237 = vpop.f32.mrf.mxu0
        %4238 = vmatprep.mubr.bf16.mxu0 0
        %4239 = vmatmul.mubr.bf16.gmra.mxu0 %v2852
        %v4240 = vpop.f32.mrf.mxu0
        %v4241 = vadd.f32 %v2729, %v4240
        %v4242 = vpop.f32.mrf.mxu0
        %v4243 = vpop.f32.mrf.mxu0
        %v4244 = vadd.f32 %v2732, %v4243
        %v4245 = vpop.f32.mrf.mxu0
        %4246 = vmatprep.mubr.bf16.mxu0 0
        %4247 = vmatmul.mubr.bf16.gmra.mxu0 %v2853
        %v4248 = vpop.f32.mrf.mxu0
        %v4249 = vadd.f32 %v2737, %v4248
        %v4250 = vpop.f32.mrf.mxu0
        %v4251 = vpop.f32.mrf.mxu0
        %v4252 = vadd.f32 %v2740, %v4251
        %v4253 = vpop.f32.mrf.mxu0
        %4254 = vmatprep.mubr.bf16.mxu0 0
        %4255 = vmatmul.mubr.bf16.gmra.mxu0 %v2854
        %v4256 = vpop.f32.mrf.mxu0
        %v4257 = vadd.f32 %v2745, %v4256
        %v4258 = vpop.f32.mrf.mxu0
        %v4259 = vpop.f32.mrf.mxu0
        %v4260 = vadd.f32 %v2748, %v4259
        %v4261 = vpop.f32.mrf.mxu0
        %4262 = vmatprep.mubr.bf16.mxu0 0
        %4263 = vmatmul.mubr.bf16.gmra.mxu0 %v2855
        %v4264 = vpop.f32.mrf.mxu0
        %v4265 = vadd.f32 %v2753, %v4264
        %v4266 = vpop.f32.mrf.mxu0
        %v4267 = vpop.f32.mrf.mxu0
        %v4268 = vadd.f32 %v2756, %v4267
        %v4269 = vpop.f32.mrf.mxu0
        %4270 = vmatprep.mubr.bf16.mxu0 0
        %4271 = vmatmul.mubr.bf16.gmra.mxu0 %v2856
        %v4272 = vpop.f32.mrf.mxu0
        %v4273 = vadd.f32 %v2761, %v4272
        %v4274 = vpop.f32.mrf.mxu0
        %v4275 = vpop.f32.mrf.mxu0
        %v4276 = vadd.f32 %v2764, %v4275
        %v4277 = vpop.f32.mrf.mxu0
        %4278 = vdwg.mxu0
        %v4279 = vmax.f32 %v4217, 0.0
        %v4280 = vmax.f32 %v4220, 0.0
        %v4281 = vmax.f32 %v4225, 0.0
        %v4282 = vmax.f32 %v4228, 0.0
        %v4283 = vmax.f32 %v4233, 0.0
        %v4284 = vmax.f32 %v4236, 0.0
        %v4285 = vmax.f32 %v4241, 0.0
        %v4286 = vmax.f32 %v4244, 0.0
        %v4287 = vmax.f32 %v4249, 0.0
        %v4288 = vmax.f32 %v4252, 0.0
        %v4289 = vmax.f32 %v4257, 0.0
        %v4290 = vmax.f32 %v4260, 0.0
        %v4291 = vmax.f32 %v4265, 0.0
        %v4292 = vmax.f32 %v4268, 0.0
        %v4293 = vmax.f32 %v4273, 0.0
        %v4294 = vmax.f32 %v4276, 0.0
        %v4295 = vpack.c.bf16 %v4280, %v4279
        %v4296 = vpack.c.bf16 %v4282, %v4281
        %v4297 = vpack.c.bf16 %v4284, %v4283
        %v4298 = vpack.c.bf16 %v4286, %v4285
        %v4299 = vpack.c.bf16 %v4288, %v4287
        %v4300 = vpack.c.bf16 %v4290, %v4289
        %v4301 = vpack.c.bf16 %v4292, %v4291
        %v4302 = vpack.c.bf16 %v4294, %v4293
        %4303 = vmatprep.subr.bf16.mxu0 0
        %4304 = vmatpush1.bf16.msra.mxu0 %v4302
        %4305 = vmatprep.subr.bf16.mxu0 0
        %4306 = vmatpush1.bf16.msra.mxu0 %v4301
        %4307 = vmatprep.subr.bf16.mxu0 0
        %4308 = vmatpush1.bf16.msra.mxu0 %v4300
        %4309 = vmatprep.subr.bf16.mxu0 0
        %4310 = vmatpush1.bf16.msra.mxu0 %v4299
        %4311 = vmatprep.subr.bf16.mxu0 0
        %4312 = vmatpush1.bf16.msra.mxu0 %v4298
        %4313 = vmatprep.subr.bf16.mxu0 0
        %4314 = vmatpush1.bf16.msra.mxu0 %v4297
        %4315 = vmatprep.subr.bf16.mxu0 0
        %4316 = vmatpush1.bf16.msra.mxu0 %v4296
        %4317 = vmatprep.subr.bf16.mxu0 0
        %4318 = vmatpush1.bf16.msra.mxu0 %v4295
        %4319 = vmatprep.subr.bf16.mxu0 0
        %4320 = vmatpush2.bf16.msra.mxu0 0
        %4321 = vmatprep.subr.bf16.mxu0 0
        %4322 = vmatpush2.bf16.msra.mxu0 0
        %4323 = vmatprep.subr.bf16.mxu0 0
        %4324 = vmatpush2.bf16.msra.mxu0 0
        %4325 = vmatprep.subr.bf16.mxu0 0
        %4326 = vmatpush2.bf16.msra.mxu0 0
        %4327 = vmatprep.subr.bf16.mxu0 0
        %4328 = vmatpush2.bf16.msra.mxu0 0
        %4329 = vmatprep.subr.bf16.mxu0 0
        %4330 = vmatpush2.bf16.msra.mxu0 0
        %4331 = vmatprep.subr.bf16.mxu0 0
        %4332 = vmatpush2.bf16.msra.mxu0 0
        %4333 = vmatprep.subr.bf16.mxu0 0
        %4334 = vmatpush2.bf16.msra.mxu0 0
        %4335 = vmatprep.mubr.bf16.mxu0 0
        %4336 = vmatmul.mubr.bf16.gmra.mxu0 %v2910
        %v4337 = vpop.f32.mrf.mxu0
        %v4338 = vadd.f32 0.0, %v4337
        %v4339 = vpop.f32.mrf.mxu0
        %v4340 = vpop.f32.mrf.mxu0
        %v4341 = vadd.f32 0.0, %v4340
        %v4342 = vpop.f32.mrf.mxu0
        %4343 = vmatprep.mubr.bf16.mxu0 0
        %4344 = vmatmul.mubr.bf16.gmra.mxu0 %v2911
        %v4345 = vpop.f32.mrf.mxu0
        %v4346 = vadd.f32 0.0, %v4345
        %v4347 = vpop.f32.mrf.mxu0
        %v4348 = vpop.f32.mrf.mxu0
        %v4349 = vadd.f32 0.0, %v4348
        %v4350 = vpop.f32.mrf.mxu0
        %4351 = vmatprep.mubr.bf16.mxu0 0
        %4352 = vmatmul.mubr.bf16.gmra.mxu0 %v2912
        %v4353 = vpop.f32.mrf.mxu0
        %v4354 = vadd.f32 0.0, %v4353
        %v4355 = vpop.f32.mrf.mxu0
        %v4356 = vpop.f32.mrf.mxu0
        %v4357 = vadd.f32 0.0, %v4356
        %v4358 = vpop.f32.mrf.mxu0
        %4359 = vmatprep.mubr.bf16.mxu0 0
        %4360 = vmatmul.mubr.bf16.gmra.mxu0 %v2913
        %v4361 = vpop.f32.mrf.mxu0
        %v4362 = vadd.f32 0.0, %v4361
        %v4363 = vpop.f32.mrf.mxu0
        %v4364 = vpop.f32.mrf.mxu0
        %v4365 = vadd.f32 0.0, %v4364
        %v4366 = vpop.f32.mrf.mxu0
        %4367 = vmatprep.mubr.bf16.mxu0 0
        %4368 = vmatmul.mubr.bf16.gmra.mxu0 %v2914
        %v4369 = vpop.f32.mrf.mxu0
        %v4370 = vadd.f32 0.0, %v4369
        %v4371 = vpop.f32.mrf.mxu0
        %v4372 = vpop.f32.mrf.mxu0
        %v4373 = vadd.f32 0.0, %v4372
        %v4374 = vpop.f32.mrf.mxu0
        %4375 = vmatprep.mubr.bf16.mxu0 0
        %4376 = vmatmul.mubr.bf16.gmra.mxu0 %v2915
        %v4377 = vpop.f32.mrf.mxu0
        %v4378 = vadd.f32 0.0, %v4377
        %v4379 = vpop.f32.mrf.mxu0
        %v4380 = vpop.f32.mrf.mxu0
        %v4381 = vadd.f32 0.0, %v4380
        %v4382 = vpop.f32.mrf.mxu0
        %4383 = vmatprep.mubr.bf16.mxu0 0
        %4384 = vmatmul.mubr.bf16.gmra.mxu0 %v2916
        %v4385 = vpop.f32.mrf.mxu0
        %v4386 = vadd.f32 0.0, %v4385
        %v4387 = vpop.f32.mrf.mxu0
        %v4388 = vpop.f32.mrf.mxu0
        %v4389 = vadd.f32 0.0, %v4388
        %v4390 = vpop.f32.mrf.mxu0
        %4391 = vmatprep.mubr.bf16.mxu0 0
        %4392 = vmatmul.mubr.bf16.gmra.mxu0 %v2917
        %v4393 = vpop.f32.mrf.mxu0
        %v4394 = vadd.f32 0.0, %v4393
        %v4395 = vpop.f32.mrf.mxu0
        %v4396 = vpop.f32.mrf.mxu0
        %v4397 = vadd.f32 0.0, %v4396
        %v4398 = vpop.f32.mrf.mxu0
        %4399 = vdwg.mxu0
        %v4400 = vadd.f32 %v4158, %v4338
        %v4401 = vadd.f32 %v4159, %v4341
        %v4402 = vadd.f32 %v4160, %v4346
        %v4403 = vadd.f32 %v4161, %v4349
        %v4404 = vadd.f32 %v4162, %v4354
        %v4405 = vadd.f32 %v4163, %v4357
        %v4406 = vadd.f32 %v4164, %v4362
        %v4407 = vadd.f32 %v4165, %v4365
        %v4408 = vadd.f32 %v4166, %v4370
        %v4409 = vadd.f32 %v4167, %v4373
        %v4410 = vadd.f32 %v4168, %v4378
        %v4411 = vadd.f32 %v4169, %v4381
        %v4412 = vadd.f32 %v4170, %v4386
        %v4413 = vadd.f32 %v4171, %v4389
        %v4414 = vadd.f32 %v4172, %v4394
        %v4415 = vadd.f32 %v4173, %v4397
        %v4416 = vpack.c.bf16 %v4401, %v4400
        %v4417 = vpack.c.bf16 %v4403, %v4402
        %v4418 = vpack.c.bf16 %v4405, %v4404
        %v4419 = vpack.c.bf16 %v4407, %v4406
        %v4420 = vpack.c.bf16 %v4409, %v4408
        %v4421 = vpack.c.bf16 %v4411, %v4410
        %v4422 = vpack.c.bf16 %v4413, %v4412
        %v4423 = vpack.c.bf16 %v4415, %v4414
        %s4424 = scalar_lea.vmem [#allocation8], 128
        %v4425 = vld [vmem:[%s4424] sm:$0xf]
        %v4426 = vld [vmem:[%s4424 + $0x4] sm:$0xf]
        %v4427 = vld [vmem:[%s4424 + $0x8] sm:$0xf]
        %v4428 = vld [vmem:[%s4424 + $0xc] sm:$0xf]
        %v4429 = vld [vmem:[%s4424 + $0x10] sm:$0xf]
        %v4430 = vld [vmem:[%s4424 + $0x14] sm:$0xf]
        %v4431 = vld [vmem:[%s4424 + $0x18] sm:$0xf]
        %v4432 = vld [vmem:[%s4424 + $0x1c] sm:$0xf]
        %v4433 = vld [vmem:[%s4424 + $0x20] sm:$0xf]
        %v4434 = vld [vmem:[%s4424 + $0x24] sm:$0xf]
        %v4435 = vld [vmem:[%s4424 + $0x28] sm:$0xf]
        %v4436 = vld [vmem:[%s4424 + $0x2c] sm:$0xf]
        %v4437 = vld [vmem:[%s4424 + $0x30] sm:$0xf]
        %v4438 = vld [vmem:[%s4424 + $0x34] sm:$0xf]
        %v4439 = vld [vmem:[%s4424 + $0x38] sm:$0xf]
        %v4440 = vld [vmem:[%s4424 + $0x3c] sm:$0xf]
        %s4441 = scalar_lea.vmem %s9, 2
        %v4442 = vld [vmem:[%s4441] sm:$0x1]
        %v4444 = vlaneseq
        %v4445 = vshrl.u32 %v4444, 7
        %v4446 = vsub.s32 0, %v4445
        %v4447 = vrot.slane %v4442, %v4446
        %v4465 = vunpack.c.l.b16 %v4425
        %v4466 = vunpack.c.l.b16 %v4426
        %v4467 = vunpack.c.l.b16 %v4427
        %v4468 = vunpack.c.l.b16 %v4428
        %v4469 = vunpack.c.l.b16 %v4429
        %v4470 = vunpack.c.l.b16 %v4430
        %v4471 = vunpack.c.l.b16 %v4431
        %v4472 = vunpack.c.l.b16 %v4432
        %v4473 = vunpack.c.l.b16 %v4433
        %v4474 = vunpack.c.l.b16 %v4434
        %v4475 = vunpack.c.l.b16 %v4435
        %v4476 = vunpack.c.l.b16 %v4436
        %v4477 = vunpack.c.l.b16 %v4437
        %v4478 = vunpack.c.l.b16 %v4438
        %v4479 = vunpack.c.l.b16 %v4439
        %v4480 = vunpack.c.l.b16 %v4440
        %v4481 = vpack.c.b16 %v4466, %v4465
        %v4482 = vpack.c.b16 %v4468, %v4467
        %v4483 = vpack.c.b16 %v4470, %v4469
        %v4484 = vpack.c.b16 %v4472, %v4471
        %v4485 = vpack.c.b16 %v4474, %v4473
        %v4486 = vpack.c.b16 %v4476, %v4475
        %v4487 = vpack.c.b16 %v4478, %v4477
        %v4488 = vpack.c.b16 %v4480, %v4479
        %4497 = vmatprep.subr.bf16.mxu0 0
        %4498 = vmatpush1.bf16.msra.mxu0 %v4488
        %4499 = vmatprep.subr.bf16.mxu0 0
        %4500 = vmatpush1.bf16.msra.mxu0 %v4487
        %4501 = vmatprep.subr.bf16.mxu0 0
        %4502 = vmatpush1.bf16.msra.mxu0 %v4486
        %4503 = vmatprep.subr.bf16.mxu0 0
        %4504 = vmatpush1.bf16.msra.mxu0 %v4485
        %4505 = vmatprep.subr.bf16.mxu0 0
        %4506 = vmatpush1.bf16.msra.mxu0 %v4484
        %4507 = vmatprep.subr.bf16.mxu0 0
        %4508 = vmatpush1.bf16.msra.mxu0 %v4483
        %4509 = vmatprep.subr.bf16.mxu0 0
        %4510 = vmatpush1.bf16.msra.mxu0 %v4482
        %4511 = vmatprep.subr.bf16.mxu0 0
        %4512 = vmatpush1.bf16.msra.mxu0 %v4481
        %4513 = vmatprep.subr.bf16.mxu0 0
        %4514 = vmatpush2.bf16.msra.mxu0 0
        %4515 = vmatprep.subr.bf16.mxu0 0
        %4516 = vmatpush2.bf16.msra.mxu0 0
        %4517 = vmatprep.subr.bf16.mxu0 0
        %4518 = vmatpush2.bf16.msra.mxu0 0
        %4519 = vmatprep.subr.bf16.mxu0 0
        %4520 = vmatpush2.bf16.msra.mxu0 0
        %4521 = vmatprep.subr.bf16.mxu0 0
        %4522 = vmatpush2.bf16.msra.mxu0 0
        %4523 = vmatprep.subr.bf16.mxu0 0
        %4524 = vmatpush2.bf16.msra.mxu0 0
        %4525 = vmatprep.subr.bf16.mxu0 0
        %4526 = vmatpush2.bf16.msra.mxu0 0
        %4527 = vmatprep.subr.bf16.mxu0 0
        %4528 = vmatpush2.bf16.msra.mxu0 0
        %4529 = vmatprep.mubr.bf16.mxu0 0
        %4530 = vmatmul.mubr.bf16.gmra.mxu0 %v4416
        %v4531 = vpop.f32.mrf.mxu0
        %v4532 = vadd.f32 %v4447, %v4531
        %v4533 = vpop.f32.mrf.mxu0
        %v4534 = vpop.f32.mrf.mxu0
        %v4535 = vadd.f32 %v4447, %v4534
        %v4536 = vpop.f32.mrf.mxu0
        %4537 = vmatprep.mubr.bf16.mxu0 0
        %4538 = vmatmul.mubr.bf16.gmra.mxu0 %v4417
        %v4539 = vpop.f32.mrf.mxu0
        %v4540 = vadd.f32 %v4447, %v4539
        %v4541 = vpop.f32.mrf.mxu0
        %v4542 = vpop.f32.mrf.mxu0
        %v4543 = vadd.f32 %v4447, %v4542
        %v4544 = vpop.f32.mrf.mxu0
        %4545 = vmatprep.mubr.bf16.mxu0 0
        %4546 = vmatmul.mubr.bf16.gmra.mxu0 %v4418
        %v4547 = vpop.f32.mrf.mxu0
        %v4548 = vadd.f32 %v4447, %v4547
        %v4549 = vpop.f32.mrf.mxu0
        %v4550 = vpop.f32.mrf.mxu0
        %v4551 = vadd.f32 %v4447, %v4550
        %v4552 = vpop.f32.mrf.mxu0
        %4553 = vmatprep.mubr.bf16.mxu0 0
        %4554 = vmatmul.mubr.bf16.gmra.mxu0 %v4419
        %v4555 = vpop.f32.mrf.mxu0
        %v4556 = vadd.f32 %v4447, %v4555
        %v4557 = vpop.f32.mrf.mxu0
        %v4558 = vpop.f32.mrf.mxu0
        %v4559 = vadd.f32 %v4447, %v4558
        %v4560 = vpop.f32.mrf.mxu0
        %4561 = vmatprep.mubr.bf16.mxu0 0
        %4562 = vmatmul.mubr.bf16.gmra.mxu0 %v4420
        %v4563 = vpop.f32.mrf.mxu0
        %v4564 = vadd.f32 %v4447, %v4563
        %v4565 = vpop.f32.mrf.mxu0
        %v4566 = vpop.f32.mrf.mxu0
        %v4567 = vadd.f32 %v4447, %v4566
        %v4568 = vpop.f32.mrf.mxu0
        %4569 = vmatprep.mubr.bf16.mxu0 0
        %4570 = vmatmul.mubr.bf16.gmra.mxu0 %v4421
        %v4571 = vpop.f32.mrf.mxu0
        %v4572 = vadd.f32 %v4447, %v4571
        %v4573 = vpop.f32.mrf.mxu0
        %v4574 = vpop.f32.mrf.mxu0
        %v4575 = vadd.f32 %v4447, %v4574
        %v4576 = vpop.f32.mrf.mxu0
        %4577 = vmatprep.mubr.bf16.mxu0 0
        %4578 = vmatmul.mubr.bf16.gmra.mxu0 %v4422
        %v4579 = vpop.f32.mrf.mxu0
        %v4580 = vadd.f32 %v4447, %v4579
        %v4581 = vpop.f32.mrf.mxu0
        %v4582 = vpop.f32.mrf.mxu0
        %v4583 = vadd.f32 %v4447, %v4582
        %v4584 = vpop.f32.mrf.mxu0
        %4585 = vmatprep.mubr.bf16.mxu0 0
        %4586 = vmatmul.mubr.bf16.gmra.mxu0 %v4423
        %v4587 = vpop.f32.mrf.mxu0
        %v4588 = vadd.f32 %v4447, %v4587
        %v4589 = vpop.f32.mrf.mxu0
        %v4590 = vpop.f32.mrf.mxu0
        %v4591 = vadd.f32 %v4447, %v4590
        %v4592 = vpop.f32.mrf.mxu0
        %4593 = vdwg.mxu0
        %v4594 = vmax.f32 %v4532, 0.0
        %v4595 = vmax.f32 %v4535, 0.0
        %v4596 = vmax.f32 %v4540, 0.0
        %v4597 = vmax.f32 %v4543, 0.0
        %v4598 = vmax.f32 %v4548, 0.0
        %v4599 = vmax.f32 %v4551, 0.0
        %v4600 = vmax.f32 %v4556, 0.0
        %v4601 = vmax.f32 %v4559, 0.0
        %v4602 = vmax.f32 %v4564, 0.0
        %v4603 = vmax.f32 %v4567, 0.0
        %v4604 = vmax.f32 %v4572, 0.0
        %v4605 = vmax.f32 %v4575, 0.0
        %v4606 = vmax.f32 %v4580, 0.0
        %v4607 = vmax.f32 %v4583, 0.0
        %v4608 = vmax.f32 %v4588, 0.0
        %v4609 = vmax.f32 %v4591, 0.0
        %v4610 = vpack.c.bf16 %v4595, %v4594
        %v4611 = vpack.c.bf16 %v4597, %v4596
        %v4612 = vpack.c.bf16 %v4599, %v4598
        %v4613 = vpack.c.bf16 %v4601, %v4600
        %v4614 = vpack.c.bf16 %v4603, %v4602
        %v4615 = vpack.c.bf16 %v4605, %v4604
        %v4616 = vpack.c.bf16 %v4607, %v4606
        %v4617 = vpack.c.bf16 %v4609, %v4608
        %s4618 = scalar_lea.vmem [#allocation9], 128
        %v4619 = vld [vmem:[%s4618] sm:$0xf]
        %v4620 = vld [vmem:[%s4618 + $0x4] sm:$0xf]
        %v4621 = vld [vmem:[%s4618 + $0x8] sm:$0xf]
        %v4622 = vld [vmem:[%s4618 + $0xc] sm:$0xf]
        %v4623 = vld [vmem:[%s4618 + $0x10] sm:$0xf]
        %v4624 = vld [vmem:[%s4618 + $0x14] sm:$0xf]
        %v4625 = vld [vmem:[%s4618 + $0x18] sm:$0xf]
        %v4626 = vld [vmem:[%s4618 + $0x1c] sm:$0xf]
        %v4627 = vld [vmem:[%s4618 + $0x20] sm:$0xf]
        %v4628 = vld [vmem:[%s4618 + $0x24] sm:$0xf]
        %v4629 = vld [vmem:[%s4618 + $0x28] sm:$0xf]
        %v4630 = vld [vmem:[%s4618 + $0x2c] sm:$0xf]
        %v4631 = vld [vmem:[%s4618 + $0x30] sm:$0xf]
        %v4632 = vld [vmem:[%s4618 + $0x34] sm:$0xf]
        %v4633 = vld [vmem:[%s4618 + $0x38] sm:$0xf]
        %v4634 = vld [vmem:[%s4618 + $0x3c] sm:$0xf]
        %s4635 = scalar_lea.vmem %s11, 2
        %v4636 = vld [vmem:[%s4635] sm:$0x1]
        %v4638 = vlaneseq
        %v4639 = vshrl.u32 %v4638, 7
        %v4640 = vsub.s32 0, %v4639
        %v4641 = vrot.slane %v4636, %v4640
        %v4659 = vunpack.c.l.b16 %v4619
        %v4660 = vunpack.c.l.b16 %v4620
        %v4661 = vunpack.c.l.b16 %v4621
        %v4662 = vunpack.c.l.b16 %v4622
        %v4663 = vunpack.c.l.b16 %v4623
        %v4664 = vunpack.c.l.b16 %v4624
        %v4665 = vunpack.c.l.b16 %v4625
        %v4666 = vunpack.c.l.b16 %v4626
        %v4667 = vunpack.c.l.b16 %v4627
        %v4668 = vunpack.c.l.b16 %v4628
        %v4669 = vunpack.c.l.b16 %v4629
        %v4670 = vunpack.c.l.b16 %v4630
        %v4671 = vunpack.c.l.b16 %v4631
        %v4672 = vunpack.c.l.b16 %v4632
        %v4673 = vunpack.c.l.b16 %v4633
        %v4674 = vunpack.c.l.b16 %v4634
        %v4675 = vpack.c.b16 %v4660, %v4659
        %v4676 = vpack.c.b16 %v4662, %v4661
        %v4677 = vpack.c.b16 %v4664, %v4663
        %v4678 = vpack.c.b16 %v4666, %v4665
        %v4679 = vpack.c.b16 %v4668, %v4667
        %v4680 = vpack.c.b16 %v4670, %v4669
        %v4681 = vpack.c.b16 %v4672, %v4671
        %v4682 = vpack.c.b16 %v4674, %v4673
        %4691 = vmatprep.subr.bf16.mxu0 0
        %4692 = vmatpush1.bf16.msra.mxu0 %v4682
        %4693 = vmatprep.subr.bf16.mxu0 0
        %4694 = vmatpush1.bf16.msra.mxu0 %v4681
        %4695 = vmatprep.subr.bf16.mxu0 0
        %4696 = vmatpush1.bf16.msra.mxu0 %v4680
        %4697 = vmatprep.subr.bf16.mxu0 0
        %4698 = vmatpush1.bf16.msra.mxu0 %v4679
        %4699 = vmatprep.subr.bf16.mxu0 0
        %4700 = vmatpush1.bf16.msra.mxu0 %v4678
        %4701 = vmatprep.subr.bf16.mxu0 0
        %4702 = vmatpush1.bf16.msra.mxu0 %v4677
        %4703 = vmatprep.subr.bf16.mxu0 0
        %4704 = vmatpush1.bf16.msra.mxu0 %v4676
        %4705 = vmatprep.subr.bf16.mxu0 0
        %4706 = vmatpush1.bf16.msra.mxu0 %v4675
        %4707 = vmatprep.subr.bf16.mxu0 0
        %4708 = vmatpush2.bf16.msra.mxu0 0
        %4709 = vmatprep.subr.bf16.mxu0 0
        %4710 = vmatpush2.bf16.msra.mxu0 0
        %4711 = vmatprep.subr.bf16.mxu0 0
        %4712 = vmatpush2.bf16.msra.mxu0 0
        %4713 = vmatprep.subr.bf16.mxu0 0
        %4714 = vmatpush2.bf16.msra.mxu0 0
        %4715 = vmatprep.subr.bf16.mxu0 0
        %4716 = vmatpush2.bf16.msra.mxu0 0
        %4717 = vmatprep.subr.bf16.mxu0 0
        %4718 = vmatpush2.bf16.msra.mxu0 0
        %4719 = vmatprep.subr.bf16.mxu0 0
        %4720 = vmatpush2.bf16.msra.mxu0 0
        %4721 = vmatprep.subr.bf16.mxu0 0
        %4722 = vmatpush2.bf16.msra.mxu0 0
        %4723 = vmatprep.mubr.bf16.mxu0 0
        %4724 = vmatmul.mubr.bf16.gmra.mxu0 %v4610
        %v4725 = vpop.f32.mrf.mxu0
        %v4726 = vadd.f32 %v4641, %v4725
        %v4727 = vpop.f32.mrf.mxu0
        %v4728 = vpop.f32.mrf.mxu0
        %v4729 = vadd.f32 %v4641, %v4728
        %v4730 = vpop.f32.mrf.mxu0
        %4731 = vmatprep.mubr.bf16.mxu0 0
        %4732 = vmatmul.mubr.bf16.gmra.mxu0 %v4611
        %v4733 = vpop.f32.mrf.mxu0
        %v4734 = vadd.f32 %v4641, %v4733
        %v4735 = vpop.f32.mrf.mxu0
        %v4736 = vpop.f32.mrf.mxu0
        %v4737 = vadd.f32 %v4641, %v4736
        %v4738 = vpop.f32.mrf.mxu0
        %4739 = vmatprep.mubr.bf16.mxu0 0
        %4740 = vmatmul.mubr.bf16.gmra.mxu0 %v4612
        %v4741 = vpop.f32.mrf.mxu0
        %v4742 = vadd.f32 %v4641, %v4741
        %v4743 = vpop.f32.mrf.mxu0
        %v4744 = vpop.f32.mrf.mxu0
        %v4745 = vadd.f32 %v4641, %v4744
        %v4746 = vpop.f32.mrf.mxu0
        %4747 = vmatprep.mubr.bf16.mxu0 0
        %4748 = vmatmul.mubr.bf16.gmra.mxu0 %v4613
        %v4749 = vpop.f32.mrf.mxu0
        %v4750 = vadd.f32 %v4641, %v4749
        %v4751 = vpop.f32.mrf.mxu0
        %v4752 = vpop.f32.mrf.mxu0
        %v4753 = vadd.f32 %v4641, %v4752
        %v4754 = vpop.f32.mrf.mxu0
        %4755 = vmatprep.mubr.bf16.mxu0 0
        %4756 = vmatmul.mubr.bf16.gmra.mxu0 %v4614
        %v4757 = vpop.f32.mrf.mxu0
        %v4758 = vadd.f32 %v4641, %v4757
        %v4759 = vpop.f32.mrf.mxu0
        %v4760 = vpop.f32.mrf.mxu0
        %v4761 = vadd.f32 %v4641, %v4760
        %v4762 = vpop.f32.mrf.mxu0
        %4763 = vmatprep.mubr.bf16.mxu0 0
        %4764 = vmatmul.mubr.bf16.gmra.mxu0 %v4615
        %v4765 = vpop.f32.mrf.mxu0
        %v4766 = vadd.f32 %v4641, %v4765
        %v4767 = vpop.f32.mrf.mxu0
        %v4768 = vpop.f32.mrf.mxu0
        %v4769 = vadd.f32 %v4641, %v4768
        %v4770 = vpop.f32.mrf.mxu0
        %4771 = vmatprep.mubr.bf16.mxu0 0
        %4772 = vmatmul.mubr.bf16.gmra.mxu0 %v4616
        %v4773 = vpop.f32.mrf.mxu0
        %v4774 = vadd.f32 %v4641, %v4773
        %v4775 = vpop.f32.mrf.mxu0
        %v4776 = vpop.f32.mrf.mxu0
        %v4777 = vadd.f32 %v4641, %v4776
        %v4778 = vpop.f32.mrf.mxu0
        %4779 = vmatprep.mubr.bf16.mxu0 0
        %4780 = vmatmul.mubr.bf16.gmra.mxu0 %v4617
        %v4781 = vpop.f32.mrf.mxu0
        %v4782 = vadd.f32 %v4641, %v4781
        %v4783 = vpop.f32.mrf.mxu0
        %v4784 = vpop.f32.mrf.mxu0
        %v4785 = vadd.f32 %v4641, %v4784
        %v4786 = vpop.f32.mrf.mxu0
        %4787 = vdwg.mxu0
        %v4788 = vmax.f32 %v4726, 0.0
        %v4789 = vmax.f32 %v4729, 0.0
        %v4790 = vmax.f32 %v4734, 0.0
        %v4791 = vmax.f32 %v4737, 0.0
        %v4792 = vmax.f32 %v4742, 0.0
        %v4793 = vmax.f32 %v4745, 0.0
        %v4794 = vmax.f32 %v4750, 0.0
        %v4795 = vmax.f32 %v4753, 0.0
        %v4796 = vmax.f32 %v4758, 0.0
        %v4797 = vmax.f32 %v4761, 0.0
        %v4798 = vmax.f32 %v4766, 0.0
        %v4799 = vmax.f32 %v4769, 0.0
        %v4800 = vmax.f32 %v4774, 0.0
        %v4801 = vmax.f32 %v4777, 0.0
        %v4802 = vmax.f32 %v4782, 0.0
        %v4803 = vmax.f32 %v4785, 0.0
        %v4804 = vpack.c.bf16 %v4789, %v4788
        %v4805 = vpack.c.bf16 %v4791, %v4790
        %v4806 = vpack.c.bf16 %v4793, %v4792
        %v4807 = vpack.c.bf16 %v4795, %v4794
        %v4808 = vpack.c.bf16 %v4797, %v4796
        %v4809 = vpack.c.bf16 %v4799, %v4798
        %v4810 = vpack.c.bf16 %v4801, %v4800
        %v4811 = vpack.c.bf16 %v4803, %v4802
        %4812 = vmatprep.subr.bf16.mxu0 0
        %4813 = vmatpush1.bf16.msra.mxu0 %v4811
        %4814 = vmatprep.subr.bf16.mxu0 0
        %4815 = vmatpush1.bf16.msra.mxu0 %v4810
        %4816 = vmatprep.subr.bf16.mxu0 0
        %4817 = vmatpush1.bf16.msra.mxu0 %v4809
        %4818 = vmatprep.subr.bf16.mxu0 0
        %4819 = vmatpush1.bf16.msra.mxu0 %v4808
        %4820 = vmatprep.subr.bf16.mxu0 0
        %4821 = vmatpush1.bf16.msra.mxu0 %v4807
        %4822 = vmatprep.subr.bf16.mxu0 0
        %4823 = vmatpush1.bf16.msra.mxu0 %v4806
        %4824 = vmatprep.subr.bf16.mxu0 0
        %4825 = vmatpush1.bf16.msra.mxu0 %v4805
        %4826 = vmatprep.subr.bf16.mxu0 0
        %4827 = vmatpush1.bf16.msra.mxu0 %v4804
        %4828 = vmatprep.subr.bf16.mxu0 0
        %4829 = vmatpush2.bf16.msra.mxu0 0
        %4830 = vmatprep.subr.bf16.mxu0 0
        %4831 = vmatpush2.bf16.msra.mxu0 0
        %4832 = vmatprep.subr.bf16.mxu0 0
        %4833 = vmatpush2.bf16.msra.mxu0 0
        %4834 = vmatprep.subr.bf16.mxu0 0
        %4835 = vmatpush2.bf16.msra.mxu0 0
        %4836 = vmatprep.subr.bf16.mxu0 0
        %4837 = vmatpush2.bf16.msra.mxu0 0
        %4838 = vmatprep.subr.bf16.mxu0 0
        %4839 = vmatpush2.bf16.msra.mxu0 0
        %4840 = vmatprep.subr.bf16.mxu0 0
        %4841 = vmatpush2.bf16.msra.mxu0 0
        %4842 = vmatprep.subr.bf16.mxu0 0
        %4843 = vmatpush2.bf16.msra.mxu0 0
        %4844 = vmatprep.mubr.bf16.mxu0 0
        %4845 = vmatmul.mubr.bf16.gmra.mxu0 %v2849
        %v4846 = vpop.f32.mrf.mxu0
        %v4847 = vadd.f32 %v2705, %v4846
        %v4848 = vpop.f32.mrf.mxu0
        %v4849 = vpop.f32.mrf.mxu0
        %v4850 = vadd.f32 %v2708, %v4849
        %v4851 = vpop.f32.mrf.mxu0
        %4852 = vmatprep.mubr.bf16.mxu0 0
        %4853 = vmatmul.mubr.bf16.gmra.mxu0 %v2850
        %v4854 = vpop.f32.mrf.mxu0
        %v4855 = vadd.f32 %v2713, %v4854
        %v4856 = vpop.f32.mrf.mxu0
        %v4857 = vpop.f32.mrf.mxu0
        %v4858 = vadd.f32 %v2716, %v4857
        %v4859 = vpop.f32.mrf.mxu0
        %4860 = vmatprep.mubr.bf16.mxu0 0
        %4861 = vmatmul.mubr.bf16.gmra.mxu0 %v2851
        %v4862 = vpop.f32.mrf.mxu0
        %v4863 = vadd.f32 %v2721, %v4862
        %v4864 = vpop.f32.mrf.mxu0
        %v4865 = vpop.f32.mrf.mxu0
        %v4866 = vadd.f32 %v2724, %v4865
        %v4867 = vpop.f32.mrf.mxu0
        %4868 = vmatprep.mubr.bf16.mxu0 0
        %4869 = vmatmul.mubr.bf16.gmra.mxu0 %v2852
        %v4870 = vpop.f32.mrf.mxu0
        %v4871 = vadd.f32 %v2729, %v4870
        %v4872 = vpop.f32.mrf.mxu0
        %v4873 = vpop.f32.mrf.mxu0
        %v4874 = vadd.f32 %v2732, %v4873
        %v4875 = vpop.f32.mrf.mxu0
        %4876 = vmatprep.mubr.bf16.mxu0 0
        %4877 = vmatmul.mubr.bf16.gmra.mxu0 %v2853
        %v4878 = vpop.f32.mrf.mxu0
        %v4879 = vadd.f32 %v2737, %v4878
        %v4880 = vpop.f32.mrf.mxu0
        %v4881 = vpop.f32.mrf.mxu0
        %v4882 = vadd.f32 %v2740, %v4881
        %v4883 = vpop.f32.mrf.mxu0
        %4884 = vmatprep.mubr.bf16.mxu0 0
        %4885 = vmatmul.mubr.bf16.gmra.mxu0 %v2854
        %v4886 = vpop.f32.mrf.mxu0
        %v4887 = vadd.f32 %v2745, %v4886
        %v4888 = vpop.f32.mrf.mxu0
        %v4889 = vpop.f32.mrf.mxu0
        %v4890 = vadd.f32 %v2748, %v4889
        %v4891 = vpop.f32.mrf.mxu0
        %4892 = vmatprep.mubr.bf16.mxu0 0
        %4893 = vmatmul.mubr.bf16.gmra.mxu0 %v2855
        %v4894 = vpop.f32.mrf.mxu0
        %v4895 = vadd.f32 %v2753, %v4894
        %v4896 = vpop.f32.mrf.mxu0
        %v4897 = vpop.f32.mrf.mxu0
        %v4898 = vadd.f32 %v2756, %v4897
        %v4899 = vpop.f32.mrf.mxu0
        %4900 = vmatprep.mubr.bf16.mxu0 0
        %4901 = vmatmul.mubr.bf16.gmra.mxu0 %v2856
        %v4902 = vpop.f32.mrf.mxu0
        %v4903 = vadd.f32 %v2761, %v4902
        %v4904 = vpop.f32.mrf.mxu0
        %v4905 = vpop.f32.mrf.mxu0
        %v4906 = vadd.f32 %v2764, %v4905
        %v4907 = vpop.f32.mrf.mxu0
        %4908 = vdwg.mxu0
        %v4909 = vmax.f32 %v4847, 0.0
        %v4910 = vmax.f32 %v4850, 0.0
        %v4911 = vmax.f32 %v4855, 0.0
        %v4912 = vmax.f32 %v4858, 0.0
        %v4913 = vmax.f32 %v4863, 0.0
        %v4914 = vmax.f32 %v4866, 0.0
        %v4915 = vmax.f32 %v4871, 0.0
        %v4916 = vmax.f32 %v4874, 0.0
        %v4917 = vmax.f32 %v4879, 0.0
        %v4918 = vmax.f32 %v4882, 0.0
        %v4919 = vmax.f32 %v4887, 0.0
        %v4920 = vmax.f32 %v4890, 0.0
        %v4921 = vmax.f32 %v4895, 0.0
        %v4922 = vmax.f32 %v4898, 0.0
        %v4923 = vmax.f32 %v4903, 0.0
        %v4924 = vmax.f32 %v4906, 0.0
        %v4925 = vpack.c.bf16 %v4910, %v4909
        %v4926 = vpack.c.bf16 %v4912, %v4911
        %v4927 = vpack.c.bf16 %v4914, %v4913
        %v4928 = vpack.c.bf16 %v4916, %v4915
        %v4929 = vpack.c.bf16 %v4918, %v4917
        %v4930 = vpack.c.bf16 %v4920, %v4919
        %v4931 = vpack.c.bf16 %v4922, %v4921
        %v4932 = vpack.c.bf16 %v4924, %v4923
        %4933 = vmatprep.subr.bf16.mxu0 0
        %4934 = vmatpush1.bf16.msra.mxu0 %v4932
        %4935 = vmatprep.subr.bf16.mxu0 0
        %4936 = vmatpush1.bf16.msra.mxu0 %v4931
        %4937 = vmatprep.subr.bf16.mxu0 0
        %4938 = vmatpush1.bf16.msra.mxu0 %v4930
        %4939 = vmatprep.subr.bf16.mxu0 0
        %4940 = vmatpush1.bf16.msra.mxu0 %v4929
        %4941 = vmatprep.subr.bf16.mxu0 0
        %4942 = vmatpush1.bf16.msra.mxu0 %v4928
        %4943 = vmatprep.subr.bf16.mxu0 0
        %4944 = vmatpush1.bf16.msra.mxu0 %v4927
        %4945 = vmatprep.subr.bf16.mxu0 0
        %4946 = vmatpush1.bf16.msra.mxu0 %v4926
        %4947 = vmatprep.subr.bf16.mxu0 0
        %4948 = vmatpush1.bf16.msra.mxu0 %v4925
        %4949 = vmatprep.subr.bf16.mxu0 0
        %4950 = vmatpush2.bf16.msra.mxu0 0
        %4951 = vmatprep.subr.bf16.mxu0 0
        %4952 = vmatpush2.bf16.msra.mxu0 0
        %4953 = vmatprep.subr.bf16.mxu0 0
        %4954 = vmatpush2.bf16.msra.mxu0 0
        %4955 = vmatprep.subr.bf16.mxu0 0
        %4956 = vmatpush2.bf16.msra.mxu0 0
        %4957 = vmatprep.subr.bf16.mxu0 0
        %4958 = vmatpush2.bf16.msra.mxu0 0
        %4959 = vmatprep.subr.bf16.mxu0 0
        %4960 = vmatpush2.bf16.msra.mxu0 0
        %4961 = vmatprep.subr.bf16.mxu0 0
        %4962 = vmatpush2.bf16.msra.mxu0 0
        %4963 = vmatprep.subr.bf16.mxu0 0
        %4964 = vmatpush2.bf16.msra.mxu0 0
        %4965 = vmatprep.mubr.bf16.mxu0 0
        %4966 = vmatmul.mubr.bf16.gmra.mxu0 %v2910
        %v4967 = vpop.f32.mrf.mxu0
        %v4968 = vadd.f32 0.0, %v4967
        %v4969 = vpop.f32.mrf.mxu0
        %v4970 = vpop.f32.mrf.mxu0
        %v4971 = vadd.f32 0.0, %v4970
        %v4972 = vpop.f32.mrf.mxu0
        %4973 = vmatprep.mubr.bf16.mxu0 0
        %4974 = vmatmul.mubr.bf16.gmra.mxu0 %v2911
        %v4975 = vpop.f32.mrf.mxu0
        %v4976 = vadd.f32 0.0, %v4975
        %v4977 = vpop.f32.mrf.mxu0
        %v4978 = vpop.f32.mrf.mxu0
        %v4979 = vadd.f32 0.0, %v4978
        %v4980 = vpop.f32.mrf.mxu0
        %4981 = vmatprep.mubr.bf16.mxu0 0
        %4982 = vmatmul.mubr.bf16.gmra.mxu0 %v2912
        %v4983 = vpop.f32.mrf.mxu0
        %v4984 = vadd.f32 0.0, %v4983
        %v4985 = vpop.f32.mrf.mxu0
        %v4986 = vpop.f32.mrf.mxu0
        %v4987 = vadd.f32 0.0, %v4986
        %v4988 = vpop.f32.mrf.mxu0
        %4989 = vmatprep.mubr.bf16.mxu0 0
        %4990 = vmatmul.mubr.bf16.gmra.mxu0 %v2913
        %v4991 = vpop.f32.mrf.mxu0
        %v4992 = vadd.f32 0.0, %v4991
        %v4993 = vpop.f32.mrf.mxu0
        %v4994 = vpop.f32.mrf.mxu0
        %v4995 = vadd.f32 0.0, %v4994
        %v4996 = vpop.f32.mrf.mxu0
        %4997 = vmatprep.mubr.bf16.mxu0 0
        %4998 = vmatmul.mubr.bf16.gmra.mxu0 %v2914
        %v4999 = vpop.f32.mrf.mxu0
        %v5000 = vadd.f32 0.0, %v4999
        %v5001 = vpop.f32.mrf.mxu0
        %v5002 = vpop.f32.mrf.mxu0
        %v5003 = vadd.f32 0.0, %v5002
        %v5004 = vpop.f32.mrf.mxu0
        %5005 = vmatprep.mubr.bf16.mxu0 0
        %5006 = vmatmul.mubr.bf16.gmra.mxu0 %v2915
        %v5007 = vpop.f32.mrf.mxu0
        %v5008 = vadd.f32 0.0, %v5007
        %v5009 = vpop.f32.mrf.mxu0
        %v5010 = vpop.f32.mrf.mxu0
        %v5011 = vadd.f32 0.0, %v5010
        %v5012 = vpop.f32.mrf.mxu0
        %5013 = vmatprep.mubr.bf16.mxu0 0
        %5014 = vmatmul.mubr.bf16.gmra.mxu0 %v2916
        %v5015 = vpop.f32.mrf.mxu0
        %v5016 = vadd.f32 0.0, %v5015
        %v5017 = vpop.f32.mrf.mxu0
        %v5018 = vpop.f32.mrf.mxu0
        %v5019 = vadd.f32 0.0, %v5018
        %v5020 = vpop.f32.mrf.mxu0
        %5021 = vmatprep.mubr.bf16.mxu0 0
        %5022 = vmatmul.mubr.bf16.gmra.mxu0 %v2917
        %v5023 = vpop.f32.mrf.mxu0
        %v5024 = vadd.f32 0.0, %v5023
        %v5025 = vpop.f32.mrf.mxu0
        %v5026 = vpop.f32.mrf.mxu0
        %v5027 = vadd.f32 0.0, %v5026
        %v5028 = vpop.f32.mrf.mxu0
        %5029 = vdwg.mxu0
        %v5030 = vadd.f32 %v4788, %v4968
        %v5031 = vadd.f32 %v4789, %v4971
        %v5032 = vadd.f32 %v4790, %v4976
        %v5033 = vadd.f32 %v4791, %v4979
        %v5034 = vadd.f32 %v4792, %v4984
        %v5035 = vadd.f32 %v4793, %v4987
        %v5036 = vadd.f32 %v4794, %v4992
        %v5037 = vadd.f32 %v4795, %v4995
        %v5038 = vadd.f32 %v4796, %v5000
        %v5039 = vadd.f32 %v4797, %v5003
        %v5040 = vadd.f32 %v4798, %v5008
        %v5041 = vadd.f32 %v4799, %v5011
        %v5042 = vadd.f32 %v4800, %v5016
        %v5043 = vadd.f32 %v4801, %v5019
        %v5044 = vadd.f32 %v4802, %v5024
        %v5045 = vadd.f32 %v4803, %v5027
        %v5046 = vpack.c.bf16 %v5031, %v5030
        %v5047 = vpack.c.bf16 %v5033, %v5032
        %v5048 = vpack.c.bf16 %v5035, %v5034
        %v5049 = vpack.c.bf16 %v5037, %v5036
        %v5050 = vpack.c.bf16 %v5039, %v5038
        %v5051 = vpack.c.bf16 %v5041, %v5040
        %v5052 = vpack.c.bf16 %v5043, %v5042
        %v5053 = vpack.c.bf16 %v5045, %v5044
        %s5054 = scalar_lea.vmem [#allocation8], 192
        %v5055 = vld [vmem:[%s5054] sm:$0xf]
        %v5056 = vld [vmem:[%s5054 + $0x4] sm:$0xf]
        %v5057 = vld [vmem:[%s5054 + $0x8] sm:$0xf]
        %v5058 = vld [vmem:[%s5054 + $0xc] sm:$0xf]
        %v5059 = vld [vmem:[%s5054 + $0x10] sm:$0xf]
        %v5060 = vld [vmem:[%s5054 + $0x14] sm:$0xf]
        %v5061 = vld [vmem:[%s5054 + $0x18] sm:$0xf]
        %v5062 = vld [vmem:[%s5054 + $0x1c] sm:$0xf]
        %v5063 = vld [vmem:[%s5054 + $0x20] sm:$0xf]
        %v5064 = vld [vmem:[%s5054 + $0x24] sm:$0xf]
        %v5065 = vld [vmem:[%s5054 + $0x28] sm:$0xf]
        %v5066 = vld [vmem:[%s5054 + $0x2c] sm:$0xf]
        %v5067 = vld [vmem:[%s5054 + $0x30] sm:$0xf]
        %v5068 = vld [vmem:[%s5054 + $0x34] sm:$0xf]
        %v5069 = vld [vmem:[%s5054 + $0x38] sm:$0xf]
        %v5070 = vld [vmem:[%s5054 + $0x3c] sm:$0xf]
        %s5071 = scalar_lea.vmem %s9, 3
        %v5072 = vld [vmem:[%s5071] sm:$0x1]
        %v5074 = vlaneseq
        %v5075 = vshrl.u32 %v5074, 7
        %v5076 = vsub.s32 0, %v5075
        %v5077 = vrot.slane %v5072, %v5076
        %v5095 = vunpack.c.l.b16 %v5055
        %v5096 = vunpack.c.l.b16 %v5056
        %v5097 = vunpack.c.l.b16 %v5057
        %v5098 = vunpack.c.l.b16 %v5058
        %v5099 = vunpack.c.l.b16 %v5059
        %v5100 = vunpack.c.l.b16 %v5060
        %v5101 = vunpack.c.l.b16 %v5061
        %v5102 = vunpack.c.l.b16 %v5062
        %v5103 = vunpack.c.l.b16 %v5063
        %v5104 = vunpack.c.l.b16 %v5064
        %v5105 = vunpack.c.l.b16 %v5065
        %v5106 = vunpack.c.l.b16 %v5066
        %v5107 = vunpack.c.l.b16 %v5067
        %v5108 = vunpack.c.l.b16 %v5068
        %v5109 = vunpack.c.l.b16 %v5069
        %v5110 = vunpack.c.l.b16 %v5070
        %v5111 = vpack.c.b16 %v5096, %v5095
        %v5112 = vpack.c.b16 %v5098, %v5097
        %v5113 = vpack.c.b16 %v5100, %v5099
        %v5114 = vpack.c.b16 %v5102, %v5101
        %v5115 = vpack.c.b16 %v5104, %v5103
        %v5116 = vpack.c.b16 %v5106, %v5105
        %v5117 = vpack.c.b16 %v5108, %v5107
        %v5118 = vpack.c.b16 %v5110, %v5109
        %5127 = vmatprep.subr.bf16.mxu0 0
        %5128 = vmatpush1.bf16.msra.mxu0 %v5118
        %5129 = vmatprep.subr.bf16.mxu0 0
        %5130 = vmatpush1.bf16.msra.mxu0 %v5117
        %5131 = vmatprep.subr.bf16.mxu0 0
        %5132 = vmatpush1.bf16.msra.mxu0 %v5116
        %5133 = vmatprep.subr.bf16.mxu0 0
        %5134 = vmatpush1.bf16.msra.mxu0 %v5115
        %5135 = vmatprep.subr.bf16.mxu0 0
        %5136 = vmatpush1.bf16.msra.mxu0 %v5114
        %5137 = vmatprep.subr.bf16.mxu0 0
        %5138 = vmatpush1.bf16.msra.mxu0 %v5113
        %5139 = vmatprep.subr.bf16.mxu0 0
        %5140 = vmatpush1.bf16.msra.mxu0 %v5112
        %5141 = vmatprep.subr.bf16.mxu0 0
        %5142 = vmatpush1.bf16.msra.mxu0 %v5111
        %5143 = vmatprep.subr.bf16.mxu0 0
        %5144 = vmatpush2.bf16.msra.mxu0 0
        %5145 = vmatprep.subr.bf16.mxu0 0
        %5146 = vmatpush2.bf16.msra.mxu0 0
        %5147 = vmatprep.subr.bf16.mxu0 0
        %5148 = vmatpush2.bf16.msra.mxu0 0
        %5149 = vmatprep.subr.bf16.mxu0 0
        %5150 = vmatpush2.bf16.msra.mxu0 0
        %5151 = vmatprep.subr.bf16.mxu0 0
        %5152 = vmatpush2.bf16.msra.mxu0 0
        %5153 = vmatprep.subr.bf16.mxu0 0
        %5154 = vmatpush2.bf16.msra.mxu0 0
        %5155 = vmatprep.subr.bf16.mxu0 0
        %5156 = vmatpush2.bf16.msra.mxu0 0
        %5157 = vmatprep.subr.bf16.mxu0 0
        %5158 = vmatpush2.bf16.msra.mxu0 0
        %5159 = vmatprep.mubr.bf16.mxu0 0
        %5160 = vmatmul.mubr.bf16.gmra.mxu0 %v5046
        %v5161 = vpop.f32.mrf.mxu0
        %v5162 = vadd.f32 %v5077, %v5161
        %v5163 = vpop.f32.mrf.mxu0
        %v5164 = vpop.f32.mrf.mxu0
        %v5165 = vadd.f32 %v5077, %v5164
        %v5166 = vpop.f32.mrf.mxu0
        %5167 = vmatprep.mubr.bf16.mxu0 0
        %5168 = vmatmul.mubr.bf16.gmra.mxu0 %v5047
        %v5169 = vpop.f32.mrf.mxu0
        %v5170 = vadd.f32 %v5077, %v5169
        %v5171 = vpop.f32.mrf.mxu0
        %v5172 = vpop.f32.mrf.mxu0
        %v5173 = vadd.f32 %v5077, %v5172
        %v5174 = vpop.f32.mrf.mxu0
        %5175 = vmatprep.mubr.bf16.mxu0 0
        %5176 = vmatmul.mubr.bf16.gmra.mxu0 %v5048
        %v5177 = vpop.f32.mrf.mxu0
        %v5178 = vadd.f32 %v5077, %v5177
        %v5179 = vpop.f32.mrf.mxu0
        %v5180 = vpop.f32.mrf.mxu0
        %v5181 = vadd.f32 %v5077, %v5180
        %v5182 = vpop.f32.mrf.mxu0
        %5183 = vmatprep.mubr.bf16.mxu0 0
        %5184 = vmatmul.mubr.bf16.gmra.mxu0 %v5049
        %v5185 = vpop.f32.mrf.mxu0
        %v5186 = vadd.f32 %v5077, %v5185
        %v5187 = vpop.f32.mrf.mxu0
        %v5188 = vpop.f32.mrf.mxu0
        %v5189 = vadd.f32 %v5077, %v5188
        %v5190 = vpop.f32.mrf.mxu0
        %5191 = vmatprep.mubr.bf16.mxu0 0
        %5192 = vmatmul.mubr.bf16.gmra.mxu0 %v5050
        %v5193 = vpop.f32.mrf.mxu0
        %v5194 = vadd.f32 %v5077, %v5193
        %v5195 = vpop.f32.mrf.mxu0
        %v5196 = vpop.f32.mrf.mxu0
        %v5197 = vadd.f32 %v5077, %v5196
        %v5198 = vpop.f32.mrf.mxu0
        %5199 = vmatprep.mubr.bf16.mxu0 0
        %5200 = vmatmul.mubr.bf16.gmra.mxu0 %v5051
        %v5201 = vpop.f32.mrf.mxu0
        %v5202 = vadd.f32 %v5077, %v5201
        %v5203 = vpop.f32.mrf.mxu0
        %v5204 = vpop.f32.mrf.mxu0
        %v5205 = vadd.f32 %v5077, %v5204
        %v5206 = vpop.f32.mrf.mxu0
        %5207 = vmatprep.mubr.bf16.mxu0 0
        %5208 = vmatmul.mubr.bf16.gmra.mxu0 %v5052
        %v5209 = vpop.f32.mrf.mxu0
        %v5210 = vadd.f32 %v5077, %v5209
        %v5211 = vpop.f32.mrf.mxu0
        %v5212 = vpop.f32.mrf.mxu0
        %v5213 = vadd.f32 %v5077, %v5212
        %v5214 = vpop.f32.mrf.mxu0
        %5215 = vmatprep.mubr.bf16.mxu0 0
        %5216 = vmatmul.mubr.bf16.gmra.mxu0 %v5053
        %v5217 = vpop.f32.mrf.mxu0
        %v5218 = vadd.f32 %v5077, %v5217
        %v5219 = vpop.f32.mrf.mxu0
        %v5220 = vpop.f32.mrf.mxu0
        %v5221 = vadd.f32 %v5077, %v5220
        %v5222 = vpop.f32.mrf.mxu0
        %5223 = vdwg.mxu0
        %v5224 = vmax.f32 %v5162, 0.0
        %v5225 = vmax.f32 %v5165, 0.0
        %v5226 = vmax.f32 %v5170, 0.0
        %v5227 = vmax.f32 %v5173, 0.0
        %v5228 = vmax.f32 %v5178, 0.0
        %v5229 = vmax.f32 %v5181, 0.0
        %v5230 = vmax.f32 %v5186, 0.0
        %v5231 = vmax.f32 %v5189, 0.0
        %v5232 = vmax.f32 %v5194, 0.0
        %v5233 = vmax.f32 %v5197, 0.0
        %v5234 = vmax.f32 %v5202, 0.0
        %v5235 = vmax.f32 %v5205, 0.0
        %v5236 = vmax.f32 %v5210, 0.0
        %v5237 = vmax.f32 %v5213, 0.0
        %v5238 = vmax.f32 %v5218, 0.0
        %v5239 = vmax.f32 %v5221, 0.0
        %v5240 = vpack.c.bf16 %v5225, %v5224
        %v5241 = vpack.c.bf16 %v5227, %v5226
        %v5242 = vpack.c.bf16 %v5229, %v5228
        %v5243 = vpack.c.bf16 %v5231, %v5230
        %v5244 = vpack.c.bf16 %v5233, %v5232
        %v5245 = vpack.c.bf16 %v5235, %v5234
        %v5246 = vpack.c.bf16 %v5237, %v5236
        %v5247 = vpack.c.bf16 %v5239, %v5238
        %s5248 = scalar_lea.vmem [#allocation9], 192
        %v5249 = vld [vmem:[%s5248] sm:$0xf]
        %v5250 = vld [vmem:[%s5248 + $0x4] sm:$0xf]
        %v5251 = vld [vmem:[%s5248 + $0x8] sm:$0xf]
        %v5252 = vld [vmem:[%s5248 + $0xc] sm:$0xf]
        %v5253 = vld [vmem:[%s5248 + $0x10] sm:$0xf]
        %v5254 = vld [vmem:[%s5248 + $0x14] sm:$0xf]
        %v5255 = vld [vmem:[%s5248 + $0x18] sm:$0xf]
        %v5256 = vld [vmem:[%s5248 + $0x1c] sm:$0xf]
        %v5257 = vld [vmem:[%s5248 + $0x20] sm:$0xf]
        %v5258 = vld [vmem:[%s5248 + $0x24] sm:$0xf]
        %v5259 = vld [vmem:[%s5248 + $0x28] sm:$0xf]
        %v5260 = vld [vmem:[%s5248 + $0x2c] sm:$0xf]
        %v5261 = vld [vmem:[%s5248 + $0x30] sm:$0xf]
        %v5262 = vld [vmem:[%s5248 + $0x34] sm:$0xf]
        %v5263 = vld [vmem:[%s5248 + $0x38] sm:$0xf]
        %v5264 = vld [vmem:[%s5248 + $0x3c] sm:$0xf]
        %s5265 = scalar_lea.vmem %s11, 3
        %v5266 = vld [vmem:[%s5265] sm:$0x1]
        %v5268 = vlaneseq
        %v5269 = vshrl.u32 %v5268, 7
        %v5270 = vsub.s32 0, %v5269
        %v5271 = vrot.slane %v5266, %v5270
        %v5289 = vunpack.c.l.b16 %v5249
        %v5290 = vunpack.c.l.b16 %v5250
        %v5291 = vunpack.c.l.b16 %v5251
        %v5292 = vunpack.c.l.b16 %v5252
        %v5293 = vunpack.c.l.b16 %v5253
        %v5294 = vunpack.c.l.b16 %v5254
        %v5295 = vunpack.c.l.b16 %v5255
        %v5296 = vunpack.c.l.b16 %v5256
        %v5297 = vunpack.c.l.b16 %v5257
        %v5298 = vunpack.c.l.b16 %v5258
        %v5299 = vunpack.c.l.b16 %v5259
        %v5300 = vunpack.c.l.b16 %v5260
        %v5301 = vunpack.c.l.b16 %v5261
        %v5302 = vunpack.c.l.b16 %v5262
        %v5303 = vunpack.c.l.b16 %v5263
        %v5304 = vunpack.c.l.b16 %v5264
        %v5305 = vpack.c.b16 %v5290, %v5289
        %v5306 = vpack.c.b16 %v5292, %v5291
        %v5307 = vpack.c.b16 %v5294, %v5293
        %v5308 = vpack.c.b16 %v5296, %v5295
        %v5309 = vpack.c.b16 %v5298, %v5297
        %v5310 = vpack.c.b16 %v5300, %v5299
        %v5311 = vpack.c.b16 %v5302, %v5301
        %v5312 = vpack.c.b16 %v5304, %v5303
        %5321 = vmatprep.subr.bf16.mxu0 0
        %5322 = vmatpush1.bf16.msra.mxu0 %v5312
        %5323 = vmatprep.subr.bf16.mxu0 0
        %5324 = vmatpush1.bf16.msra.mxu0 %v5311
        %5325 = vmatprep.subr.bf16.mxu0 0
        %5326 = vmatpush1.bf16.msra.mxu0 %v5310
        %5327 = vmatprep.subr.bf16.mxu0 0
        %5328 = vmatpush1.bf16.msra.mxu0 %v5309
        %5329 = vmatprep.subr.bf16.mxu0 0
        %5330 = vmatpush1.bf16.msra.mxu0 %v5308
        %5331 = vmatprep.subr.bf16.mxu0 0
        %5332 = vmatpush1.bf16.msra.mxu0 %v5307
        %5333 = vmatprep.subr.bf16.mxu0 0
        %5334 = vmatpush1.bf16.msra.mxu0 %v5306
        %5335 = vmatprep.subr.bf16.mxu0 0
        %5336 = vmatpush1.bf16.msra.mxu0 %v5305
        %5337 = vmatprep.subr.bf16.mxu0 0
        %5338 = vmatpush2.bf16.msra.mxu0 0
        %5339 = vmatprep.subr.bf16.mxu0 0
        %5340 = vmatpush2.bf16.msra.mxu0 0
        %5341 = vmatprep.subr.bf16.mxu0 0
        %5342 = vmatpush2.bf16.msra.mxu0 0
        %5343 = vmatprep.subr.bf16.mxu0 0
        %5344 = vmatpush2.bf16.msra.mxu0 0
        %5345 = vmatprep.subr.bf16.mxu0 0
        %5346 = vmatpush2.bf16.msra.mxu0 0
        %5347 = vmatprep.subr.bf16.mxu0 0
        %5348 = vmatpush2.bf16.msra.mxu0 0
        %5349 = vmatprep.subr.bf16.mxu0 0
        %5350 = vmatpush2.bf16.msra.mxu0 0
        %5351 = vmatprep.subr.bf16.mxu0 0
        %5352 = vmatpush2.bf16.msra.mxu0 0
        %5353 = vmatprep.mubr.bf16.mxu0 0
        %5354 = vmatmul.mubr.bf16.gmra.mxu0 %v5240
        %v5355 = vpop.f32.mrf.mxu0
        %v5356 = vadd.f32 %v5271, %v5355
        %v5357 = vpop.f32.mrf.mxu0
        %v5358 = vpop.f32.mrf.mxu0
        %v5359 = vadd.f32 %v5271, %v5358
        %v5360 = vpop.f32.mrf.mxu0
        %5361 = vmatprep.mubr.bf16.mxu0 0
        %5362 = vmatmul.mubr.bf16.gmra.mxu0 %v5241
        %v5363 = vpop.f32.mrf.mxu0
        %v5364 = vadd.f32 %v5271, %v5363
        %v5365 = vpop.f32.mrf.mxu0
        %v5366 = vpop.f32.mrf.mxu0
        %v5367 = vadd.f32 %v5271, %v5366
        %v5368 = vpop.f32.mrf.mxu0
        %5369 = vmatprep.mubr.bf16.mxu0 0
        %5370 = vmatmul.mubr.bf16.gmra.mxu0 %v5242
        %v5371 = vpop.f32.mrf.mxu0
        %v5372 = vadd.f32 %v5271, %v5371
        %v5373 = vpop.f32.mrf.mxu0
        %v5374 = vpop.f32.mrf.mxu0
        %v5375 = vadd.f32 %v5271, %v5374
        %v5376 = vpop.f32.mrf.mxu0
        %5377 = vmatprep.mubr.bf16.mxu0 0
        %5378 = vmatmul.mubr.bf16.gmra.mxu0 %v5243
        %v5379 = vpop.f32.mrf.mxu0
        %v5380 = vadd.f32 %v5271, %v5379
        %v5381 = vpop.f32.mrf.mxu0
        %v5382 = vpop.f32.mrf.mxu0
        %v5383 = vadd.f32 %v5271, %v5382
        %v5384 = vpop.f32.mrf.mxu0
        %5385 = vmatprep.mubr.bf16.mxu0 0
        %5386 = vmatmul.mubr.bf16.gmra.mxu0 %v5244
        %v5387 = vpop.f32.mrf.mxu0
        %v5388 = vadd.f32 %v5271, %v5387
        %v5389 = vpop.f32.mrf.mxu0
        %v5390 = vpop.f32.mrf.mxu0
        %v5391 = vadd.f32 %v5271, %v5390
        %v5392 = vpop.f32.mrf.mxu0
        %5393 = vmatprep.mubr.bf16.mxu0 0
        %5394 = vmatmul.mubr.bf16.gmra.mxu0 %v5245
        %v5395 = vpop.f32.mrf.mxu0
        %v5396 = vadd.f32 %v5271, %v5395
        %v5397 = vpop.f32.mrf.mxu0
        %v5398 = vpop.f32.mrf.mxu0
        %v5399 = vadd.f32 %v5271, %v5398
        %v5400 = vpop.f32.mrf.mxu0
        %5401 = vmatprep.mubr.bf16.mxu0 0
        %5402 = vmatmul.mubr.bf16.gmra.mxu0 %v5246
        %v5403 = vpop.f32.mrf.mxu0
        %v5404 = vadd.f32 %v5271, %v5403
        %v5405 = vpop.f32.mrf.mxu0
        %v5406 = vpop.f32.mrf.mxu0
        %v5407 = vadd.f32 %v5271, %v5406
        %v5408 = vpop.f32.mrf.mxu0
        %5409 = vmatprep.mubr.bf16.mxu0 0
        %5410 = vmatmul.mubr.bf16.gmra.mxu0 %v5247
        %v5411 = vpop.f32.mrf.mxu0
        %v5412 = vadd.f32 %v5271, %v5411
        %v5413 = vpop.f32.mrf.mxu0
        %v5414 = vpop.f32.mrf.mxu0
        %v5415 = vadd.f32 %v5271, %v5414
        %v5416 = vpop.f32.mrf.mxu0
        %5417 = vdwg.mxu0
        %v5418 = vmax.f32 %v5356, 0.0
        %v5419 = vmax.f32 %v5359, 0.0
        %v5420 = vmax.f32 %v5364, 0.0
        %v5421 = vmax.f32 %v5367, 0.0
        %v5422 = vmax.f32 %v5372, 0.0
        %v5423 = vmax.f32 %v5375, 0.0
        %v5424 = vmax.f32 %v5380, 0.0
        %v5425 = vmax.f32 %v5383, 0.0
        %v5426 = vmax.f32 %v5388, 0.0
        %v5427 = vmax.f32 %v5391, 0.0
        %v5428 = vmax.f32 %v5396, 0.0
        %v5429 = vmax.f32 %v5399, 0.0
        %v5430 = vmax.f32 %v5404, 0.0
        %v5431 = vmax.f32 %v5407, 0.0
        %v5432 = vmax.f32 %v5412, 0.0
        %v5433 = vmax.f32 %v5415, 0.0
        %v5434 = vpack.c.bf16 %v5419, %v5418
        %v5435 = vpack.c.bf16 %v5421, %v5420
        %v5436 = vpack.c.bf16 %v5423, %v5422
        %v5437 = vpack.c.bf16 %v5425, %v5424
        %v5438 = vpack.c.bf16 %v5427, %v5426
        %v5439 = vpack.c.bf16 %v5429, %v5428
        %v5440 = vpack.c.bf16 %v5431, %v5430
        %v5441 = vpack.c.bf16 %v5433, %v5432
        %5442 = vmatprep.subr.bf16.mxu0 0
        %5443 = vmatpush1.bf16.msra.mxu0 %v5441
        %5444 = vmatprep.subr.bf16.mxu0 0
        %5445 = vmatpush1.bf16.msra.mxu0 %v5440
        %5446 = vmatprep.subr.bf16.mxu0 0
        %5447 = vmatpush1.bf16.msra.mxu0 %v5439
        %5448 = vmatprep.subr.bf16.mxu0 0
        %5449 = vmatpush1.bf16.msra.mxu0 %v5438
        %5450 = vmatprep.subr.bf16.mxu0 0
        %5451 = vmatpush1.bf16.msra.mxu0 %v5437
        %5452 = vmatprep.subr.bf16.mxu0 0
        %5453 = vmatpush1.bf16.msra.mxu0 %v5436
        %5454 = vmatprep.subr.bf16.mxu0 0
        %5455 = vmatpush1.bf16.msra.mxu0 %v5435
        %5456 = vmatprep.subr.bf16.mxu0 0
        %5457 = vmatpush1.bf16.msra.mxu0 %v5434
        %5458 = vmatprep.subr.bf16.mxu0 0
        %5459 = vmatpush2.bf16.msra.mxu0 0
        %5460 = vmatprep.subr.bf16.mxu0 0
        %5461 = vmatpush2.bf16.msra.mxu0 0
        %5462 = vmatprep.subr.bf16.mxu0 0
        %5463 = vmatpush2.bf16.msra.mxu0 0
        %5464 = vmatprep.subr.bf16.mxu0 0
        %5465 = vmatpush2.bf16.msra.mxu0 0
        %5466 = vmatprep.subr.bf16.mxu0 0
        %5467 = vmatpush2.bf16.msra.mxu0 0
        %5468 = vmatprep.subr.bf16.mxu0 0
        %5469 = vmatpush2.bf16.msra.mxu0 0
        %5470 = vmatprep.subr.bf16.mxu0 0
        %5471 = vmatpush2.bf16.msra.mxu0 0
        %5472 = vmatprep.subr.bf16.mxu0 0
        %5473 = vmatpush2.bf16.msra.mxu0 0
        %5474 = vmatprep.mubr.bf16.mxu0 0
        %5475 = vmatmul.mubr.bf16.gmra.mxu0 %v2849
        %v5476 = vpop.f32.mrf.mxu0
        %v5477 = vadd.f32 %v2705, %v5476
        %v5478 = vpop.f32.mrf.mxu0
        %v5479 = vpop.f32.mrf.mxu0
        %v5480 = vadd.f32 %v2708, %v5479
        %v5481 = vpop.f32.mrf.mxu0
        %5482 = vmatprep.mubr.bf16.mxu0 0
        %5483 = vmatmul.mubr.bf16.gmra.mxu0 %v2850
        %v5484 = vpop.f32.mrf.mxu0
        %v5485 = vadd.f32 %v2713, %v5484
        %v5486 = vpop.f32.mrf.mxu0
        %v5487 = vpop.f32.mrf.mxu0
        %v5488 = vadd.f32 %v2716, %v5487
        %v5489 = vpop.f32.mrf.mxu0
        %5490 = vmatprep.mubr.bf16.mxu0 0
        %5491 = vmatmul.mubr.bf16.gmra.mxu0 %v2851
        %v5492 = vpop.f32.mrf.mxu0
        %v5493 = vadd.f32 %v2721, %v5492
        %v5494 = vpop.f32.mrf.mxu0
        %v5495 = vpop.f32.mrf.mxu0
        %v5496 = vadd.f32 %v2724, %v5495
        %v5497 = vpop.f32.mrf.mxu0
        %5498 = vmatprep.mubr.bf16.mxu0 0
        %5499 = vmatmul.mubr.bf16.gmra.mxu0 %v2852
        %v5500 = vpop.f32.mrf.mxu0
        %v5501 = vadd.f32 %v2729, %v5500
        %v5502 = vpop.f32.mrf.mxu0
        %v5503 = vpop.f32.mrf.mxu0
        %v5504 = vadd.f32 %v2732, %v5503
        %v5505 = vpop.f32.mrf.mxu0
        %5506 = vmatprep.mubr.bf16.mxu0 0
        %5507 = vmatmul.mubr.bf16.gmra.mxu0 %v2853
        %v5508 = vpop.f32.mrf.mxu0
        %v5509 = vadd.f32 %v2737, %v5508
        %v5510 = vpop.f32.mrf.mxu0
        %v5511 = vpop.f32.mrf.mxu0
        %v5512 = vadd.f32 %v2740, %v5511
        %v5513 = vpop.f32.mrf.mxu0
        %5514 = vmatprep.mubr.bf16.mxu0 0
        %5515 = vmatmul.mubr.bf16.gmra.mxu0 %v2854
        %v5516 = vpop.f32.mrf.mxu0
        %v5517 = vadd.f32 %v2745, %v5516
        %v5518 = vpop.f32.mrf.mxu0
        %v5519 = vpop.f32.mrf.mxu0
        %v5520 = vadd.f32 %v2748, %v5519
        %v5521 = vpop.f32.mrf.mxu0
        %5522 = vmatprep.mubr.bf16.mxu0 0
        %5523 = vmatmul.mubr.bf16.gmra.mxu0 %v2855
        %v5524 = vpop.f32.mrf.mxu0
        %v5525 = vadd.f32 %v2753, %v5524
        %v5526 = vpop.f32.mrf.mxu0
        %v5527 = vpop.f32.mrf.mxu0
        %v5528 = vadd.f32 %v2756, %v5527
        %v5529 = vpop.f32.mrf.mxu0
        %5530 = vmatprep.mubr.bf16.mxu0 0
        %5531 = vmatmul.mubr.bf16.gmra.mxu0 %v2856
        %v5532 = vpop.f32.mrf.mxu0
        %v5533 = vadd.f32 %v2761, %v5532
        %v5534 = vpop.f32.mrf.mxu0
        %v5535 = vpop.f32.mrf.mxu0
        %v5536 = vadd.f32 %v2764, %v5535
        %v5537 = vpop.f32.mrf.mxu0
        %5538 = vdwg.mxu0
        %v5539 = vmax.f32 %v5477, 0.0
        %v5540 = vmax.f32 %v5480, 0.0
        %v5541 = vmax.f32 %v5485, 0.0
        %v5542 = vmax.f32 %v5488, 0.0
        %v5543 = vmax.f32 %v5493, 0.0
        %v5544 = vmax.f32 %v5496, 0.0
        %v5545 = vmax.f32 %v5501, 0.0
        %v5546 = vmax.f32 %v5504, 0.0
        %v5547 = vmax.f32 %v5509, 0.0
        %v5548 = vmax.f32 %v5512, 0.0
        %v5549 = vmax.f32 %v5517, 0.0
        %v5550 = vmax.f32 %v5520, 0.0
        %v5551 = vmax.f32 %v5525, 0.0
        %v5552 = vmax.f32 %v5528, 0.0
        %v5553 = vmax.f32 %v5533, 0.0
        %v5554 = vmax.f32 %v5536, 0.0
        %v5555 = vpack.c.bf16 %v5540, %v5539
        %v5556 = vpack.c.bf16 %v5542, %v5541
        %v5557 = vpack.c.bf16 %v5544, %v5543
        %v5558 = vpack.c.bf16 %v5546, %v5545
        %v5559 = vpack.c.bf16 %v5548, %v5547
        %v5560 = vpack.c.bf16 %v5550, %v5549
        %v5561 = vpack.c.bf16 %v5552, %v5551
        %v5562 = vpack.c.bf16 %v5554, %v5553
        %5563 = vmatprep.subr.bf16.mxu0 0
        %5564 = vmatpush1.bf16.msra.mxu0 %v5562
        %5565 = vmatprep.subr.bf16.mxu0 0
        %5566 = vmatpush1.bf16.msra.mxu0 %v5561
        %5567 = vmatprep.subr.bf16.mxu0 0
        %5568 = vmatpush1.bf16.msra.mxu0 %v5560
        %5569 = vmatprep.subr.bf16.mxu0 0
        %5570 = vmatpush1.bf16.msra.mxu0 %v5559
        %5571 = vmatprep.subr.bf16.mxu0 0
        %5572 = vmatpush1.bf16.msra.mxu0 %v5558
        %5573 = vmatprep.subr.bf16.mxu0 0
        %5574 = vmatpush1.bf16.msra.mxu0 %v5557
        %5575 = vmatprep.subr.bf16.mxu0 0
        %5576 = vmatpush1.bf16.msra.mxu0 %v5556
        %5577 = vmatprep.subr.bf16.mxu0 0
        %5578 = vmatpush1.bf16.msra.mxu0 %v5555
        %5579 = vmatprep.subr.bf16.mxu0 0
        %5580 = vmatpush2.bf16.msra.mxu0 0
        %5581 = vmatprep.subr.bf16.mxu0 0
        %5582 = vmatpush2.bf16.msra.mxu0 0
        %5583 = vmatprep.subr.bf16.mxu0 0
        %5584 = vmatpush2.bf16.msra.mxu0 0
        %5585 = vmatprep.subr.bf16.mxu0 0
        %5586 = vmatpush2.bf16.msra.mxu0 0
        %5587 = vmatprep.subr.bf16.mxu0 0
        %5588 = vmatpush2.bf16.msra.mxu0 0
        %5589 = vmatprep.subr.bf16.mxu0 0
        %5590 = vmatpush2.bf16.msra.mxu0 0
        %5591 = vmatprep.subr.bf16.mxu0 0
        %5592 = vmatpush2.bf16.msra.mxu0 0
        %5593 = vmatprep.subr.bf16.mxu0 0
        %5594 = vmatpush2.bf16.msra.mxu0 0
        %5595 = vmatprep.mubr.bf16.mxu0 0
        %5596 = vmatmul.mubr.bf16.gmra.mxu0 %v2910
        %v5597 = vpop.f32.mrf.mxu0
        %v5598 = vadd.f32 0.0, %v5597
        %v5599 = vpop.f32.mrf.mxu0
        %v5600 = vpop.f32.mrf.mxu0
        %v5601 = vadd.f32 0.0, %v5600
        %v5602 = vpop.f32.mrf.mxu0
        %5603 = vmatprep.mubr.bf16.mxu0 0
        %5604 = vmatmul.mubr.bf16.gmra.mxu0 %v2911
        %v5605 = vpop.f32.mrf.mxu0
        %v5606 = vadd.f32 0.0, %v5605
        %v5607 = vpop.f32.mrf.mxu0
        %v5608 = vpop.f32.mrf.mxu0
        %v5609 = vadd.f32 0.0, %v5608
        %v5610 = vpop.f32.mrf.mxu0
        %5611 = vmatprep.mubr.bf16.mxu0 0
        %5612 = vmatmul.mubr.bf16.gmra.mxu0 %v2912
        %v5613 = vpop.f32.mrf.mxu0
        %v5614 = vadd.f32 0.0, %v5613
        %v5615 = vpop.f32.mrf.mxu0
        %v5616 = vpop.f32.mrf.mxu0
        %v5617 = vadd.f32 0.0, %v5616
        %v5618 = vpop.f32.mrf.mxu0
        %5619 = vmatprep.mubr.bf16.mxu0 0
        %5620 = vmatmul.mubr.bf16.gmra.mxu0 %v2913
        %v5621 = vpop.f32.mrf.mxu0
        %v5622 = vadd.f32 0.0, %v5621
        %v5623 = vpop.f32.mrf.mxu0
        %v5624 = vpop.f32.mrf.mxu0
        %v5625 = vadd.f32 0.0, %v5624
        %v5626 = vpop.f32.mrf.mxu0
        %5627 = vmatprep.mubr.bf16.mxu0 0
        %5628 = vmatmul.mubr.bf16.gmra.mxu0 %v2914
        %v5629 = vpop.f32.mrf.mxu0
        %v5630 = vadd.f32 0.0, %v5629
        %v5631 = vpop.f32.mrf.mxu0
        %v5632 = vpop.f32.mrf.mxu0
        %v5633 = vadd.f32 0.0, %v5632
        %v5634 = vpop.f32.mrf.mxu0
        %5635 = vmatprep.mubr.bf16.mxu0 0
        %5636 = vmatmul.mubr.bf16.gmra.mxu0 %v2915
        %v5637 = vpop.f32.mrf.mxu0
        %v5638 = vadd.f32 0.0, %v5637
        %v5639 = vpop.f32.mrf.mxu0
        %v5640 = vpop.f32.mrf.mxu0
        %v5641 = vadd.f32 0.0, %v5640
        %v5642 = vpop.f32.mrf.mxu0
        %5643 = vmatprep.mubr.bf16.mxu0 0
        %5644 = vmatmul.mubr.bf16.gmra.mxu0 %v2916
        %v5645 = vpop.f32.mrf.mxu0
        %v5646 = vadd.f32 0.0, %v5645
        %v5647 = vpop.f32.mrf.mxu0
        %v5648 = vpop.f32.mrf.mxu0
        %v5649 = vadd.f32 0.0, %v5648
        %v5650 = vpop.f32.mrf.mxu0
        %5651 = vmatprep.mubr.bf16.mxu0 0
        %5652 = vmatmul.mubr.bf16.gmra.mxu0 %v2917
        %v5653 = vpop.f32.mrf.mxu0
        %v5654 = vadd.f32 0.0, %v5653
        %v5655 = vpop.f32.mrf.mxu0
        %v5656 = vpop.f32.mrf.mxu0
        %v5657 = vadd.f32 0.0, %v5656
        %v5658 = vpop.f32.mrf.mxu0
        %5659 = vdwg.mxu0
        %v5660 = vadd.f32 %v5418, %v5598
        %v5661 = vadd.f32 %v5419, %v5601
        %v5662 = vadd.f32 %v5420, %v5606
        %v5663 = vadd.f32 %v5421, %v5609
        %v5664 = vadd.f32 %v5422, %v5614
        %v5665 = vadd.f32 %v5423, %v5617
        %v5666 = vadd.f32 %v5424, %v5622
        %v5667 = vadd.f32 %v5425, %v5625
        %v5668 = vadd.f32 %v5426, %v5630
        %v5669 = vadd.f32 %v5427, %v5633
        %v5670 = vadd.f32 %v5428, %v5638
        %v5671 = vadd.f32 %v5429, %v5641
        %v5672 = vadd.f32 %v5430, %v5646
        %v5673 = vadd.f32 %v5431, %v5649
        %v5674 = vadd.f32 %v5432, %v5654
        %v5675 = vadd.f32 %v5433, %v5657
        %v5676 = vpack.c.bf16 %v5661, %v5660
        %v5677 = vpack.c.bf16 %v5663, %v5662
        %v5678 = vpack.c.bf16 %v5665, %v5664
        %v5679 = vpack.c.bf16 %v5667, %v5666
        %v5680 = vpack.c.bf16 %v5669, %v5668
        %v5681 = vpack.c.bf16 %v5671, %v5670
        %v5682 = vpack.c.bf16 %v5673, %v5672
        %v5683 = vpack.c.bf16 %v5675, %v5674
        %s5684 = scalar_lea.vmem [#allocation8], 256
        %v5685 = vld [vmem:[%s5684] sm:$0xf]
        %v5686 = vld [vmem:[%s5684 + $0x4] sm:$0xf]
        %v5687 = vld [vmem:[%s5684 + $0x8] sm:$0xf]
        %v5688 = vld [vmem:[%s5684 + $0xc] sm:$0xf]
        %v5689 = vld [vmem:[%s5684 + $0x10] sm:$0xf]
        %v5690 = vld [vmem:[%s5684 + $0x14] sm:$0xf]
        %v5691 = vld [vmem:[%s5684 + $0x18] sm:$0xf]
        %v5692 = vld [vmem:[%s5684 + $0x1c] sm:$0xf]
        %v5693 = vld [vmem:[%s5684 + $0x20] sm:$0xf]
        %v5694 = vld [vmem:[%s5684 + $0x24] sm:$0xf]
        %v5695 = vld [vmem:[%s5684 + $0x28] sm:$0xf]
        %v5696 = vld [vmem:[%s5684 + $0x2c] sm:$0xf]
        %v5697 = vld [vmem:[%s5684 + $0x30] sm:$0xf]
        %v5698 = vld [vmem:[%s5684 + $0x34] sm:$0xf]
        %v5699 = vld [vmem:[%s5684 + $0x38] sm:$0xf]
        %v5700 = vld [vmem:[%s5684 + $0x3c] sm:$0xf]
        %s5701 = scalar_lea.vmem %s9, 4
        %v5702 = vld [vmem:[%s5701] sm:$0x1]
        %v5704 = vlaneseq
        %v5705 = vshrl.u32 %v5704, 7
        %v5706 = vsub.s32 0, %v5705
        %v5707 = vrot.slane %v5702, %v5706
        %v5725 = vunpack.c.l.b16 %v5685
        %v5726 = vunpack.c.l.b16 %v5686
        %v5727 = vunpack.c.l.b16 %v5687
        %v5728 = vunpack.c.l.b16 %v5688
        %v5729 = vunpack.c.l.b16 %v5689
        %v5730 = vunpack.c.l.b16 %v5690
        %v5731 = vunpack.c.l.b16 %v5691
        %v5732 = vunpack.c.l.b16 %v5692
        %v5733 = vunpack.c.l.b16 %v5693
        %v5734 = vunpack.c.l.b16 %v5694
        %v5735 = vunpack.c.l.b16 %v5695
        %v5736 = vunpack.c.l.b16 %v5696
        %v5737 = vunpack.c.l.b16 %v5697
        %v5738 = vunpack.c.l.b16 %v5698
        %v5739 = vunpack.c.l.b16 %v5699
        %v5740 = vunpack.c.l.b16 %v5700
        %v5741 = vpack.c.b16 %v5726, %v5725
        %v5742 = vpack.c.b16 %v5728, %v5727
        %v5743 = vpack.c.b16 %v5730, %v5729
        %v5744 = vpack.c.b16 %v5732, %v5731
        %v5745 = vpack.c.b16 %v5734, %v5733
        %v5746 = vpack.c.b16 %v5736, %v5735
        %v5747 = vpack.c.b16 %v5738, %v5737
        %v5748 = vpack.c.b16 %v5740, %v5739
        %5757 = vmatprep.subr.bf16.mxu0 0
        %5758 = vmatpush1.bf16.msra.mxu0 %v5748
        %5759 = vmatprep.subr.bf16.mxu0 0
        %5760 = vmatpush1.bf16.msra.mxu0 %v5747
        %5761 = vmatprep.subr.bf16.mxu0 0
        %5762 = vmatpush1.bf16.msra.mxu0 %v5746
        %5763 = vmatprep.subr.bf16.mxu0 0
        %5764 = vmatpush1.bf16.msra.mxu0 %v5745
        %5765 = vmatprep.subr.bf16.mxu0 0
        %5766 = vmatpush1.bf16.msra.mxu0 %v5744
        %5767 = vmatprep.subr.bf16.mxu0 0
        %5768 = vmatpush1.bf16.msra.mxu0 %v5743
        %5769 = vmatprep.subr.bf16.mxu0 0
        %5770 = vmatpush1.bf16.msra.mxu0 %v5742
        %5771 = vmatprep.subr.bf16.mxu0 0
        %5772 = vmatpush1.bf16.msra.mxu0 %v5741
        %5773 = vmatprep.subr.bf16.mxu0 0
        %5774 = vmatpush2.bf16.msra.mxu0 0
        %5775 = vmatprep.subr.bf16.mxu0 0
        %5776 = vmatpush2.bf16.msra.mxu0 0
        %5777 = vmatprep.subr.bf16.mxu0 0
        %5778 = vmatpush2.bf16.msra.mxu0 0
        %5779 = vmatprep.subr.bf16.mxu0 0
        %5780 = vmatpush2.bf16.msra.mxu0 0
        %5781 = vmatprep.subr.bf16.mxu0 0
        %5782 = vmatpush2.bf16.msra.mxu0 0
        %5783 = vmatprep.subr.bf16.mxu0 0
        %5784 = vmatpush2.bf16.msra.mxu0 0
        %5785 = vmatprep.subr.bf16.mxu0 0
        %5786 = vmatpush2.bf16.msra.mxu0 0
        %5787 = vmatprep.subr.bf16.mxu0 0
        %5788 = vmatpush2.bf16.msra.mxu0 0
        %5789 = vmatprep.mubr.bf16.mxu0 0
        %5790 = vmatmul.mubr.bf16.gmra.mxu0 %v5676
        %v5791 = vpop.f32.mrf.mxu0
        %v5792 = vadd.f32 %v5707, %v5791
        %v5793 = vpop.f32.mrf.mxu0
        %v5794 = vpop.f32.mrf.mxu0
        %v5795 = vadd.f32 %v5707, %v5794
        %v5796 = vpop.f32.mrf.mxu0
        %5797 = vmatprep.mubr.bf16.mxu0 0
        %5798 = vmatmul.mubr.bf16.gmra.mxu0 %v5677
        %v5799 = vpop.f32.mrf.mxu0
        %v5800 = vadd.f32 %v5707, %v5799
        %v5801 = vpop.f32.mrf.mxu0
        %v5802 = vpop.f32.mrf.mxu0
        %v5803 = vadd.f32 %v5707, %v5802
        %v5804 = vpop.f32.mrf.mxu0
        %5805 = vmatprep.mubr.bf16.mxu0 0
        %5806 = vmatmul.mubr.bf16.gmra.mxu0 %v5678
        %v5807 = vpop.f32.mrf.mxu0
        %v5808 = vadd.f32 %v5707, %v5807
        %v5809 = vpop.f32.mrf.mxu0
        %v5810 = vpop.f32.mrf.mxu0
        %v5811 = vadd.f32 %v5707, %v5810
        %v5812 = vpop.f32.mrf.mxu0
        %5813 = vmatprep.mubr.bf16.mxu0 0
        %5814 = vmatmul.mubr.bf16.gmra.mxu0 %v5679
        %v5815 = vpop.f32.mrf.mxu0
        %v5816 = vadd.f32 %v5707, %v5815
        %v5817 = vpop.f32.mrf.mxu0
        %v5818 = vpop.f32.mrf.mxu0
        %v5819 = vadd.f32 %v5707, %v5818
        %v5820 = vpop.f32.mrf.mxu0
        %5821 = vmatprep.mubr.bf16.mxu0 0
        %5822 = vmatmul.mubr.bf16.gmra.mxu0 %v5680
        %v5823 = vpop.f32.mrf.mxu0
        %v5824 = vadd.f32 %v5707, %v5823
        %v5825 = vpop.f32.mrf.mxu0
        %v5826 = vpop.f32.mrf.mxu0
        %v5827 = vadd.f32 %v5707, %v5826
        %v5828 = vpop.f32.mrf.mxu0
        %5829 = vmatprep.mubr.bf16.mxu0 0
        %5830 = vmatmul.mubr.bf16.gmra.mxu0 %v5681
        %v5831 = vpop.f32.mrf.mxu0
        %v5832 = vadd.f32 %v5707, %v5831
        %v5833 = vpop.f32.mrf.mxu0
        %v5834 = vpop.f32.mrf.mxu0
        %v5835 = vadd.f32 %v5707, %v5834
        %v5836 = vpop.f32.mrf.mxu0
        %5837 = vmatprep.mubr.bf16.mxu0 0
        %5838 = vmatmul.mubr.bf16.gmra.mxu0 %v5682
        %v5839 = vpop.f32.mrf.mxu0
        %v5840 = vadd.f32 %v5707, %v5839
        %v5841 = vpop.f32.mrf.mxu0
        %v5842 = vpop.f32.mrf.mxu0
        %v5843 = vadd.f32 %v5707, %v5842
        %v5844 = vpop.f32.mrf.mxu0
        %5845 = vmatprep.mubr.bf16.mxu0 0
        %5846 = vmatmul.mubr.bf16.gmra.mxu0 %v5683
        %v5847 = vpop.f32.mrf.mxu0
        %v5848 = vadd.f32 %v5707, %v5847
        %v5849 = vpop.f32.mrf.mxu0
        %v5850 = vpop.f32.mrf.mxu0
        %v5851 = vadd.f32 %v5707, %v5850
        %v5852 = vpop.f32.mrf.mxu0
        %5853 = vdwg.mxu0
        %v5854 = vmax.f32 %v5792, 0.0
        %v5855 = vmax.f32 %v5795, 0.0
        %v5856 = vmax.f32 %v5800, 0.0
        %v5857 = vmax.f32 %v5803, 0.0
        %v5858 = vmax.f32 %v5808, 0.0
        %v5859 = vmax.f32 %v5811, 0.0
        %v5860 = vmax.f32 %v5816, 0.0
        %v5861 = vmax.f32 %v5819, 0.0
        %v5862 = vmax.f32 %v5824, 0.0
        %v5863 = vmax.f32 %v5827, 0.0
        %v5864 = vmax.f32 %v5832, 0.0
        %v5865 = vmax.f32 %v5835, 0.0
        %v5866 = vmax.f32 %v5840, 0.0
        %v5867 = vmax.f32 %v5843, 0.0
        %v5868 = vmax.f32 %v5848, 0.0
        %v5869 = vmax.f32 %v5851, 0.0
        %v5870 = vpack.c.bf16 %v5855, %v5854
        %v5871 = vpack.c.bf16 %v5857, %v5856
        %v5872 = vpack.c.bf16 %v5859, %v5858
        %v5873 = vpack.c.bf16 %v5861, %v5860
        %v5874 = vpack.c.bf16 %v5863, %v5862
        %v5875 = vpack.c.bf16 %v5865, %v5864
        %v5876 = vpack.c.bf16 %v5867, %v5866
        %v5877 = vpack.c.bf16 %v5869, %v5868
        %s5878 = scalar_lea.vmem [#allocation9], 256
        %v5879 = vld [vmem:[%s5878] sm:$0xf]
        %v5880 = vld [vmem:[%s5878 + $0x4] sm:$0xf]
        %v5881 = vld [vmem:[%s5878 + $0x8] sm:$0xf]
        %v5882 = vld [vmem:[%s5878 + $0xc] sm:$0xf]
        %v5883 = vld [vmem:[%s5878 + $0x10] sm:$0xf]
        %v5884 = vld [vmem:[%s5878 + $0x14] sm:$0xf]
        %v5885 = vld [vmem:[%s5878 + $0x18] sm:$0xf]
        %v5886 = vld [vmem:[%s5878 + $0x1c] sm:$0xf]
        %v5887 = vld [vmem:[%s5878 + $0x20] sm:$0xf]
        %v5888 = vld [vmem:[%s5878 + $0x24] sm:$0xf]
        %v5889 = vld [vmem:[%s5878 + $0x28] sm:$0xf]
        %v5890 = vld [vmem:[%s5878 + $0x2c] sm:$0xf]
        %v5891 = vld [vmem:[%s5878 + $0x30] sm:$0xf]
        %v5892 = vld [vmem:[%s5878 + $0x34] sm:$0xf]
        %v5893 = vld [vmem:[%s5878 + $0x38] sm:$0xf]
        %v5894 = vld [vmem:[%s5878 + $0x3c] sm:$0xf]
        %s5895 = scalar_lea.vmem %s11, 4
        %v5896 = vld [vmem:[%s5895] sm:$0x1]
        %v5898 = vlaneseq
        %v5899 = vshrl.u32 %v5898, 7
        %v5900 = vsub.s32 0, %v5899
        %v5901 = vrot.slane %v5896, %v5900
        %v5919 = vunpack.c.l.b16 %v5879
        %v5920 = vunpack.c.l.b16 %v5880
        %v5921 = vunpack.c.l.b16 %v5881
        %v5922 = vunpack.c.l.b16 %v5882
        %v5923 = vunpack.c.l.b16 %v5883
        %v5924 = vunpack.c.l.b16 %v5884
        %v5925 = vunpack.c.l.b16 %v5885
        %v5926 = vunpack.c.l.b16 %v5886
        %v5927 = vunpack.c.l.b16 %v5887
        %v5928 = vunpack.c.l.b16 %v5888
        %v5929 = vunpack.c.l.b16 %v5889
        %v5930 = vunpack.c.l.b16 %v5890
        %v5931 = vunpack.c.l.b16 %v5891
        %v5932 = vunpack.c.l.b16 %v5892
        %v5933 = vunpack.c.l.b16 %v5893
        %v5934 = vunpack.c.l.b16 %v5894
        %v5935 = vpack.c.b16 %v5920, %v5919
        %v5936 = vpack.c.b16 %v5922, %v5921
        %v5937 = vpack.c.b16 %v5924, %v5923
        %v5938 = vpack.c.b16 %v5926, %v5925
        %v5939 = vpack.c.b16 %v5928, %v5927
        %v5940 = vpack.c.b16 %v5930, %v5929
        %v5941 = vpack.c.b16 %v5932, %v5931
        %v5942 = vpack.c.b16 %v5934, %v5933
        %5951 = vmatprep.subr.bf16.mxu0 0
        %5952 = vmatpush1.bf16.msra.mxu0 %v5942
        %5953 = vmatprep.subr.bf16.mxu0 0
        %5954 = vmatpush1.bf16.msra.mxu0 %v5941
        %5955 = vmatprep.subr.bf16.mxu0 0
        %5956 = vmatpush1.bf16.msra.mxu0 %v5940
        %5957 = vmatprep.subr.bf16.mxu0 0
        %5958 = vmatpush1.bf16.msra.mxu0 %v5939
        %5959 = vmatprep.subr.bf16.mxu0 0
        %5960 = vmatpush1.bf16.msra.mxu0 %v5938
        %5961 = vmatprep.subr.bf16.mxu0 0
        %5962 = vmatpush1.bf16.msra.mxu0 %v5937
        %5963 = vmatprep.subr.bf16.mxu0 0
        %5964 = vmatpush1.bf16.msra.mxu0 %v5936
        %5965 = vmatprep.subr.bf16.mxu0 0
        %5966 = vmatpush1.bf16.msra.mxu0 %v5935
        %5967 = vmatprep.subr.bf16.mxu0 0
        %5968 = vmatpush2.bf16.msra.mxu0 0
        %5969 = vmatprep.subr.bf16.mxu0 0
        %5970 = vmatpush2.bf16.msra.mxu0 0
        %5971 = vmatprep.subr.bf16.mxu0 0
        %5972 = vmatpush2.bf16.msra.mxu0 0
        %5973 = vmatprep.subr.bf16.mxu0 0
        %5974 = vmatpush2.bf16.msra.mxu0 0
        %5975 = vmatprep.subr.bf16.mxu0 0
        %5976 = vmatpush2.bf16.msra.mxu0 0
        %5977 = vmatprep.subr.bf16.mxu0 0
        %5978 = vmatpush2.bf16.msra.mxu0 0
        %5979 = vmatprep.subr.bf16.mxu0 0
        %5980 = vmatpush2.bf16.msra.mxu0 0
        %5981 = vmatprep.subr.bf16.mxu0 0
        %5982 = vmatpush2.bf16.msra.mxu0 0
        %5983 = vmatprep.mubr.bf16.mxu0 0
        %5984 = vmatmul.mubr.bf16.gmra.mxu0 %v5870
        %v5985 = vpop.f32.mrf.mxu0
        %v5986 = vadd.f32 %v5901, %v5985
        %v5987 = vpop.f32.mrf.mxu0
        %v5988 = vpop.f32.mrf.mxu0
        %v5989 = vadd.f32 %v5901, %v5988
        %v5990 = vpop.f32.mrf.mxu0
        %5991 = vmatprep.mubr.bf16.mxu0 0
        %5992 = vmatmul.mubr.bf16.gmra.mxu0 %v5871
        %v5993 = vpop.f32.mrf.mxu0
        %v5994 = vadd.f32 %v5901, %v5993
        %v5995 = vpop.f32.mrf.mxu0
        %v5996 = vpop.f32.mrf.mxu0
        %v5997 = vadd.f32 %v5901, %v5996
        %v5998 = vpop.f32.mrf.mxu0
        %5999 = vmatprep.mubr.bf16.mxu0 0
        %6000 = vmatmul.mubr.bf16.gmra.mxu0 %v5872
        %v6001 = vpop.f32.mrf.mxu0
        %v6002 = vadd.f32 %v5901, %v6001
        %v6003 = vpop.f32.mrf.mxu0
        %v6004 = vpop.f32.mrf.mxu0
        %v6005 = vadd.f32 %v5901, %v6004
        %v6006 = vpop.f32.mrf.mxu0
        %6007 = vmatprep.mubr.bf16.mxu0 0
        %6008 = vmatmul.mubr.bf16.gmra.mxu0 %v5873
        %v6009 = vpop.f32.mrf.mxu0
        %v6010 = vadd.f32 %v5901, %v6009
        %v6011 = vpop.f32.mrf.mxu0
        %v6012 = vpop.f32.mrf.mxu0
        %v6013 = vadd.f32 %v5901, %v6012
        %v6014 = vpop.f32.mrf.mxu0
        %6015 = vmatprep.mubr.bf16.mxu0 0
        %6016 = vmatmul.mubr.bf16.gmra.mxu0 %v5874
        %v6017 = vpop.f32.mrf.mxu0
        %v6018 = vadd.f32 %v5901, %v6017
        %v6019 = vpop.f32.mrf.mxu0
        %v6020 = vpop.f32.mrf.mxu0
        %v6021 = vadd.f32 %v5901, %v6020
        %v6022 = vpop.f32.mrf.mxu0
        %6023 = vmatprep.mubr.bf16.mxu0 0
        %6024 = vmatmul.mubr.bf16.gmra.mxu0 %v5875
        %v6025 = vpop.f32.mrf.mxu0
        %v6026 = vadd.f32 %v5901, %v6025
        %v6027 = vpop.f32.mrf.mxu0
        %v6028 = vpop.f32.mrf.mxu0
        %v6029 = vadd.f32 %v5901, %v6028
        %v6030 = vpop.f32.mrf.mxu0
        %6031 = vmatprep.mubr.bf16.mxu0 0
        %6032 = vmatmul.mubr.bf16.gmra.mxu0 %v5876
        %v6033 = vpop.f32.mrf.mxu0
        %v6034 = vadd.f32 %v5901, %v6033
        %v6035 = vpop.f32.mrf.mxu0
        %v6036 = vpop.f32.mrf.mxu0
        %v6037 = vadd.f32 %v5901, %v6036
        %v6038 = vpop.f32.mrf.mxu0
        %6039 = vmatprep.mubr.bf16.mxu0 0
        %6040 = vmatmul.mubr.bf16.gmra.mxu0 %v5877
        %v6041 = vpop.f32.mrf.mxu0
        %v6042 = vadd.f32 %v5901, %v6041
        %v6043 = vpop.f32.mrf.mxu0
        %v6044 = vpop.f32.mrf.mxu0
        %v6045 = vadd.f32 %v5901, %v6044
        %v6046 = vpop.f32.mrf.mxu0
        %6047 = vdwg.mxu0
        %v6048 = vmax.f32 %v5986, 0.0
        %v6049 = vmax.f32 %v5989, 0.0
        %v6050 = vmax.f32 %v5994, 0.0
        %v6051 = vmax.f32 %v5997, 0.0
        %v6052 = vmax.f32 %v6002, 0.0
        %v6053 = vmax.f32 %v6005, 0.0
        %v6054 = vmax.f32 %v6010, 0.0
        %v6055 = vmax.f32 %v6013, 0.0
        %v6056 = vmax.f32 %v6018, 0.0
        %v6057 = vmax.f32 %v6021, 0.0
        %v6058 = vmax.f32 %v6026, 0.0
        %v6059 = vmax.f32 %v6029, 0.0
        %v6060 = vmax.f32 %v6034, 0.0
        %v6061 = vmax.f32 %v6037, 0.0
        %v6062 = vmax.f32 %v6042, 0.0
        %v6063 = vmax.f32 %v6045, 0.0
        %v6064 = vld [vmem:[%s12] sm:$0x1]
        %v6065 = vpack.c.bf16 %v6064, %v6064
        %v6066 = vpack.c.bf16 %v6049, %v6048
        %v6067 = vpack.c.bf16 %v6051, %v6050
        %v6068 = vpack.c.bf16 %v6053, %v6052
        %v6069 = vpack.c.bf16 %v6055, %v6054
        %v6070 = vpack.c.bf16 %v6057, %v6056
        %v6071 = vpack.c.bf16 %v6059, %v6058
        %v6072 = vpack.c.bf16 %v6061, %v6060
        %v6073 = vpack.c.bf16 %v6063, %v6062
        %s6074 = sld [smem:[#allocation2]]
        %v6075 = vstv %s6074
        %6076 = vmatprep.subr.bf16.mxu0 0
        %6077 = vmatpush1.bf16.xpose.msra.mxu0 %v6073
        %6078 = vmatprep.subr.bf16.mxu0 0
        %6079 = vmatpush1.bf16.xpose.msra.mxu0 %v6072
        %6080 = vmatprep.subr.bf16.mxu0 0
        %6081 = vmatpush1.bf16.xpose.msra.mxu0 %v6071
        %6082 = vmatprep.subr.bf16.mxu0 0
        %6083 = vmatpush1.bf16.xpose.msra.mxu0 %v6070
        %6084 = vmatprep.subr.bf16.mxu0 0
        %6085 = vmatpush1.bf16.xpose.msra.mxu0 %v6069
        %6086 = vmatprep.subr.bf16.mxu0 0
        %6087 = vmatpush1.bf16.xpose.msra.mxu0 %v6068
        %6088 = vmatprep.subr.bf16.mxu0 0
        %6089 = vmatpush1.bf16.xpose.msra.mxu0 %v6067
        %6090 = vmatprep.subr.bf16.mxu0 0
        %6091 = vmatpush1.bf16.xpose.msra.mxu0 %v6066
        %6092 = vmatprep.subr.bf16.mxu0 0
        %6093 = vmatpush2.bf16.xpose.msra.mxu0 0
        %6094 = vmatprep.subr.bf16.mxu0 0
        %6095 = vmatpush2.bf16.xpose.msra.mxu0 0
        %6096 = vmatprep.subr.bf16.mxu0 0
        %6097 = vmatpush2.bf16.xpose.msra.mxu0 0
        %6098 = vmatprep.subr.bf16.mxu0 0
        %6099 = vmatpush2.bf16.xpose.msra.mxu0 0
        %6100 = vmatprep.subr.bf16.mxu0 0
        %6101 = vmatpush2.bf16.xpose.msra.mxu0 0
        %6102 = vmatprep.subr.bf16.mxu0 0
        %6103 = vmatpush2.bf16.xpose.msra.mxu0 0
        %6104 = vmatprep.subr.bf16.mxu0 0
        %6105 = vmatpush2.bf16.xpose.msra.mxu0 0
        %6106 = vmatprep.subr.bf16.mxu0 0
        %6107 = vmatpush2.bf16.xpose.msra.mxu0 0
        %6108 = vmatprep.mubr.bf16.mxu0 0
        %6109 = vmatmul.mubr.bf16.gmra.mxu0 %v6065
        %v6110 = vpop.f32.mrf.mxu0
        %v6111 = vadd.f32 %v6075, %v6110
        %v6112 = vpop.f32.mrf.mxu0
        %v6113 = vpop.f32.mrf.mxu0
        %v6114 = vpop.f32.mrf.mxu0
        %6115 = vdwg.mxu0
        %v6116 = vsub.f32 0.0, %v6111
        %v6117 = vmul.f32 %v6116, 1.442695
        %v6118 = vpow.pop %v6117
        %v6119 = vadd.f32 %v6118, 1.0
        %v6120 = vrcp.pop %v6119
        %6121 = vst [vmem:[%s570] sm:$0x1] %v6120
        %s6122 = sand.u32 %s356, 1
        %s6123 = scalar_lea.sflag [#allocation5], %s6122
        %s6124 = sand.u32 %s356, 1
        %s6125 = scalar_lea.vmem [#allocation11], %s6124
        // Predicated region
        $region93: #{tpu_custom_call.1} parent=75 // pred_check
          %p6126 = pneg %p366
        $region94: #{tpu_custom_call.1} parent=75 // pred_check_branch
          %6128 = sbr.rel (%p6126) target = $region96
        $region95: #{tpu_custom_call.1} parent=75 // pred_region
          %s6130 = ssub.s32 16, 16
          %6131 = vsyncadd %s6123, %s6130
          %s6132 = smul.addr %s34, 16
          %s6133 = scalar_lea.hbm %s14, %s6132
          %s6135 = sshll.u32 %s6125, 4
          %s6136 = int_to_ptr.vmem [resolvable:$true] %s6135
          %6138 = dma.vmem_to_hbm [thread:$0]  %s6136, 16, %s6133, %s6123
        $region96: #{tpu_custom_call.1} parent=75 // pred_fallthru
          _
      $region76: #{tpu_custom_call.1} parent=5 // pred_fallthru
        _
      %p6139 = scmp.le.s32.totalorder 2, %s29
      // Predicated region
      $region97: #{tpu_custom_call.1} parent=5 // pred_check
        %p6140 = pneg %p6139
      $region98: #{tpu_custom_call.1} parent=5 // pred_check_branch
        %6142 = sbr.rel (%p6140) target = $region100
      $region99: #{tpu_custom_call.1} parent=5 // pred_region
        %s6143 = ssub.s32 %s29, 2
        // Predicated region
        $region101: #{tpu_custom_call.1} parent=99 // pred_check
          %p6144 = pneg %p372
        $region102: #{tpu_custom_call.1} parent=99 // pred_check_branch
          %6146 = sbr.rel (%p6144) target = $region104
        $region103: #{tpu_custom_call.1} parent=99 // pred_region
          %s6147 = sand.u32 %s357, 1
          %s6148 = scalar_lea.sflag [#allocation5], %s6147
          %s6149 = sand.u32 %s357, 1
          %s6150 = scalar_lea.vmem [#allocation11], %s6149
          %6151 = dma.done %s6148, 16
        $region104: #{tpu_custom_call.1} parent=99 // pred_fallthru
          _
      $region100: #{tpu_custom_call.1} parent=5 // pred_fallthru
        _
    $region6: #{tpu_custom_call.1} parent=1 // loop_footer
      %s33 = sadd.s32 1, %s29
    $region7: #{tpu_custom_call.1} parent=1 // loop_footer_branch
      %28 = sbr.rel target = $region3
    $region8: #{tpu_custom_call.1} parent=1 // loop_exit
      _
    %6152 = vsyncpa [#allocation4], 1
    %s6153 = scalar_lea.sflag [#allocation4], 1
    %6154 = vsyncpa %s6153, 1
    %6155 = vsyncpa [#allocation7], 1
    %6156 = vsyncpa [#allocation10], 1
    %6157 = vsyncpa [#allocation5], 1
    %s6158 = scalar_lea.sflag [#allocation5], 1
    %6159 = vsyncpa %s6158, 1

</llo_original>
